<compile_context>
chip_gen: v5e
topology: v5e:2x2
jax: 0.10.0
libtpu: 0.0.40
codegen_flags: <defaults>
</compile_context>

<pallas_src>
import functools
import math

import jax
import jax.numpy as jnp
from jax.experimental import pallas as pl
from jax.experimental.pallas import tpu as pltpu


def _convformer_kernel(x_ref, halo_ref, pv_ref, cw_ref, w1_ref, b1_ref, w2_ref,
                       o_ref, shift_ref, *, valid_len):
    t = pl.program_id(1)
    n_t = pl.num_programs(1)

    x = x_ref[...].astype(jnp.float32)          # (C, tT): channels x time
    C, tT = x.shape

    # Packed per-channel params: [ln1_g, ln1_b, conv_b, ln2_g, ln2_b, mlp_b2]
    pv = pv_ref[...].astype(jnp.float32)        # (C, 6)
    ln1_g, ln1_b = pv[:, 0:1], pv[:, 1:2]
    conv_b = pv[:, 2:3]
    ln2_g, ln2_b = pv[:, 3:4], pv[:, 4:5]
    mlp_b2 = pv[:, 5:6]

    def layernorm(v, g, b):
        # LayerNorm over channels (sublane axis), per time column.  E[x^2]-mu^2
        # form: the two cross-sublane reductions are independent and can overlap.
        mu = jnp.mean(v, axis=0, keepdims=True)
        ex2 = jnp.mean(v * v, axis=0, keepdims=True)
        var = jnp.maximum(ex2 - mu * mu, 0.0)
        return (v - mu) * jax.lax.rsqrt(var + 1e-6) * g + b

    n1 = layernorm(x, ln1_g, ln1_b)             # (C, tT)

    if valid_len is not None:
        # T was padded up to a tile multiple: zero the normalized padding columns
        # so the conv sees Conv1d-style zero padding at the true sequence end.
        col = t * tT + jax.lax.broadcasted_iota(jnp.int32, (C, tT), 1)
        n1 = jnp.where(col < valid_len, n1, 0.0)

    # Conv halo columns: raw x of the neighboring tiles (one column each side),
    # LayerNorm'd here (LN is per-time-column, so this is exact).  Sequence
    # boundaries use Conv1d zero padding of the *normalized* signal.
    halo = layernorm(halo_ref[...].astype(jnp.float32), ln1_g, ln1_b)   # (C, 2)
    left = halo[:, 0:1] * (t > 0).astype(jnp.float32)
    right = halo[:, 1:2] * (t < n_t - 1).astype(jnp.float32)

    # k=3 conv as three K=C matmuls accumulated in f32 (bf16 operands on the MXU).
    # Shifted operands: XLU roll + single-column halo overwrite in a bf16 scratch;
    # no (3C, tT) concat, no full-tile iota/where passes.
    n1_b = n1.astype(jnp.bfloat16)
    conv = jnp.dot(cw_ref[1], n1_b, preferred_element_type=jnp.float32)   # center tap

    shift_ref[...] = pltpu.roll(n1, shift=1, axis=1).astype(jnp.bfloat16)      # n1 @ t-1
    shift_ref[:, 0:1] = left.astype(jnp.bfloat16)
    conv += jnp.dot(cw_ref[0], shift_ref[...], preferred_element_type=jnp.float32)

    shift_ref[...] = pltpu.roll(n1, shift=tT - 1, axis=1).astype(jnp.bfloat16)  # n1 @ t+1
    shift_ref[:, tT - 1:tT] = right.astype(jnp.bfloat16)
    conv += jnp.dot(cw_ref[2], shift_ref[...], preferred_element_type=jnp.float32)

    x1 = x + conv + conv_b                      # residual 1

    # MLP branch: Linear -> exact GELU -> Linear (PyTorch (out, in) weights as LHS).
    n2 = layernorm(x1, ln2_g, ln2_b)
    h = jnp.dot(w1_ref[...], n2.astype(jnp.bfloat16),
                preferred_element_type=jnp.float32)
    h = h + b1_ref[...].astype(jnp.float32)     # (H, tT)
    # Exact erf GELU to match nn.GELU.
    # TODO(synk): jax.nn.gelu(approximate=True) would move this to the EUP slot
    # (free on v6e/v7x once HBM traffic is fixed) at a small numerics deviation.
    h = 0.5 * h * (1.0 + jax.lax.erf(h * (1.0 / math.sqrt(2.0))))
    m = jnp.dot(w2_ref[...], h.astype(jnp.bfloat16),
                preferred_element_type=jnp.float32)
    m = m + mlp_b2

    o_ref[...] = (x1 + m).astype(o_ref.dtype)   # residual 2


def _vmem_limit_bytes():
    """Generation-aware scoped VMEM limit (v7x has 64 MiB physical vs 128 MiB)."""
    cap = 64 * 1024 * 1024
    try:
        cap = int(getattr(pltpu.get_tpu_info(), "vmem_capacity_bytes", cap))
    except Exception:
        pass
    return min(int(cap * 0.7), 100 * 1024 * 1024)


def _per_column_vmem_bytes(C, H):
    """Rough per-time-column VMEM footprint used to size the time tile."""
    f32_cols = 4 * C            # x in + out, double buffered
    f32_cols += 6 * C + 3 * H   # f32 temporaries (n1, conv acc, x1, n2, h, m)
    bf16_cols = 3 * C + H       # bf16 casts + shift scratch
    return 4 * f32_cols + 2 * bf16_cols


def _pick_time_tile(T, B, per_col_bytes, vmem_budget):
    """Largest lane-aligned time tile that fits the VMEM budget, keeps padding
    waste small, and leaves >=4 grid steps for megacore sharding / pipelining."""
    max_steps = B * (-(-T // 128))
    target_steps = min(4, max_steps)
    cap = min(2048, -(-T // 128) * 128)
    best = 128
    for tT in range(128, cap + 1, 128):
        if tT * per_col_bytes > vmem_budget:
            break
        n_t = -(-T // tT)
        if (n_t * tT - T) * 8 > n_t * tT:      # > 12.5% padding waste
            continue
        if B * n_t < target_steps:
            continue
        best = tT
    return best


def prepare_params(p):
    """PyTorch-layout f32 params -> kernel layout.

    Matmul weights are bf16 (MXU operands); the small per-channel vectors are
    packed into a single lane-dense (C, 6) f32 block."""
    f32 = lambda v: jnp.asarray(v, jnp.float32)
    pvec = jnp.stack([f32(p["ln1_g"]), f32(p["ln1_b"]), f32(p["conv_b"]),
                      f32(p["ln2_g"]), f32(p["ln2_b"]), f32(p["b2"])], axis=1)  # (C, 6)
    return {
        "pvec": pvec,
        # Conv1d weight (C_out, C_in, K) -> (K, C_out, C_in): tap k multiplies the
        # input shifted by (k - 1) time steps.
        "conv_w": jnp.transpose(f32(p["conv_w"]), (2, 0, 1)).astype(jnp.bfloat16),
        "w1": f32(p["w1"]).astype(jnp.bfloat16),     # (H, C)
        "b1": f32(p["b1"]).reshape(-1, 1),           # (H, 1)
        "w2": f32(p["w2"]).astype(jnp.bfloat16),     # (C, H)
    }


@jax.jit
def convformer_block(x, kp):
    """x: (B, C, T) exactly like the PyTorch module. Returns (B, C, T)."""
    # TODO(synk): the `mask is not None` path of the module (x * mask, returning
    # (x, mask)) is not implemented; this is the mask=None forward.
    B, C, T = x.shape
    H = kp["w1"].shape[0]

    vmem_limit = _vmem_limit_bytes()
    tT = _pick_time_tile(T, B, _per_column_vmem_bytes(C, H), vmem_limit // 2)
    nT = -(-T // tT)
    T_pad = nT * tT

    xp = x if T_pad == T else jnp.pad(x, ((0, 0), (0, 0), (0, T_pad - T)))

    # Boundary columns for the k=3 conv halo: (B, nT, C, 2) = [left, right] per
    # tile.  Tiny (2 columns / tile) vs the previous 2 full neighbor tiles.
    cols_start = xp[:, :, ::tT]                    # columns 0, tT, 2tT, ...
    cols_end = xp[:, :, tT - 1::tT]                # columns tT-1, 2tT-1, ...
    zero = jnp.zeros((B, C, 1), xp.dtype)
    left_halo = jnp.concatenate([zero, cols_end[:, :, :nT - 1]], axis=2)
    right_halo = jnp.concatenate([cols_start[:, :, 1:], zero], axis=2)
    halos = jnp.transpose(jnp.stack([left_halo, right_halo], axis=-1),
                          (0, 2, 1, 3))            # (B, nT, C, 2)

    kernel = functools.partial(_convformer_kernel,
                               valid_len=None if T_pad == T else T)

    out = pl.pallas_call(
        kernel,
        out_shape=jax.ShapeDtypeStruct((B, C, T_pad), x.dtype),
        grid_spec=pltpu.PrefetchScalarGridSpec(
            num_scalar_prefetch=0,
            grid=(B, nT),
            in_specs=[
                pl.BlockSpec((None, C, tT), lambda b, t: (b, 0, t)),           # x tile
                pl.BlockSpec((None, None, C, 2), lambda b, t: (b, t, 0, 0)),   # halo cols
                pl.BlockSpec((C, 6), lambda b, t: (0, 0)),                     # packed params
                pl.BlockSpec((3, C, C), lambda b, t: (0, 0, 0)),               # conv taps (bf16)
                pl.BlockSpec((H, C), lambda b, t: (0, 0)),                     # mlp W1 (bf16)
                pl.BlockSpec((H, 1), lambda b, t: (0, 0)),                     # mlp b1
                pl.BlockSpec((C, H), lambda b, t: (0, 0)),                     # mlp W2 (bf16)
            ],
            out_specs=pl.BlockSpec((None, C, tT), lambda b, t: (b, 0, t)),
            scratch_shapes=[pltpu.VMEM((C, tT), jnp.bfloat16)],                # shift buffer
        ),
        compiler_params=pltpu.CompilerParams(
            dimension_semantics=("parallel", "parallel"),
            vmem_limit_bytes=vmem_limit,
        ),
    )(xp, halos, kp["pvec"], kp["conv_w"], kp["w1"], kp["b1"], kp["w2"])

    return out if T_pad == T else out[:, :, :T]


def init_params(key, dim, kernel_size=3, expansion_ratio=4, dtype=jnp.float32):
    """PyTorch-layout parameters mirroring the module's __init_weights__."""
    hid = expansion_ratio * dim
    k_conv, k_w1, k_w2 = jax.random.split(key, 3)
    bound_conv = 1.0 / math.sqrt(dim * kernel_size)
    conv_w = jax.random.uniform(k_conv, (dim, dim, kernel_size), dtype,
                                minval=-bound_conv, maxval=bound_conv)
    bound_w1 = 1.0 / math.sqrt(dim)
    bound_w2 = 1.0 / math.sqrt(hid)
    w1 = jax.random.uniform(k_w1, (hid, dim), dtype, minval=-bound_w1, maxval=bound_w1)
    w2 = jax.random.uniform(k_w2, (dim, hid), dtype, minval=-bound_w2, maxval=bound_w2)
    return {
        "ln1_g": jnp.ones((dim,), dtype), "ln1_b": jnp.zeros((dim,), dtype),
        "conv_w": conv_w, "conv_b": jnp.zeros((dim,), dtype),
        "ln2_g": jnp.ones((dim,), dtype), "ln2_b": jnp.zeros((dim,), dtype),
        "w1": w1, "b1": jnp.zeros((hid,), dtype),
        "w2": w2, "b2": jnp.zeros((dim,), dtype),
    }


def convformer_reference(x, p):
    """Pure-JAX f32 reference of the PyTorch forward (mask=None)."""
    B, C, T = x.shape
    xt = jnp.transpose(x, (0, 2, 1)).astype(jnp.float32)

    def ln(v, g, b):
        mu = jnp.mean(v, axis=-1, keepdims=True)
        d = v - mu
        var = jnp.mean(d * d, axis=-1, keepdims=True)
        return d * jax.lax.rsqrt(var + 1e-6) * g + b

    n1 = ln(xt, p["ln1_g"], p["ln1_b"])
    n1p = jnp.pad(n1, ((0, 0), (1, 1), (0, 0)))
    conv = jnp.zeros_like(xt)
    for k in range(p["conv_w"].shape[-1]):
        conv = conv + jnp.einsum("btc,oc->bto", n1p[:, k:k + T, :], p["conv_w"][:, :, k])
    conv = conv + p["conv_b"]
    x1 = xt + conv
    n2 = ln(x1, p["ln2_g"], p["ln2_b"])
    h = n2 @ p["w1"].T + p["b1"]
    h = 0.5 * h * (1.0 + jax.lax.erf(h * (1.0 / math.sqrt(2.0))))
    m = h @ p["w2"].T + p["b2"]
    return jnp.transpose(x1 + m, (0, 2, 1))


if __name__ == "__main__":
    B, C = 2, 128                      # dim=128, expansion 4 -> hidden 512
    key = jax.random.PRNGKey(0)
    k_x, k_x2, k_p = jax.random.split(key, 3)
    params = init_params(k_p, dim=C, kernel_size=3, expansion_ratio=4)
    kparams = prepare_params(params)

    # Tile-aligned sequence length.
    x = jax.random.normal(k_x, (B, C, 256), jnp.float32)
    out = convformer_block(x, kparams)
    jax.block_until_ready(out)
    assert out.shape == (B, C, 256)
    err = float(jnp.max(jnp.abs(out - convformer_reference(x, params))))
    assert err < 7e-2, f"max abs error (T=256) too large: {err}"

    # Non-aligned sequence length exercises the in-wrapper padding path.
    x2 = jax.random.normal(k_x2, (B, C, 200), jnp.float32)
    out2 = convformer_block(x2, kparams)
    jax.block_until_ready(out2)
    assert out2.shape == (B, C, 200)
    err2 = float(jnp.max(jnp.abs(out2 - convformer_reference(x2, params))))
    assert err2 < 7e-2, f"max abs error (T=200) too large: {err2}"

    print("KERNEL_OK")
</pallas_src>

<mosaic_0001>
module attributes {stable_mosaic.version = 11 : i64} {
  func.func @_convformer_kernel(%arg0: i32, %arg1: i32, %arg2: memref<1x128x128xf32, #tpu.memory_space<vmem>>, %arg3: memref<1x1x128x2xf32, #tpu.memory_space<vmem>>, %arg4: memref<128x6xf32, #tpu.memory_space<vmem>>, %arg5: memref<3x128x128xbf16, #tpu.memory_space<vmem>>, %arg6: memref<512x128xbf16, #tpu.memory_space<vmem>>, %arg7: memref<512x1xf32, #tpu.memory_space<vmem>>, %arg8: memref<128x512xbf16, #tpu.memory_space<vmem>>, %arg9: memref<1x128x128xf32, #tpu.memory_space<vmem>>, %arg10: memref<128x128xbf16, #tpu.memory_space<vmem>>) attributes {dimension_semantics = [#tpu.dimension_semantics<parallel>, #tpu.dimension_semantics<parallel>], iteration_bounds = array<i64: 2, 2>, scalar_prefetch = 0 : i64, scratch_operands = 1 : i64, tpu.core_type = #tpu.core_type<tc>, window_params = [{transform_indices = @transform_0, window_bounds = array<i64: 1, 128, 128>}, {transform_indices = @transform_1, window_bounds = array<i64: 1, 1, 128, 2>}, {pipeline_mode = #tpu.pipeline_mode<synchronous>, transform_indices = @transform_2, window_bounds = array<i64: 128, 6>}, {pipeline_mode = #tpu.pipeline_mode<synchronous>, transform_indices = @transform_3, window_bounds = array<i64: 3, 128, 128>}, {pipeline_mode = #tpu.pipeline_mode<synchronous>, transform_indices = @transform_4, window_bounds = array<i64: 512, 128>}, {pipeline_mode = #tpu.pipeline_mode<synchronous>, transform_indices = @transform_5, window_bounds = array<i64: 512, 1>}, {pipeline_mode = #tpu.pipeline_mode<synchronous>, transform_indices = @transform_6, window_bounds = array<i64: 128, 512>}, {transform_indices = @transform_7, window_bounds = array<i64: 1, 128, 128>}]} {
    %c0 = arith.constant 0 : index
    %c0_0 = arith.constant 0 : index
    %c0_1 = arith.constant 0 : index
    %0 = vector.load %arg2[%c0, %c0_0, %c0_1] : memref<1x128x128xf32, #tpu.memory_space<vmem>>, vector<1x128x128xf32>
    %1 = vector.shape_cast %0 : vector<1x128x128xf32> to vector<128x128xf32>
    %c0_2 = arith.constant 0 : index
    %c0_3 = arith.constant 0 : index
    %2 = vector.load %arg4[%c0_2, %c0_3] : memref<128x6xf32, #tpu.memory_space<vmem>>, vector<128x6xf32>
    %3 = vector.extract_strided_slice %2 {offsets = [0, 0], sizes = [128, 1], strides = [1, 1]} : vector<128x6xf32> to vector<128x1xf32>
    %4 = vector.extract_strided_slice %2 {offsets = [0, 1], sizes = [128, 1], strides = [1, 1]} : vector<128x6xf32> to vector<128x1xf32>
    %5 = vector.extract_strided_slice %2 {offsets = [0, 2], sizes = [128, 1], strides = [1, 1]} : vector<128x6xf32> to vector<128x1xf32>
    %6 = vector.extract_strided_slice %2 {offsets = [0, 3], sizes = [128, 1], strides = [1, 1]} : vector<128x6xf32> to vector<128x1xf32>
    %7 = vector.extract_strided_slice %2 {offsets = [0, 4], sizes = [128, 1], strides = [1, 1]} : vector<128x6xf32> to vector<128x1xf32>
    %8 = vector.extract_strided_slice %2 {offsets = [0, 5], sizes = [128, 1], strides = [1, 1]} : vector<128x6xf32> to vector<128x1xf32>
    %cst = arith.constant dense<0.000000e+00> : vector<128xf32>
    %9 = vector.multi_reduction <add>, %1, %cst [0] : vector<128x128xf32> to vector<128xf32>
    %10 = vector.shape_cast %9 : vector<128xf32> to vector<1x128xf32>
    %cst_4 = arith.constant 1.280000e+02 : f32
    %11 = vector.broadcast %cst_4 : f32 to vector<1x128xf32>
    %12 = arith.divf %10, %11 : vector<1x128xf32>
    %13 = arith.mulf %1, %1 : vector<128x128xf32>
    %cst_5 = arith.constant dense<0.000000e+00> : vector<128xf32>
    %14 = vector.multi_reduction <add>, %13, %cst_5 [0] : vector<128x128xf32> to vector<128xf32>
    %15 = vector.shape_cast %14 : vector<128xf32> to vector<1x128xf32>
    %cst_6 = arith.constant 1.280000e+02 : f32
    %16 = vector.broadcast %cst_6 : f32 to vector<1x128xf32>
    %17 = arith.divf %15, %16 : vector<1x128xf32>
    %18 = arith.mulf %12, %12 : vector<1x128xf32>
    %19 = arith.subf %17, %18 : vector<1x128xf32>
    %cst_7 = arith.constant 0.000000e+00 : f32
    %20 = vector.broadcast %cst_7 : f32 to vector<1x128xf32>
    %21 = arith.maximumf %19, %20 : vector<1x128xf32>
    %22 = vector.broadcast %12 : vector<1x128xf32> to vector<128x128xf32>
    %23 = arith.subf %1, %22 : vector<128x128xf32>
    %cst_8 = arith.constant 9.99999997E-7 : f32
    %24 = vector.broadcast %cst_8 : f32 to vector<1x128xf32>
    %25 = arith.addf %21, %24 : vector<1x128xf32>
    %26 = math.rsqrt %25 : vector<1x128xf32>
    %27 = vector.broadcast %26 : vector<1x128xf32> to vector<128x128xf32>
    %28 = arith.mulf %23, %27 : vector<128x128xf32>
    %29 = vector.broadcast %3 : vector<128x1xf32> to vector<128x128xf32>
    %30 = arith.mulf %28, %29 : vector<128x128xf32>
    %31 = vector.broadcast %4 : vector<128x1xf32> to vector<128x128xf32>
    %32 = arith.addf %30, %31 : vector<128x128xf32>
    %c0_9 = arith.constant 0 : index
    %c0_10 = arith.constant 0 : index
    %c0_11 = arith.constant 0 : index
    %c0_12 = arith.constant 0 : index
    %33 = vector.load %arg3[%c0_9, %c0_10, %c0_11, %c0_12] : memref<1x1x128x2xf32, #tpu.memory_space<vmem>>, vector<1x1x128x2xf32>
    %34 = vector.shape_cast %33 : vector<1x1x128x2xf32> to vector<128x2xf32>
    %cst_13 = arith.constant dense<0.000000e+00> : vector<2xf32>
    %35 = vector.multi_reduction <add>, %34, %cst_13 [0] : vector<128x2xf32> to vector<2xf32>
    %36 = vector.shape_cast %35 : vector<2xf32> to vector<1x2xf32>
    %cst_14 = arith.constant 1.280000e+02 : f32
    %37 = vector.broadcast %cst_14 : f32 to vector<1x2xf32>
    %38 = arith.divf %36, %37 : vector<1x2xf32>
    %39 = arith.mulf %34, %34 : vector<128x2xf32>
    %cst_15 = arith.constant dense<0.000000e+00> : vector<2xf32>
    %40 = vector.multi_reduction <add>, %39, %cst_15 [0] : vector<128x2xf32> to vector<2xf32>
    %41 = vector.shape_cast %40 : vector<2xf32> to vector<1x2xf32>
    %cst_16 = arith.constant 1.280000e+02 : f32
    %42 = vector.broadcast %cst_16 : f32 to vector<1x2xf32>
    %43 = arith.divf %41, %42 : vector<1x2xf32>
    %44 = arith.mulf %38, %38 : vector<1x2xf32>
    %45 = arith.subf %43, %44 : vector<1x2xf32>
    %cst_17 = arith.constant 0.000000e+00 : f32
    %46 = vector.broadcast %cst_17 : f32 to vector<1x2xf32>
    %47 = arith.maximumf %45, %46 : vector<1x2xf32>
    %48 = vector.broadcast %38 : vector<1x2xf32> to vector<128x2xf32>
    %49 = arith.subf %34, %48 : vector<128x2xf32>
    %cst_18 = arith.constant 9.99999997E-7 : f32
    %50 = vector.broadcast %cst_18 : f32 to vector<1x2xf32>
    %51 = arith.addf %47, %50 : vector<1x2xf32>
    %52 = math.rsqrt %51 : vector<1x2xf32>
    %53 = vector.broadcast %52 : vector<1x2xf32> to vector<128x2xf32>
    %54 = arith.mulf %49, %53 : vector<128x2xf32>
    %55 = vector.broadcast %3 : vector<128x1xf32> to vector<128x2xf32>
    %56 = arith.mulf %54, %55 : vector<128x2xf32>
    %57 = vector.broadcast %4 : vector<128x1xf32> to vector<128x2xf32>
    %58 = arith.addf %56, %57 : vector<128x2xf32>
    %59 = vector.extract_strided_slice %58 {offsets = [0, 0], sizes = [128, 1], strides = [1, 1]} : vector<128x2xf32> to vector<128x1xf32>
    %c0_i32 = arith.constant 0 : i32
    %60 = arith.cmpi sgt, %arg1, %c0_i32 : i32
    %61 = arith.extui %60 : i1 to i32
    %62 = arith.sitofp %61 : i32 to f32
    %63 = vector.broadcast %62 : f32 to vector<128x1xf32>
    %64 = arith.mulf %59, %63 : vector<128x1xf32>
    %65 = vector.extract_strided_slice %58 {offsets = [0, 1], sizes = [128, 1], strides = [1, 1]} : vector<128x2xf32> to vector<128x1xf32>
    %c1_i32 = arith.constant 1 : i32
    %66 = arith.cmpi slt, %arg1, %c1_i32 : i32
    %67 = arith.extui %66 : i1 to i32
    %68 = arith.sitofp %67 : i32 to f32
    %69 = vector.broadcast %68 : f32 to vector<128x1xf32>
    %70 = arith.mulf %65, %69 : vector<128x1xf32>
    %71 = arith.truncf %32 : vector<128x128xf32> to vector<128x128xbf16>
    %c1 = arith.constant 1 : index
    %c0_19 = arith.constant 0 : index
    %c0_20 = arith.constant 0 : index
    %72 = vector.load %arg5[%c1, %c0_19, %c0_20] : memref<3x128x128xbf16, #tpu.memory_space<vmem>>, vector<1x128x128xbf16>
    %73 = vector.shape_cast %72 : vector<1x128x128xbf16> to vector<128x128xbf16>
    %cst_21 = arith.constant dense<0.000000e+00> : vector<128x128xf32>
    %74 = tpu.matmul %73, %71, %cst_21 {dimension_numbers = #tpu.dot_dimension_numbers<[1], [0], [0], [1], [0, 0, 1, 1], [], []>} : vector<128x128xbf16>, vector<128x128xbf16>, vector<128x128xf32> -> vector<128x128xf32>
    %c1_i32_22 = arith.constant 1 : i32
    %75 = tpu.dynamic_rotate %32 by %c1_i32_22 dim 1 : vector<128x128xf32>, i32 -> vector<128x128xf32>
    %76 = arith.truncf %75 : vector<128x128xf32> to vector<128x128xbf16>
    %c0_23 = arith.constant 0 : index
    %c0_24 = arith.constant 0 : index
    %77 = vector.load %arg10[%c0_23, %c0_24] : memref<128x128xbf16, #tpu.memory_space<vmem>>, vector<128x128xbf16>
    tpu.vector_store %arg10[%c0_23, %c0_24], %76 {strides = array<i32>} : memref<128x128xbf16, #tpu.memory_space<vmem>>, vector<128x128xbf16>,
    %78 = arith.truncf %64 : vector<128x1xf32> to vector<128x1xbf16>
    %c0_25 = arith.constant 0 : index
    %c0_26 = arith.constant 0 : index
    %79 = vector.load %arg10[%c0_25, %c0_26] : memref<128x128xbf16, #tpu.memory_space<vmem>>, vector<128x1xbf16>
    tpu.vector_store %arg10[%c0_25, %c0_26], %78 {strides = array<i32>} : memref<128x128xbf16, #tpu.memory_space<vmem>>, vector<128x1xbf16>,
    %c0_27 = arith.constant 0 : index
    %c0_28 = arith.constant 0 : index
    %c0_29 = arith.constant 0 : index
    %80 = vector.load %arg5[%c0_27, %c0_28, %c0_29] : memref<3x128x128xbf16, #tpu.memory_space<vmem>>, vector<1x128x128xbf16>
    %81 = vector.shape_cast %80 : vector<1x128x128xbf16> to vector<128x128xbf16>
    %c0_30 = arith.constant 0 : index
    %c0_31 = arith.constant 0 : index
    %82 = vector.load %arg10[%c0_30, %c0_31] : memref<128x128xbf16, #tpu.memory_space<vmem>>, vector<128x128xbf16>
    %cst_32 = arith.constant dense<0.000000e+00> : vector<128x128xf32>
    %83 = tpu.matmul %81, %82, %cst_32 {dimension_numbers = #tpu.dot_dimension_numbers<[1], [0], [0], [1], [0, 0, 1, 1], [], []>} : vector<128x128xbf16>, vector<128x128xbf16>, vector<128x128xf32> -> vector<128x128xf32>
    %84 = arith.addf %74, %83 : vector<128x128xf32>
    %c127_i32 = arith.constant 127 : i32
    %85 = tpu.dynamic_rotate %32 by %c127_i32 dim 1 : vector<128x128xf32>, i32 -> vector<128x128xf32>
    %86 = arith.truncf %85 : vector<128x128xf32> to vector<128x128xbf16>
    %c0_33 = arith.constant 0 : index
    %c0_34 = arith.constant 0 : index
    %87 = vector.load %arg10[%c0_33, %c0_34] : memref<128x128xbf16, #tpu.memory_space<vmem>>, vector<128x128xbf16>
    tpu.vector_store %arg10[%c0_33, %c0_34], %86 {strides = array<i32>} : memref<128x128xbf16, #tpu.memory_space<vmem>>, vector<128x128xbf16>,
    %88 = arith.truncf %70 : vector<128x1xf32> to vector<128x1xbf16>
    %c0_35 = arith.constant 0 : index
    %c127 = arith.constant 127 : index
    %89 = vector.load %arg10[%c0_35, %c127] : memref<128x128xbf16, #tpu.memory_space<vmem>>, vector<128x1xbf16>
    tpu.vector_store %arg10[%c0_35, %c127], %88 {strides = array<i32>} : memref<128x128xbf16, #tpu.memory_space<vmem>>, vector<128x1xbf16>,
    %c2 = arith.constant 2 : index
    %c0_36 = arith.constant 0 : index
    %c0_37 = arith.constant 0 : index
    %90 = vector.load %arg5[%c2, %c0_36, %c0_37] : memref<3x128x128xbf16, #tpu.memory_space<vmem>>, vector<1x128x128xbf16>
    %91 = vector.shape_cast %90 : vector<1x128x128xbf16> to vector<128x128xbf16>
    %c0_38 = arith.constant 0 : index
    %c0_39 = arith.constant 0 : index
    %92 = vector.load %arg10[%c0_38, %c0_39] : memref<128x128xbf16, #tpu.memory_space<vmem>>, vector<128x128xbf16>
    %cst_40 = arith.constant dense<0.000000e+00> : vector<128x128xf32>
    %93 = tpu.matmul %91, %92, %cst_40 {dimension_numbers = #tpu.dot_dimension_numbers<[1], [0], [0], [1], [0, 0, 1, 1], [], []>} : vector<128x128xbf16>, vector<128x128xbf16>, vector<128x128xf32> -> vector<128x128xf32>
    %94 = arith.addf %84, %93 : vector<128x128xf32>
    %95 = arith.addf %1, %94 : vector<128x128xf32>
    %96 = vector.broadcast %5 : vector<128x1xf32> to vector<128x128xf32>
    %97 = arith.addf %95, %96 : vector<128x128xf32>
    %cst_41 = arith.constant dense<0.000000e+00> : vector<128xf32>
    %98 = vector.multi_reduction <add>, %97, %cst_41 [0] : vector<128x128xf32> to vector<128xf32>
    %99 = vector.shape_cast %98 : vector<128xf32> to vector<1x128xf32>
    %cst_42 = arith.constant 1.280000e+02 : f32
    %100 = vector.broadcast %cst_42 : f32 to vector<1x128xf32>
    %101 = arith.divf %99, %100 : vector<1x128xf32>
    %102 = arith.mulf %97, %97 : vector<128x128xf32>
    %cst_43 = arith.constant dense<0.000000e+00> : vector<128xf32>
    %103 = vector.multi_reduction <add>, %102, %cst_43 [0] : vector<128x128xf32> to vector<128xf32>
    %104 = vector.shape_cast %103 : vector<128xf32> to vector<1x128xf32>
    %cst_44 = arith.constant 1.280000e+02 : f32
    %105 = vector.broadcast %cst_44 : f32 to vector<1x128xf32>
    %106 = arith.divf %104, %105 : vector<1x128xf32>
    %107 = arith.mulf %101, %101 : vector<1x128xf32>
    %108 = arith.subf %106, %107 : vector<1x128xf32>
    %cst_45 = arith.constant 0.000000e+00 : f32
    %109 = vector.broadcast %cst_45 : f32 to vector<1x128xf32>
    %110 = arith.maximumf %108, %109 : vector<1x128xf32>
    %111 = vector.broadcast %101 : vector<1x128xf32> to vector<128x128xf32>
    %112 = arith.subf %97, %111 : vector<128x128xf32>
    %cst_46 = arith.constant 9.99999997E-7 : f32
    %113 = vector.broadcast %cst_46 : f32 to vector<1x128xf32>
    %114 = arith.addf %110, %113 : vector<1x128xf32>
    %115 = math.rsqrt %114 : vector<1x128xf32>
    %116 = vector.broadcast %115 : vector<1x128xf32> to vector<128x128xf32>
    %117 = arith.mulf %112, %116 : vector<128x128xf32>
    %118 = vector.broadcast %6 : vector<128x1xf32> to vector<128x128xf32>
    %119 = arith.mulf %117, %118 : vector<128x128xf32>
    %120 = vector.broadcast %7 : vector<128x1xf32> to vector<128x128xf32>
    %121 = arith.addf %119, %120 : vector<128x128xf32>
    %c0_47 = arith.constant 0 : index
    %c0_48 = arith.constant 0 : index
    %122 = vector.load %arg6[%c0_47, %c0_48] : memref<512x128xbf16, #tpu.memory_space<vmem>>, vector<512x128xbf16>
    %123 = arith.truncf %121 : vector<128x128xf32> to vector<128x128xbf16>
    %cst_49 = arith.constant dense<0.000000e+00> : vector<512x128xf32>
    %124 = tpu.matmul %122, %123, %cst_49 {dimension_numbers = #tpu.dot_dimension_numbers<[1], [0], [0], [1], [0, 0, 1, 1], [], []>} : vector<512x128xbf16>, vector<128x128xbf16>, vector<512x128xf32> -> vector<512x128xf32>
    %c0_50 = arith.constant 0 : index
    %c0_51 = arith.constant 0 : index
    %125 = vector.load %arg7[%c0_50, %c0_51] : memref<512x1xf32, #tpu.memory_space<vmem>>, vector<512x1xf32>
    %126 = vector.broadcast %125 : vector<512x1xf32> to vector<512x128xf32>
    %127 = arith.addf %124, %126 : vector<512x128xf32>
    %cst_52 = arith.constant 5.000000e-01 : f32
    %128 = vector.broadcast %cst_52 : f32 to vector<512x128xf32>
    %129 = arith.mulf %128, %127 : vector<512x128xf32>
    %cst_53 = arith.constant 0.707106769 : f32
    %130 = vector.broadcast %cst_53 : f32 to vector<512x128xf32>
    %131 = arith.mulf %127, %130 : vector<512x128xf32>
    %132 = math.erf %131 : vector<512x128xf32>
    %cst_54 = arith.constant 1.000000e+00 : f32
    %133 = vector.broadcast %cst_54 : f32 to vector<512x128xf32>
    %134 = arith.addf %133, %132 : vector<512x128xf32>
    %135 = arith.mulf %129, %134 : vector<512x128xf32>
    %c0_55 = arith.constant 0 : index
    %c0_56 = arith.constant 0 : index
    %136 = vector.load %arg8[%c0_55, %c0_56] : memref<128x512xbf16, #tpu.memory_space<vmem>>, vector<128x512xbf16>
    %137 = arith.truncf %135 : vector<512x128xf32> to vector<512x128xbf16>
    %cst_57 = arith.constant dense<0.000000e+00> : vector<128x128xf32>
    %138 = tpu.matmul %136, %137, %cst_57 {dimension_numbers = #tpu.dot_dimension_numbers<[1], [0], [0], [1], [0, 0, 1, 1], [], []>} : vector<128x512xbf16>, vector<512x128xbf16>, vector<128x128xf32> -> vector<128x128xf32>
    %139 = vector.broadcast %8 : vector<128x1xf32> to vector<128x128xf32>
    %140 = arith.addf %138, %139 : vector<128x128xf32>
    %141 = arith.addf %97, %140 : vector<128x128xf32>
    %c0_58 = arith.constant 0 : index
    %c0_59 = arith.constant 0 : index
    %c0_60 = arith.constant 0 : index
    %142 = vector.load %arg9[%c0_58, %c0_59, %c0_60] : memref<1x128x128xf32, #tpu.memory_space<vmem>>, vector<1x128x128xf32>
    %143 = vector.shape_cast %142 : vector<1x128x128xf32> to vector<128x128xf32>
    %144 = vector.shape_cast %141 : vector<128x128xf32> to vector<1x128x128xf32>
    tpu.vector_store %arg9[%c0_58, %c0_59, %c0_60], %144 {strides = array<i32>} : memref<1x128x128xf32, #tpu.memory_space<vmem>>, vector<1x128x128xf32>,
    return
  }
  func.func @transform_0(%arg0: i32, %arg1: i32) -> (i32, i32, i32) {
    %c0_i32 = arith.constant 0 : i32
    %c0_i32_0 = arith.constant 0 : i32
    return %arg0, %c0_i32, %arg1 : i32, i32, i32
  }
  func.func @transform_1(%arg0: i32, %arg1: i32) -> (i32, i32, i32, i32) {
    %c0_i32 = arith.constant 0 : i32
    %c0_i32_0 = arith.constant 0 : i32
    %c0_i32_1 = arith.constant 0 : i32
    return %arg0, %arg1, %c0_i32, %c0_i32_0 : i32, i32, i32, i32
  }
  func.func @transform_2(%arg0: i32, %arg1: i32) -> (i32, i32) {
    %c0_i32 = arith.constant 0 : i32
    %c0_i32_0 = arith.constant 0 : i32
    %c0_i32_1 = arith.constant 0 : i32
    return %c0_i32, %c0_i32_0 : i32, i32
  }
  func.func @transform_3(%arg0: i32, %arg1: i32) -> (i32, i32, i32) {
    %c0_i32 = arith.constant 0 : i32
    %c0_i32_0 = arith.constant 0 : i32
    %c0_i32_1 = arith.constant 0 : i32
    %c0_i32_2 = arith.constant 0 : i32
    return %c0_i32, %c0_i32_0, %c0_i32_1 : i32, i32, i32
  }
  func.func @transform_4(%arg0: i32, %arg1: i32) -> (i32, i32) {
    %c0_i32 = arith.constant 0 : i32
    %c0_i32_0 = arith.constant 0 : i32
    %c0_i32_1 = arith.constant 0 : i32
    return %c0_i32, %c0_i32_0 : i32, i32
  }
  func.func @transform_5(%arg0: i32, %arg1: i32) -> (i32, i32) {
    %c0_i32 = arith.constant 0 : i32
    %c0_i32_0 = arith.constant 0 : i32
    %c0_i32_1 = arith.constant 0 : i32
    return %c0_i32, %c0_i32_0 : i32, i32
  }
  func.func @transform_6(%arg0: i32, %arg1: i32) -> (i32, i32) {
    %c0_i32 = arith.constant 0 : i32
    %c0_i32_0 = arith.constant 0 : i32
    %c0_i32_1 = arith.constant 0 : i32
    return %c0_i32, %c0_i32_0 : i32, i32
  }
  func.func @transform_7(%arg0: i32, %arg1: i32) -> (i32, i32, i32) {
    %c0_i32 = arith.constant 0 : i32
    %c0_i32_0 = arith.constant 0 : i32
    return %arg0, %c0_i32, %arg1 : i32, i32, i32
  }
}

</mosaic_0001>

<llo_original>
// kernel: convformer_block.1
$region0: #{convformer_block.1}
  #allocation0 [shape = 'u32[]', space=smem, size = 0x4, offset = 0x4, fixed_abs, tag = 'smem constant byte address 0x4 - core index']
  #allocation1 [shape = 'u32[72,128]{1,0:T(1,128)}', space=vmem, size = 0x9000, scoped, tag = 'internal scratch']
  #allocation2 [shape = 'bf16[128,128]{1,0:T(8,128)(2,1)}', space=vmem, size = 0x8000, scoped, tag = 'scratch operand']
  %s0 = inlined_call_operand.vmem [shape: f32[2,128,256], index: 0, kind: input, shape index: {}]
  %s1 = inlined_call_operand.vmem [shape: f32[2,2,128,2], index: 1, kind: input, shape index: {}]
  %s2 = inlined_call_operand.vmem [shape: f32[128,6], index: 2, kind: input, shape index: {}]
  %s3 = inlined_call_operand.vmem [shape: bf16[3,128,128], index: 3, kind: input, shape index: {}]
  %s4 = inlined_call_operand.vmem [shape: bf16[512,128], index: 4, kind: input, shape index: {}]
  %s5 = inlined_call_operand.vmem [shape: f32[512,1], index: 5, kind: input, shape index: {}]
  %s6 = inlined_call_operand.vmem [shape: bf16[128,512], index: 6, kind: input, shape index: {}]
  %s7 = inlined_call_operand.hbm [shape: f32[2,128,256], index: 7, kind: output, shape index: {}]
  %s8 = sld [smem:[#allocation0]]
  $region99: #{convformer_block.1} parent=0
    _
  %s10 = ssub.s32 1, %s8
  %s11 = scalar_select 0, %s10, %s8
  $region1: #{convformer_block.1} parent=0
    #allocation3 [shape = 'u8[131072]{0}', space=vmem, size = 0x20000, scoped, tag = 'input window, operand 0']
    #allocation4 [shape = 'u8[131072]{0}', space=vmem, size = 0x20000, scoped, tag = 'output window, operand 0']
    #allocation5 [shape = 's32[2]{0}', space=sflag, size = 0x8, scoped, tag = 'scoped memory for convformer_block.1']
    %12 = vsyncpa [#allocation5], 0
    %s13 = scalar_lea.sflag [#allocation5], 1
    %14 = vsyncpa %s13, 0
    loop: start=0, step=1, limit=6
    $region2: #{convformer_block.1} parent=1 // loop_pre_header
      _
    $region3: #{convformer_block.1} parent=1 // loop_header
      %s16 = sphi 0, %s20
      %p17 = scmp.ge.s32.totalorder %s16, 6
      %s23 = sphi 0, %s35
      %s24 = sphi 0, %s31
      %s25 = sphi 0, %s23
      %s26 = sphi 0, %s24
      %s27 = sphi 0, %s25
      %s28 = sphi 0, %s26
      %s40 = sphi 0, %s42
      %s43 = sphi 0, %s40
      %s44 = sphi 0, %s43
      %s60 = sphi 0, %s44
      %s68 = sphi 0, %s70
      %s71 = sphi 0, %s68
      %s72 = sphi 0, %s71
      %s88 = sphi 0, %s72
      %s92 = sphi 0, %s92
      %s94 = sphi 0, %s92
      %s95 = sphi 0, %s94
      %s109 = sphi 0, %s95
      %s113 = sphi 0, %s113
      %s115 = sphi 0, %s113
      %s116 = sphi 0, %s115
      %s130 = sphi 0, %s116
      %s134 = sphi 0, %s134
      %s136 = sphi 0, %s134
      %s137 = sphi 0, %s136
      %s151 = sphi 0, %s137
      %s155 = sphi 0, %s155
      %s157 = sphi 0, %s155
      %s158 = sphi 0, %s157
      %s172 = sphi 0, %s158
      %s176 = sphi 0, %s176
      %s178 = sphi 0, %s176
      %s179 = sphi 0, %s178
      %s193 = sphi 0, %s179
      %s201 = sphi 0, %s203
      %s204 = sphi 0, %s201
      %s205 = sphi 0, %s204
      %s221 = sphi 0, %s205
    $region4: #{convformer_block.1} parent=1 // loop_header_branch
      %19 = sbr.rel (%p17) target = $region8
    $region5: #{convformer_block.1} parent=1 // loop_body
      %s21 = ssub.s32 %s16, 1
      %s22 = ssub.s32 %s16, 2
      %s29 = sadd.s32 1, %s24
      %p30 = scmp.ge.s32.totalorder %s29, 2
      %s31 = scalar_select %p30, 0, %s29
      %s32 = sadd.s32 1, %s23
      %s33 = scalar_select %p30, %s32, %s23
      %p34 = scmp.ge.s32.totalorder %s33, 2
      %s35 = scalar_select %p34, 0, %s33
      %s36 = ssub.s32 %s23, %s35
      %s37 = ssub.s32 %s24, %s31
      %s38 = sor.u32 %s36, %s37
      %p39 = scmp.eq.s32.totalorder %s38, 0
      %s41 = sadd.s32 %s40, 1
      %s42 = scalar_select %p39, %s40, %s41
      %p45 = pneg %p39
      %p46 = scmp.eq.s32.totalorder %s16, 3
      %p47 = por %p45, %p46
      %p48 = scmp.ne.s32.totalorder %s40, %s43
      %p49 = scmp.eq.s32.totalorder %s16, 0
      %p50 = por %p48, %p49
      %p51 = scmp.ne.s32.totalorder %s40, %s43
      %p52 = scmp.eq.s32.totalorder %s21, 3
      %p53 = por %p51, %p52
      %p54 = scmp.ne.s32.totalorder %s43, %s44
      %p55 = scmp.eq.s32.totalorder %s21, 0
      %p56 = por %p54, %p55
      %p57 = scmp.ne.s32.totalorder %s43, %s44
      %p58 = scmp.eq.s32.totalorder %s22, 3
      %p59 = por %p57, %p58
      %p61 = scmp.ne.s32.totalorder %s44, %s60
      %p62 = scmp.eq.s32.totalorder %s22, 0
      %p63 = por %p61, %p62
      %s64 = ssub.s32 %s23, %s35
      %s65 = ssub.s32 %s24, %s31
      %s66 = sor.u32 %s64, %s65
      %p67 = scmp.eq.s32.totalorder %s66, 0
      %s69 = sadd.s32 %s68, 1
      %s70 = scalar_select %p67, %s68, %s69
      %p73 = pneg %p67
      %p74 = scmp.eq.s32.totalorder %s16, 3
      %p75 = por %p73, %p74
      %p76 = scmp.ne.s32.totalorder %s68, %s71
      %p77 = scmp.eq.s32.totalorder %s16, 0
      %p78 = por %p76, %p77
      %p79 = scmp.ne.s32.totalorder %s68, %s71
      %p80 = scmp.eq.s32.totalorder %s21, 3
      %p81 = por %p79, %p80
      %p82 = scmp.ne.s32.totalorder %s71, %s72
      %p83 = scmp.eq.s32.totalorder %s21, 0
      %p84 = por %p82, %p83
      %p85 = scmp.ne.s32.totalorder %s71, %s72
      %p86 = scmp.eq.s32.totalorder %s22, 3
      %p87 = por %p85, %p86
      %p89 = scmp.ne.s32.totalorder %s72, %s88
      %p90 = scmp.eq.s32.totalorder %s22, 0
      %p91 = por %p89, %p90
      %s93 = sadd.s32 %s92, 1
      %p96 = scmp.eq.s32.totalorder %s16, 3
      %p97 = scmp.ne.s32.totalorder %s92, %s94
      %p98 = scmp.eq.s32.totalorder %s16, 0
      %p99 = por %p97, %p98
      %p100 = scmp.ne.s32.totalorder %s92, %s94
      %p101 = scmp.eq.s32.totalorder %s21, 3
      %p102 = por %p100, %p101
      %p103 = scmp.ne.s32.totalorder %s94, %s95
      %p104 = scmp.eq.s32.totalorder %s21, 0
      %p105 = por %p103, %p104
      %p106 = scmp.ne.s32.totalorder %s94, %s95
      %p107 = scmp.eq.s32.totalorder %s22, 3
      %p108 = por %p106, %p107
      %p110 = scmp.ne.s32.totalorder %s95, %s109
      %p111 = scmp.eq.s32.totalorder %s22, 0
      %p112 = por %p110, %p111
      %s114 = sadd.s32 %s113, 1
      %p117 = scmp.eq.s32.totalorder %s16, 3
      %p118 = scmp.ne.s32.totalorder %s113, %s115
      %p119 = scmp.eq.s32.totalorder %s16, 0
      %p120 = por %p118, %p119
      %p121 = scmp.ne.s32.totalorder %s113, %s115
      %p122 = scmp.eq.s32.totalorder %s21, 3
      %p123 = por %p121, %p122
      %p124 = scmp.ne.s32.totalorder %s115, %s116
      %p125 = scmp.eq.s32.totalorder %s21, 0
      %p126 = por %p124, %p125
      %p127 = scmp.ne.s32.totalorder %s115, %s116
      %p128 = scmp.eq.s32.totalorder %s22, 3
      %p129 = por %p127, %p128
      %p131 = scmp.ne.s32.totalorder %s116, %s130
      %p132 = scmp.eq.s32.totalorder %s22, 0
      %p133 = por %p131, %p132
      %s135 = sadd.s32 %s134, 1
      %p138 = scmp.eq.s32.totalorder %s16, 3
      %p139 = scmp.ne.s32.totalorder %s134, %s136
      %p140 = scmp.eq.s32.totalorder %s16, 0
      %p141 = por %p139, %p140
      %p142 = scmp.ne.s32.totalorder %s134, %s136
      %p143 = scmp.eq.s32.totalorder %s21, 3
      %p144 = por %p142, %p143
      %p145 = scmp.ne.s32.totalorder %s136, %s137
      %p146 = scmp.eq.s32.totalorder %s21, 0
      %p147 = por %p145, %p146
      %p148 = scmp.ne.s32.totalorder %s136, %s137
      %p149 = scmp.eq.s32.totalorder %s22, 3
      %p150 = por %p148, %p149
      %p152 = scmp.ne.s32.totalorder %s137, %s151
      %p153 = scmp.eq.s32.totalorder %s22, 0
      %p154 = por %p152, %p153
      %s156 = sadd.s32 %s155, 1
      %p159 = scmp.eq.s32.totalorder %s16, 3
      %p160 = scmp.ne.s32.totalorder %s155, %s157
      %p161 = scmp.eq.s32.totalorder %s16, 0
      %p162 = por %p160, %p161
      %p163 = scmp.ne.s32.totalorder %s155, %s157
      %p164 = scmp.eq.s32.totalorder %s21, 3
      %p165 = por %p163, %p164
      %p166 = scmp.ne.s32.totalorder %s157, %s158
      %p167 = scmp.eq.s32.totalorder %s21, 0
      %p168 = por %p166, %p167
      %p169 = scmp.ne.s32.totalorder %s157, %s158
      %p170 = scmp.eq.s32.totalorder %s22, 3
      %p171 = por %p169, %p170
      %p173 = scmp.ne.s32.totalorder %s158, %s172
      %p174 = scmp.eq.s32.totalorder %s22, 0
      %p175 = por %p173, %p174
      %s177 = sadd.s32 %s176, 1
      %p180 = scmp.eq.s32.totalorder %s16, 3
      %p181 = scmp.ne.s32.totalorder %s176, %s178
      %p182 = scmp.eq.s32.totalorder %s16, 0
      %p183 = por %p181, %p182
      %p184 = scmp.ne.s32.totalorder %s176, %s178
      %p185 = scmp.eq.s32.totalorder %s21, 3
      %p186 = por %p184, %p185
      %p187 = scmp.ne.s32.totalorder %s178, %s179
      %p188 = scmp.eq.s32.totalorder %s21, 0
      %p189 = por %p187, %p188
      %p190 = scmp.ne.s32.totalorder %s178, %s179
      %p191 = scmp.eq.s32.totalorder %s22, 3
      %p192 = por %p190, %p191
      %p194 = scmp.ne.s32.totalorder %s179, %s193
      %p195 = scmp.eq.s32.totalorder %s22, 0
      %p196 = por %p194, %p195
      %s197 = ssub.s32 %s23, %s35
      %s198 = ssub.s32 %s24, %s31
      %s199 = sor.u32 %s197, %s198
      %p200 = scmp.eq.s32.totalorder %s199, 0
      %s202 = sadd.s32 %s201, 1
      %s203 = scalar_select %p200, %s201, %s202
      %p206 = pneg %p200
      %p207 = scmp.eq.s32.totalorder %s16, 3
      %p208 = por %p206, %p207
      %p209 = scmp.ne.s32.totalorder %s201, %s204
      %p210 = scmp.eq.s32.totalorder %s16, 0
      %p211 = por %p209, %p210
      %p212 = scmp.ne.s32.totalorder %s201, %s204
      %p213 = scmp.eq.s32.totalorder %s21, 3
      %p214 = por %p212, %p213
      %p215 = scmp.ne.s32.totalorder %s204, %s205
      %p216 = scmp.eq.s32.totalorder %s21, 0
      %p217 = por %p215, %p216
      %p218 = scmp.ne.s32.totalorder %s204, %s205
      %p219 = scmp.eq.s32.totalorder %s22, 3
      %p220 = por %p218, %p219
      %p222 = scmp.ne.s32.totalorder %s205, %s221
      %p223 = scmp.eq.s32.totalorder %s22, 0
      %p224 = por %p222, %p223
      %p225 = scmp.le.s32.totalorder 1, %s16
      %p226 = scmp.lt.s32.totalorder %s16, 5
      %p227 = pnand %p225, %p226
      %p228 = pneg %p227
      // Predicated region
      $region9: #{convformer_block.1} parent=5 // pred_check
        _
      $region10: #{convformer_block.1} parent=5 // pred_check_branch
        %230 = sbr.rel (%p227) target = $region12
      $region11: #{convformer_block.1} parent=5 // pred_region
        %s231 = ssub.s32 %s16, 1
        // Predicated region
        $region13: #{convformer_block.1} parent=11 // pred_check
          %p232 = pneg %p105
        $region14: #{convformer_block.1} parent=11 // pred_check_branch
          %234 = sbr.rel (%p232) target = $region16
        $region15: #{convformer_block.1} parent=11 // pred_region
          _
        $region16: #{convformer_block.1} parent=11 // pred_fallthru
          _
        // Predicated region
        $region17: #{convformer_block.1} parent=11 // pred_check
          %p235 = pneg %p126
        $region18: #{convformer_block.1} parent=11 // pred_check_branch
          %237 = sbr.rel (%p235) target = $region20
        $region19: #{convformer_block.1} parent=11 // pred_region
          _
        $region20: #{convformer_block.1} parent=11 // pred_fallthru
          _
        // Predicated region
        $region21: #{convformer_block.1} parent=11 // pred_check
          %p238 = pneg %p147
        $region22: #{convformer_block.1} parent=11 // pred_check_branch
          %240 = sbr.rel (%p238) target = $region24
        $region23: #{convformer_block.1} parent=11 // pred_region
          _
        $region24: #{convformer_block.1} parent=11 // pred_fallthru
          _
        // Predicated region
        $region25: #{convformer_block.1} parent=11 // pred_check
          %p241 = pneg %p168
        $region26: #{convformer_block.1} parent=11 // pred_check_branch
          %243 = sbr.rel (%p241) target = $region28
        $region27: #{convformer_block.1} parent=11 // pred_region
          _
        $region28: #{convformer_block.1} parent=11 // pred_fallthru
          _
        // Predicated region
        $region29: #{convformer_block.1} parent=11 // pred_check
          %p244 = pneg %p189
        $region30: #{convformer_block.1} parent=11 // pred_check_branch
          %246 = sbr.rel (%p244) target = $region32
        $region31: #{convformer_block.1} parent=11 // pred_region
          _
        $region32: #{convformer_block.1} parent=11 // pred_fallthru
          _
      $region12: #{convformer_block.1} parent=5 // pred_fallthru
        _
      %p247 = scmp.lt.s32.totalorder %s16, 4
      // Predicated region
      $region33: #{convformer_block.1} parent=5 // pred_check
        %p248 = pneg %p247
      $region34: #{convformer_block.1} parent=5 // pred_check_branch
        %250 = sbr.rel (%p248) target = $region36
      $region35: #{convformer_block.1} parent=5 // pred_region
        // Predicated region
        $region37: #{convformer_block.1} parent=35 // pred_check
          %p251 = pneg %p50
        $region38: #{convformer_block.1} parent=35 // pred_check_branch
          %253 = sbr.rel (%p251) target = $region40
        $region39: #{convformer_block.1} parent=35 // pred_region
          %s254 = sand.u32 %s40, 1
          %s255 = sand.u32 %s40, 1
          %s256 = smul.addr %s255, 128
          %s257 = scalar_lea.vmem [#allocation3], %s256
          %s258 = smul.addr %s23, 32
          %s259 = sadd.s32 %s24, %s258
          %s260 = smul.addr %s259, 8
          %s261 = scalar_lea.vmem %s0, %s260
          // Predicated region
          $region41: #{convformer_block.1} parent=39 // pred_check
            _
          $region42: #{convformer_block.1} parent=39 // pred_check_branch
            %263 = sbr.rel (0) target = $region44
          $region43: #{convformer_block.1} parent=39 // pred_region
            // Predicated region
            $region45: #{convformer_block.1} parent=43 // pred_check
              _
            $region46: #{convformer_block.1} parent=43 // pred_check_branch
              %265 = sbr.rel (0) target = $region48
            $region47: #{convformer_block.1} parent=43 // pred_region
              // Predicated region
              $region60: #{convformer_block.1} parent=47 // pred_check
                _
              $region61: #{convformer_block.1} parent=47 // pred_check_branch
                %311 = sbr.rel (0) target = $region63
              $region62: #{convformer_block.1} parent=47 // pred_region
                loop: start=0, step=1, limit=1
                $region64: #{convformer_block.1} parent=62 // loop_pre_header
                  _
                $region65: #{convformer_block.1} parent=62 // loop_header
                  %s313 = sphi 0, %s317
                  %p314 = scmp.ge.s32.totalorder %s313, 1
                  %s318 = sphi %s261, %s261
                  %s319 = sphi %s257, %s257
                $region66: #{convformer_block.1} parent=62 // loop_header_branch
                  %316 = sbr.rel (%p314) target = $region70
                $region67: #{convformer_block.1} parent=62 // loop_body
                  %v320 = vld [vmem:[%s318] sm:$0xff]
                  %321 = vst [vmem:[%s319] sm:$0xff] %v320
                  %v322 = vld [vmem:[%s318 + $0x10] sm:$0xff]
                  %323 = vst [vmem:[%s319 + $0x8] sm:$0xff] %v322
                  %v324 = vld [vmem:[%s318 + $0x20] sm:$0xff]
                  %325 = vst [vmem:[%s319 + $0x10] sm:$0xff] %v324
                  %v326 = vld [vmem:[%s318 + $0x30] sm:$0xff]
                  %327 = vst [vmem:[%s319 + $0x18] sm:$0xff] %v326
                  %v328 = vld [vmem:[%s318 + $0x40] sm:$0xff]
                  %329 = vst [vmem:[%s319 + $0x20] sm:$0xff] %v328
                  %v330 = vld [vmem:[%s318 + $0x50] sm:$0xff]
                  %331 = vst [vmem:[%s319 + $0x28] sm:$0xff] %v330
                  %v332 = vld [vmem:[%s318 + $0x60] sm:$0xff]
                  %333 = vst [vmem:[%s319 + $0x30] sm:$0xff] %v332
                  %v334 = vld [vmem:[%s318 + $0x70] sm:$0xff]
                  %335 = vst [vmem:[%s319 + $0x38] sm:$0xff] %v334
                  %v336 = vld [vmem:[%s318 + $0x80] sm:$0xff]
                  %337 = vst [vmem:[%s319 + $0x40] sm:$0xff] %v336
                  %v338 = vld [vmem:[%s318 + $0x90] sm:$0xff]
                  %339 = vst [vmem:[%s319 + $0x48] sm:$0xff] %v338
                  %v340 = vld [vmem:[%s318 + $0xa0] sm:$0xff]
                  %341 = vst [vmem:[%s319 + $0x50] sm:$0xff] %v340
                  %v342 = vld [vmem:[%s318 + $0xb0] sm:$0xff]
                  %343 = vst [vmem:[%s319 + $0x58] sm:$0xff] %v342
                  %v344 = vld [vmem:[%s318 + $0xc0] sm:$0xff]
                  %345 = vst [vmem:[%s319 + $0x60] sm:$0xff] %v344
                  %v346 = vld [vmem:[%s318 + $0xd0] sm:$0xff]
                  %347 = vst [vmem:[%s319 + $0x68] sm:$0xff] %v346
                  %v348 = vld [vmem:[%s318 + $0xe0] sm:$0xff]
                  %349 = vst [vmem:[%s319 + $0x70] sm:$0xff] %v348
                  %v350 = vld [vmem:[%s318 + $0xf0] sm:$0xff]
                  %351 = vst [vmem:[%s319 + $0x78] sm:$0xff] %v350
                $region68: #{convformer_block.1} parent=62 // loop_footer
                  %s317 = sadd.s32 1, %s313
                $region69: #{convformer_block.1} parent=62 // loop_footer_branch
                  %312 = sbr.rel target = $region65
                $region70: #{convformer_block.1} parent=62 // loop_exit
                  _
              $region63: #{convformer_block.1} parent=47 // pred_fallthru
                _
              // Predicated region
              $region71: #{convformer_block.1} parent=47 // pred_check
                _
              $region72: #{convformer_block.1} parent=47 // pred_check_branch
                %353 = sbr.rel target = $region74
              $region73: #{convformer_block.1} parent=47 // pred_region
                _
              $region74: #{convformer_block.1} parent=47 // pred_fallthru
                _
            $region48: #{convformer_block.1} parent=43 // pred_fallthru
              _
            // Predicated region
            $region49: #{convformer_block.1} parent=43 // pred_check
              _
            $region50: #{convformer_block.1} parent=43 // pred_check_branch
              %267 = sbr.rel target = $region52
            $region51: #{convformer_block.1} parent=43 // pred_region
              %s269 = ssub.s32 256, 1
              loop: start=0, step=1, limit=1
              $region53: #{convformer_block.1} parent=51 // loop_pre_header
                _
              $region54: #{convformer_block.1} parent=51 // loop_header
                %s271 = sphi 0, %s275
                %p272 = scmp.ge.s32.totalorder %s271, 1
                %s276 = sphi %s261, %s261
                %s277 = sphi %s257, %s257
              $region55: #{convformer_block.1} parent=51 // loop_header_branch
                %274 = sbr.rel (%p272) target = $region59
              $region56: #{convformer_block.1} parent=51 // loop_body
                %v278 = vld [vmem:[%s276] sm:%s269]
                %279 = vst [vmem:[%s277] sm:%s269] %v278
                %v280 = vld [vmem:[%s276 + $0x10] sm:%s269]
                %281 = vst [vmem:[%s277 + $0x8] sm:%s269] %v280
                %v282 = vld [vmem:[%s276 + $0x20] sm:%s269]
                %283 = vst [vmem:[%s277 + $0x10] sm:%s269] %v282
                %v284 = vld [vmem:[%s276 + $0x30] sm:%s269]
                %285 = vst [vmem:[%s277 + $0x18] sm:%s269] %v284
                %v286 = vld [vmem:[%s276 + $0x40] sm:%s269]
                %287 = vst [vmem:[%s277 + $0x20] sm:%s269] %v286
                %v288 = vld [vmem:[%s276 + $0x50] sm:%s269]
                %289 = vst [vmem:[%s277 + $0x28] sm:%s269] %v288
                %v290 = vld [vmem:[%s276 + $0x60] sm:%s269]
                %291 = vst [vmem:[%s277 + $0x30] sm:%s269] %v290
                %v292 = vld [vmem:[%s276 + $0x70] sm:%s269]
                %293 = vst [vmem:[%s277 + $0x38] sm:%s269] %v292
                %v294 = vld [vmem:[%s276 + $0x80] sm:%s269]
                %295 = vst [vmem:[%s277 + $0x40] sm:%s269] %v294
                %v296 = vld [vmem:[%s276 + $0x90] sm:%s269]
                %297 = vst [vmem:[%s277 + $0x48] sm:%s269] %v296
                %v298 = vld [vmem:[%s276 + $0xa0] sm:%s269]
                %299 = vst [vmem:[%s277 + $0x50] sm:%s269] %v298
                %v300 = vld [vmem:[%s276 + $0xb0] sm:%s269]
                %301 = vst [vmem:[%s277 + $0x58] sm:%s269] %v300
                %v302 = vld [vmem:[%s276 + $0xc0] sm:%s269]
                %303 = vst [vmem:[%s277 + $0x60] sm:%s269] %v302
                %v304 = vld [vmem:[%s276 + $0xd0] sm:%s269]
                %305 = vst [vmem:[%s277 + $0x68] sm:%s269] %v304
                %v306 = vld [vmem:[%s276 + $0xe0] sm:%s269]
                %307 = vst [vmem:[%s277 + $0x70] sm:%s269] %v306
                %v308 = vld [vmem:[%s276 + $0xf0] sm:%s269]
                %309 = vst [vmem:[%s277 + $0x78] sm:%s269] %v308
              $region57: #{convformer_block.1} parent=51 // loop_footer
                %s275 = sadd.s32 1, %s271
              $region58: #{convformer_block.1} parent=51 // loop_footer_branch
                %270 = sbr.rel target = $region54
              $region59: #{convformer_block.1} parent=51 // loop_exit
                _
            $region52: #{convformer_block.1} parent=43 // pred_fallthru
              _
          $region44: #{convformer_block.1} parent=39 // pred_fallthru
            _
          %354 = vnop
        $region40: #{convformer_block.1} parent=35 // pred_fallthru
          _
        // Predicated region
        $region75: #{convformer_block.1} parent=35 // pred_check
          %p355 = pneg %p78
        $region76: #{convformer_block.1} parent=35 // pred_check_branch
          %357 = sbr.rel (%p355) target = $region78
        $region77: #{convformer_block.1} parent=35 // pred_region
          %p358 = scmp.lt.s32.totalorder %s23, 1
          %s359 = scalar_select %p358, %s23, 1
          %p360 = scmp.lt.s32.totalorder %s24, 1
          %s361 = scalar_select %p360, %s24, 1
          %s362 = smul.addr %s361, 16
          %s363 = smul.addr %s359, 32
          %s364 = sadd.s32 %s362, %s363
          %s365 = smul.addr %s364, 8
          %s366 = scalar_lea.vmem %s1, %s365
        $region78: #{convformer_block.1} parent=35 // pred_fallthru
          _
      $region36: #{convformer_block.1} parent=5 // pred_fallthru
        _
      %p367 = scmp.le.s32.totalorder 1, %s16
      %p368 = scmp.lt.s32.totalorder %s16, 5
      %p369 = pnand %p367, %p368
      %p370 = pneg %p369
      // Predicated region
      $region79: #{convformer_block.1} parent=5 // pred_check
        _
      $region80: #{convformer_block.1} parent=5 // pred_check_branch
        %372 = sbr.rel (%p369) target = $region82
      $region81: #{convformer_block.1} parent=5 // pred_region
        %s373 = ssub.s32 %s16, 1
        %s374 = sand.u32 %s43, 1
        %s375 = sand.u32 %s43, 1
        %s376 = smul.addr %s375, 128
        %s377 = scalar_lea.vmem [#allocation3], %s376
        // Predicated region
        $region83: #{convformer_block.1} parent=81 // pred_check
          %p378 = pneg %p56
        $region84: #{convformer_block.1} parent=81 // pred_check_branch
          %380 = sbr.rel (%p378) target = $region86
        $region85: #{convformer_block.1} parent=81 // pred_region
          _
        $region86: #{convformer_block.1} parent=81 // pred_fallthru
          _
        %s381 = sand.u32 %s43, 1
        %s382 = sand.u32 %s43, 1
        %s383 = smul.addr %s382, 128
        %s384 = scalar_lea.vmem [#allocation3], %s383
        %p385 = pneg %p56
        %p386 = pneg %p53
        %p387 = scmp.lt.s32.totalorder %s25, 1
        %s388 = scalar_select %p387, %s25, 1
        %p389 = scmp.lt.s32.totalorder %s26, 1
        %s390 = scalar_select %p389, %s26, 1
        %s391 = smul.addr %s390, 16
        %s392 = smul.addr %s388, 32
        %s393 = sadd.s32 %s391, %s392
        %s394 = smul.addr %s393, 8
        %s395 = scalar_lea.vmem %s1, %s394
        %p396 = pneg %p84
        %p397 = pneg %p81
        %p398 = pneg %p105
        %p399 = pneg %p102
        %p400 = pneg %p126
        %p401 = pneg %p123
        %p402 = pneg %p147
        %p403 = pneg %p144
        %p404 = pneg %p168
        %p405 = pneg %p165
        %p406 = pneg %p189
        %p407 = pneg %p186
        %p408 = pneg %p217
        %p409 = pneg %p214
        %s410 = sand.u32 %s204, 1
        %s411 = scalar_lea.sflag [#allocation5], %s410
        %s412 = sand.u32 %s204, 1
        %s413 = smul.addr %s412, 128
        %s414 = scalar_lea.vmem [#allocation4], %s413
        %p415 = scmp.lt.s32.totalorder %s25, 1
        %s416 = scalar_select %p415, %s25, 1
        %p417 = scmp.lt.s32.totalorder %s26, 1
        %s418 = scalar_select %p417, %s26, 1
        %s419 = smul.addr %s418, 16
        %s420 = smul.addr %s416, 32
        %s421 = sadd.s32 %s419, %s420
        %s422 = smul.addr %s421, 8
        %s423 = scalar_lea.vmem %s1, %s422
        %v424 = vld [vmem:[%s377] sm:$0xff]
        %v425 = vld [vmem:[%s377 + $0x8] sm:$0xff]
        %v426 = vld [vmem:[%s377 + $0x10] sm:$0xff]
        %v427 = vld [vmem:[%s377 + $0x18] sm:$0xff]
        %v428 = vld [vmem:[%s377 + $0x20] sm:$0xff]
        %v429 = vld [vmem:[%s377 + $0x28] sm:$0xff]
        %v430 = vld [vmem:[%s377 + $0x30] sm:$0xff]
        %v431 = vld [vmem:[%s377 + $0x38] sm:$0xff]
        %v432 = vld [vmem:[%s377 + $0x40] sm:$0xff]
        %v433 = vld [vmem:[%s377 + $0x48] sm:$0xff]
        %v434 = vld [vmem:[%s377 + $0x50] sm:$0xff]
        %v435 = vld [vmem:[%s377 + $0x58] sm:$0xff]
        %v436 = vld [vmem:[%s377 + $0x60] sm:$0xff]
        %v437 = vld [vmem:[%s377 + $0x68] sm:$0xff]
        %v438 = vld [vmem:[%s377 + $0x70] sm:$0xff]
        %v439 = vld [vmem:[%s377 + $0x78] sm:$0xff]
        %v440 = vld [vmem:[%s2] sm:$0xff]
        %v441 = vld [vmem:[%s2 + $0x8] sm:$0xff]
        %v442 = vld [vmem:[%s2 + $0x10] sm:$0xff]
        %v443 = vld [vmem:[%s2 + $0x18] sm:$0xff]
        %v444 = vld [vmem:[%s2 + $0x20] sm:$0xff]
        %v445 = vld [vmem:[%s2 + $0x28] sm:$0xff]
        %v446 = vld [vmem:[%s2 + $0x30] sm:$0xff]
        %v447 = vld [vmem:[%s2 + $0x38] sm:$0xff]
        %v448 = vld [vmem:[%s2 + $0x40] sm:$0xff]
        %v449 = vld [vmem:[%s2 + $0x48] sm:$0xff]
        %v450 = vld [vmem:[%s2 + $0x50] sm:$0xff]
        %v451 = vld [vmem:[%s2 + $0x58] sm:$0xff]
        %v452 = vld [vmem:[%s2 + $0x60] sm:$0xff]
        %v453 = vld [vmem:[%s2 + $0x68] sm:$0xff]
        %v454 = vld [vmem:[%s2 + $0x70] sm:$0xff]
        %v455 = vld [vmem:[%s2 + $0x78] sm:$0xff]
        %v456 = vadd.f32 %v424, %v425
        %v457 = vadd.f32 %v456, %v426
        %v458 = vadd.f32 %v457, %v427
        %v459 = vadd.f32 %v458, %v428
        %v460 = vadd.f32 %v459, %v429
        %v461 = vadd.f32 %v460, %v430
        %v462 = vadd.f32 %v461, %v431
        %v463 = vadd.f32 %v462, %v432
        %v464 = vadd.f32 %v463, %v433
        %v465 = vadd.f32 %v464, %v434
        %v466 = vadd.f32 %v465, %v435
        %v467 = vadd.f32 %v466, %v436
        %v468 = vadd.f32 %v467, %v437
        %v469 = vadd.f32 %v468, %v438
        %v470 = vadd.f32 %v469, %v439
        %v471 = vrot.slane %v470, 4
        %v472 = vadd.f32 %v470, %v471
        %v473 = vrot.slane %v472, 2
        %v474 = vadd.f32 %v472, %v473
        %v475 = vrot.slane %v474, 1
        %v476 = vadd.f32 %v474, %v475
        %v477 = vrcp.pop 128.0
        %v478 = vmul.f32 128.0, %v477
        %v479 = vsub.f32 1.0, %v478
        %v480 = vmul.f32 %v477, %v479
        %v481 = vadd.f32 %v477, %v480
        %vm482 = vweird.f32 %v477
        %v483 = vsel %vm482, %v477, %v481
        %v484 = vmul.f32 %v476, %v483
        %v485 = vmul.f32 %v424, %v424
        %v486 = vmul.f32 %v425, %v425
        %v487 = vmul.f32 %v426, %v426
        %v488 = vmul.f32 %v427, %v427
        %v489 = vmul.f32 %v428, %v428
        %v490 = vmul.f32 %v429, %v429
        %v491 = vmul.f32 %v430, %v430
        %v492 = vmul.f32 %v431, %v431
        %v493 = vmul.f32 %v432, %v432
        %v494 = vmul.f32 %v433, %v433
        %v495 = vmul.f32 %v434, %v434
        %v496 = vmul.f32 %v435, %v435
        %v497 = vmul.f32 %v436, %v436
        %v498 = vmul.f32 %v437, %v437
        %v499 = vmul.f32 %v438, %v438
        %v500 = vmul.f32 %v439, %v439
        %v501 = vadd.f32 %v485, %v486
        %v502 = vadd.f32 %v501, %v487
        %v503 = vadd.f32 %v502, %v488
        %v504 = vadd.f32 %v503, %v489
        %v505 = vadd.f32 %v504, %v490
        %v506 = vadd.f32 %v505, %v491
        %v507 = vadd.f32 %v506, %v492
        %v508 = vadd.f32 %v507, %v493
        %v509 = vadd.f32 %v508, %v494
        %v510 = vadd.f32 %v509, %v495
        %v511 = vadd.f32 %v510, %v496
        %v512 = vadd.f32 %v511, %v497
        %v513 = vadd.f32 %v512, %v498
        %v514 = vadd.f32 %v513, %v499
        %v515 = vadd.f32 %v514, %v500
        %v516 = vrot.slane %v515, 4
        %v517 = vadd.f32 %v515, %v516
        %v518 = vrot.slane %v517, 2
        %v519 = vadd.f32 %v517, %v518
        %v520 = vrot.slane %v519, 1
        %v521 = vadd.f32 %v519, %v520
        %v522 = vmul.f32 %v521, %v483
        %v523 = vmul.f32 %v484, %v484
        %v524 = vsub.f32 %v522, %v523
        %v525 = vmax.f32 %v524, 0.0
        %v526 = vsub.f32 %v424, %v484
        %v527 = vsub.f32 %v425, %v484
        %v528 = vsub.f32 %v426, %v484
        %v529 = vsub.f32 %v427, %v484
        %v530 = vsub.f32 %v428, %v484
        %v531 = vsub.f32 %v429, %v484
        %v532 = vsub.f32 %v430, %v484
        %v533 = vsub.f32 %v431, %v484
        %v534 = vsub.f32 %v432, %v484
        %v535 = vsub.f32 %v433, %v484
        %v536 = vsub.f32 %v434, %v484
        %v537 = vsub.f32 %v435, %v484
        %v538 = vsub.f32 %v436, %v484
        %v539 = vsub.f32 %v437, %v484
        %v540 = vsub.f32 %v438, %v484
        %v541 = vsub.f32 %v439, %v484
        %v542 = vadd.f32 %v525, 1e-06
        %v543 = vrsqrt.pop %v542
        %v544 = vmul.f32 %v543, %v542
        %v545 = vmul.f32 %v544, %v543
        %v546 = vmul.f32 0.5, %v545
        %v547 = vsub.f32 1.5, %v546
        %v548 = vmul.f32 %v543, %v547
        %vm549 = vweird.f32 %v542
        %vm550 = vweird.f32 %v543
        %vm551 = vmor %vm549, %vm550
        %v552 = vsel %vm551, %v543, %v548
        %v553 = vmul.f32 %v526, %v552
        %v554 = vmul.f32 %v527, %v552
        %v555 = vmul.f32 %v528, %v552
        %v556 = vmul.f32 %v529, %v552
        %v557 = vmul.f32 %v530, %v552
        %v558 = vmul.f32 %v531, %v552
        %v559 = vmul.f32 %v532, %v552
        %v560 = vmul.f32 %v533, %v552
        %v561 = vmul.f32 %v534, %v552
        %v562 = vmul.f32 %v535, %v552
        %v563 = vmul.f32 %v536, %v552
        %v564 = vmul.f32 %v537, %v552
        %v565 = vmul.f32 %v538, %v552
        %v566 = vmul.f32 %v539, %v552
        %v567 = vmul.f32 %v540, %v552
        %v568 = vmul.f32 %v541, %v552
        %570 = vset.pattern.permute.xlu0 0
        %571 = vperm.xlu0 %570, %v440
        %v572 = vpop.permute.xlu0 %571
        %575 = vset.pattern.permute.xlu0 0
        %576 = vperm.xlu0 %575, %v441
        %v577 = vpop.permute.xlu0 %576
        %580 = vset.pattern.permute.xlu0 0
        %581 = vperm.xlu0 %580, %v442
        %v582 = vpop.permute.xlu0 %581
        %585 = vset.pattern.permute.xlu0 0
        %586 = vperm.xlu0 %585, %v443
        %v587 = vpop.permute.xlu0 %586
        %590 = vset.pattern.permute.xlu0 0
        %591 = vperm.xlu0 %590, %v444
        %v592 = vpop.permute.xlu0 %591
        %595 = vset.pattern.permute.xlu0 0
        %596 = vperm.xlu0 %595, %v445
        %v597 = vpop.permute.xlu0 %596
        %600 = vset.pattern.permute.xlu0 0
        %601 = vperm.xlu0 %600, %v446
        %v602 = vpop.permute.xlu0 %601
        %605 = vset.pattern.permute.xlu0 0
        %606 = vperm.xlu0 %605, %v447
        %v607 = vpop.permute.xlu0 %606
        %610 = vset.pattern.permute.xlu0 0
        %611 = vperm.xlu0 %610, %v448
        %v612 = vpop.permute.xlu0 %611
        %615 = vset.pattern.permute.xlu0 0
        %616 = vperm.xlu0 %615, %v449
        %v617 = vpop.permute.xlu0 %616
        %620 = vset.pattern.permute.xlu0 0
        %621 = vperm.xlu0 %620, %v450
        %v622 = vpop.permute.xlu0 %621
        %625 = vset.pattern.permute.xlu0 0
        %626 = vperm.xlu0 %625, %v451
        %v627 = vpop.permute.xlu0 %626
        %630 = vset.pattern.permute.xlu0 0
        %631 = vperm.xlu0 %630, %v452
        %v632 = vpop.permute.xlu0 %631
        %635 = vset.pattern.permute.xlu0 0
        %636 = vperm.xlu0 %635, %v453
        %v637 = vpop.permute.xlu0 %636
        %640 = vset.pattern.permute.xlu0 0
        %641 = vperm.xlu0 %640, %v454
        %v642 = vpop.permute.xlu0 %641
        %645 = vset.pattern.permute.xlu0 0
        %646 = vperm.xlu0 %645, %v455
        %v647 = vpop.permute.xlu0 %646
        %v649 = vmul.f32 %v553, %v572
        %v650 = vmul.f32 %v554, %v577
        %v651 = vmul.f32 %v555, %v582
        %v652 = vmul.f32 %v556, %v587
        %v653 = vmul.f32 %v557, %v592
        %v654 = vmul.f32 %v558, %v597
        %v655 = vmul.f32 %v559, %v602
        %v656 = vmul.f32 %v560, %v607
        %v657 = vmul.f32 %v561, %v612
        %v658 = vmul.f32 %v562, %v617
        %v659 = vmul.f32 %v563, %v622
        %v660 = vmul.f32 %v564, %v627
        %v661 = vmul.f32 %v565, %v632
        %v662 = vmul.f32 %v566, %v637
        %v663 = vmul.f32 %v567, %v642
        %v664 = vmul.f32 %v568, %v647
        %665 = vset.pattern.permute.xlu0 1
        %666 = vperm.xlu0 %665, %v440
        %v667 = vpop.permute.xlu0 %666
        %669 = vset.pattern.permute.xlu0 1
        %670 = vperm.xlu0 %669, %v441
        %v671 = vpop.permute.xlu0 %670
        %673 = vset.pattern.permute.xlu0 1
        %674 = vperm.xlu0 %673, %v442
        %v675 = vpop.permute.xlu0 %674
        %677 = vset.pattern.permute.xlu0 1
        %678 = vperm.xlu0 %677, %v443
        %v679 = vpop.permute.xlu0 %678
        %681 = vset.pattern.permute.xlu0 1
        %682 = vperm.xlu0 %681, %v444
        %v683 = vpop.permute.xlu0 %682
        %685 = vset.pattern.permute.xlu0 1
        %686 = vperm.xlu0 %685, %v445
        %v687 = vpop.permute.xlu0 %686
        %689 = vset.pattern.permute.xlu0 1
        %690 = vperm.xlu0 %689, %v446
        %v691 = vpop.permute.xlu0 %690
        %693 = vset.pattern.permute.xlu0 1
        %694 = vperm.xlu0 %693, %v447
        %v695 = vpop.permute.xlu0 %694
        %697 = vset.pattern.permute.xlu0 1
        %698 = vperm.xlu0 %697, %v448
        %v699 = vpop.permute.xlu0 %698
        %701 = vset.pattern.permute.xlu0 1
        %702 = vperm.xlu0 %701, %v449
        %v703 = vpop.permute.xlu0 %702
        %705 = vset.pattern.permute.xlu0 1
        %706 = vperm.xlu0 %705, %v450
        %v707 = vpop.permute.xlu0 %706
        %709 = vset.pattern.permute.xlu0 1
        %710 = vperm.xlu0 %709, %v451
        %v711 = vpop.permute.xlu0 %710
        %713 = vset.pattern.permute.xlu0 1
        %714 = vperm.xlu0 %713, %v452
        %v715 = vpop.permute.xlu0 %714
        %717 = vset.pattern.permute.xlu0 1
        %718 = vperm.xlu0 %717, %v453
        %v719 = vpop.permute.xlu0 %718
        %721 = vset.pattern.permute.xlu0 1
        %722 = vperm.xlu0 %721, %v454
        %v723 = vpop.permute.xlu0 %722
        %725 = vset.pattern.permute.xlu0 1
        %726 = vperm.xlu0 %725, %v455
        %v727 = vpop.permute.xlu0 %726
        %v729 = vadd.f32 %v649, %v667
        %v730 = vadd.f32 %v650, %v671
        %v731 = vadd.f32 %v651, %v675
        %v732 = vadd.f32 %v652, %v679
        %v733 = vadd.f32 %v653, %v683
        %v734 = vadd.f32 %v654, %v687
        %v735 = vadd.f32 %v655, %v691
        %v736 = vadd.f32 %v656, %v695
        %v737 = vadd.f32 %v657, %v699
        %v738 = vadd.f32 %v658, %v703
        %v739 = vadd.f32 %v659, %v707
        %v740 = vadd.f32 %v660, %v711
        %v741 = vadd.f32 %v661, %v715
        %v742 = vadd.f32 %v662, %v719
        %v743 = vadd.f32 %v663, %v723
        %v744 = vadd.f32 %v664, %v727
        %v745 = vld [vmem:[%s423] sm:$0xff]
        %v746 = vld [vmem:[%s423 + $0x8] sm:$0xff]
        %v747 = vld [vmem:[%s423 + $0x10] sm:$0xff]
        %v748 = vld [vmem:[%s423 + $0x18] sm:$0xff]
        %v749 = vld [vmem:[%s423 + $0x20] sm:$0xff]
        %v750 = vld [vmem:[%s423 + $0x28] sm:$0xff]
        %v751 = vld [vmem:[%s423 + $0x30] sm:$0xff]
        %v752 = vld [vmem:[%s423 + $0x38] sm:$0xff]
        %v753 = vld [vmem:[%s423 + $0x40] sm:$0xff]
        %v754 = vld [vmem:[%s423 + $0x48] sm:$0xff]
        %v755 = vld [vmem:[%s423 + $0x50] sm:$0xff]
        %v756 = vld [vmem:[%s423 + $0x58] sm:$0xff]
        %v757 = vld [vmem:[%s423 + $0x60] sm:$0xff]
        %v758 = vld [vmem:[%s423 + $0x68] sm:$0xff]
        %v759 = vld [vmem:[%s423 + $0x70] sm:$0xff]
        %v760 = vld [vmem:[%s423 + $0x78] sm:$0xff]
        %vm761 = vcmask 15360
        %v762 = vsel %vm761, %v745, 0.0
        %v763 = vsel %vm761, %v746, 0.0
        %v764 = vadd.f32 %v762, %v763
        %v765 = vsel %vm761, %v747, 0.0
        %v766 = vadd.f32 %v764, %v765
        %v767 = vsel %vm761, %v748, 0.0
        %v768 = vadd.f32 %v766, %v767
        %v769 = vsel %vm761, %v749, 0.0
        %v770 = vadd.f32 %v768, %v769
        %v771 = vsel %vm761, %v750, 0.0
        %v772 = vadd.f32 %v770, %v771
        %v773 = vsel %vm761, %v751, 0.0
        %v774 = vadd.f32 %v772, %v773
        %v775 = vsel %vm761, %v752, 0.0
        %v776 = vadd.f32 %v774, %v775
        %v777 = vsel %vm761, %v753, 0.0
        %v778 = vadd.f32 %v776, %v777
        %v779 = vsel %vm761, %v754, 0.0
        %v780 = vadd.f32 %v778, %v779
        %v781 = vsel %vm761, %v755, 0.0
        %v782 = vadd.f32 %v780, %v781
        %v783 = vsel %vm761, %v756, 0.0
        %v784 = vadd.f32 %v782, %v783
        %v785 = vsel %vm761, %v757, 0.0
        %v786 = vadd.f32 %v784, %v785
        %v787 = vsel %vm761, %v758, 0.0
        %v788 = vadd.f32 %v786, %v787
        %v789 = vsel %vm761, %v759, 0.0
        %v790 = vadd.f32 %v788, %v789
        %v791 = vsel %vm761, %v760, 0.0
        %v792 = vadd.f32 %v790, %v791
        %v793 = vrot.slane %v792, 4
        %v794 = vadd.f32 %v792, %v793
        %v795 = vrot.slane %v794, 2
        %v796 = vadd.f32 %v794, %v795
        %v797 = vrot.slane %v796, 1
        %v798 = vadd.f32 %v796, %v797
        %v799 = vmul.f32 %v798, %v483
        %v800 = vmul.f32 %v745, %v745
        %v801 = vmul.f32 %v746, %v746
        %v802 = vmul.f32 %v747, %v747
        %v803 = vmul.f32 %v748, %v748
        %v804 = vmul.f32 %v749, %v749
        %v805 = vmul.f32 %v750, %v750
        %v806 = vmul.f32 %v751, %v751
        %v807 = vmul.f32 %v752, %v752
        %v808 = vmul.f32 %v753, %v753
        %v809 = vmul.f32 %v754, %v754
        %v810 = vmul.f32 %v755, %v755
        %v811 = vmul.f32 %v756, %v756
        %v812 = vmul.f32 %v757, %v757
        %v813 = vmul.f32 %v758, %v758
        %v814 = vmul.f32 %v759, %v759
        %v815 = vmul.f32 %v760, %v760
        %v816 = vsel %vm761, %v800, 0.0
        %v817 = vsel %vm761, %v801, 0.0
        %v818 = vadd.f32 %v816, %v817
        %v819 = vsel %vm761, %v802, 0.0
        %v820 = vadd.f32 %v818, %v819
        %v821 = vsel %vm761, %v803, 0.0
        %v822 = vadd.f32 %v820, %v821
        %v823 = vsel %vm761, %v804, 0.0
        %v824 = vadd.f32 %v822, %v823
        %v825 = vsel %vm761, %v805, 0.0
        %v826 = vadd.f32 %v824, %v825
        %v827 = vsel %vm761, %v806, 0.0
        %v828 = vadd.f32 %v826, %v827
        %v829 = vsel %vm761, %v807, 0.0
        %v830 = vadd.f32 %v828, %v829
        %v831 = vsel %vm761, %v808, 0.0
        %v832 = vadd.f32 %v830, %v831
        %v833 = vsel %vm761, %v809, 0.0
        %v834 = vadd.f32 %v832, %v833
        %v835 = vsel %vm761, %v810, 0.0
        %v836 = vadd.f32 %v834, %v835
        %v837 = vsel %vm761, %v811, 0.0
        %v838 = vadd.f32 %v836, %v837
        %v839 = vsel %vm761, %v812, 0.0
        %v840 = vadd.f32 %v838, %v839
        %v841 = vsel %vm761, %v813, 0.0
        %v842 = vadd.f32 %v840, %v841
        %v843 = vsel %vm761, %v814, 0.0
        %v844 = vadd.f32 %v842, %v843
        %v845 = vsel %vm761, %v815, 0.0
        %v846 = vadd.f32 %v844, %v845
        %v847 = vrot.slane %v846, 4
        %v848 = vadd.f32 %v846, %v847
        %v849 = vrot.slane %v848, 2
        %v850 = vadd.f32 %v848, %v849
        %v851 = vrot.slane %v850, 1
        %v852 = vadd.f32 %v850, %v851
        %v853 = vmul.f32 %v852, %v483
        %v854 = vmul.f32 %v799, %v799
        %v855 = vsub.f32 %v853, %v854
        %v856 = vmax.f32 %v855, 0.0
        %v857 = vsub.f32 %v745, %v799
        %v858 = vsub.f32 %v746, %v799
        %v859 = vsub.f32 %v747, %v799
        %v860 = vsub.f32 %v748, %v799
        %v861 = vsub.f32 %v749, %v799
        %v862 = vsub.f32 %v750, %v799
        %v863 = vsub.f32 %v751, %v799
        %v864 = vsub.f32 %v752, %v799
        %v865 = vsub.f32 %v753, %v799
        %v866 = vsub.f32 %v754, %v799
        %v867 = vsub.f32 %v755, %v799
        %v868 = vsub.f32 %v756, %v799
        %v869 = vsub.f32 %v757, %v799
        %v870 = vsub.f32 %v758, %v799
        %v871 = vsub.f32 %v759, %v799
        %v872 = vsub.f32 %v760, %v799
        %v873 = vadd.f32 %v856, 1e-06
        %v874 = vrsqrt.pop %v873
        %v875 = vmul.f32 %v874, %v873
        %v876 = vmul.f32 %v875, %v874
        %v877 = vmul.f32 0.5, %v876
        %v878 = vsub.f32 1.5, %v877
        %v879 = vmul.f32 %v874, %v878
        %vm880 = vweird.f32 %v873
        %vm881 = vweird.f32 %v874
        %vm882 = vmor %vm880, %vm881
        %v883 = vsel %vm882, %v874, %v879
        %v884 = vmul.f32 %v857, %v883
        %v885 = vmul.f32 %v858, %v883
        %v886 = vmul.f32 %v859, %v883
        %v887 = vmul.f32 %v860, %v883
        %v888 = vmul.f32 %v861, %v883
        %v889 = vmul.f32 %v862, %v883
        %v890 = vmul.f32 %v863, %v883
        %v891 = vmul.f32 %v864, %v883
        %v892 = vmul.f32 %v865, %v883
        %v893 = vmul.f32 %v866, %v883
        %v894 = vmul.f32 %v867, %v883
        %v895 = vmul.f32 %v868, %v883
        %v896 = vmul.f32 %v869, %v883
        %v897 = vmul.f32 %v870, %v883
        %v898 = vmul.f32 %v871, %v883
        %v899 = vmul.f32 %v872, %v883
        %v900 = vmul.f32 %v884, %v572
        %v901 = vmul.f32 %v885, %v577
        %v902 = vmul.f32 %v886, %v582
        %v903 = vmul.f32 %v887, %v587
        %v904 = vmul.f32 %v888, %v592
        %v905 = vmul.f32 %v889, %v597
        %v906 = vmul.f32 %v890, %v602
        %v907 = vmul.f32 %v891, %v607
        %v908 = vmul.f32 %v892, %v612
        %v909 = vmul.f32 %v893, %v617
        %v910 = vmul.f32 %v894, %v622
        %v911 = vmul.f32 %v895, %v627
        %v912 = vmul.f32 %v896, %v632
        %v913 = vmul.f32 %v897, %v637
        %v914 = vmul.f32 %v898, %v642
        %v915 = vmul.f32 %v899, %v647
        %v916 = vadd.f32 %v900, %v667
        %v917 = vadd.f32 %v901, %v671
        %v918 = vadd.f32 %v902, %v675
        %v919 = vadd.f32 %v903, %v679
        %v920 = vadd.f32 %v904, %v683
        %v921 = vadd.f32 %v905, %v687
        %v922 = vadd.f32 %v906, %v691
        %v923 = vadd.f32 %v907, %v695
        %v924 = vadd.f32 %v908, %v699
        %v925 = vadd.f32 %v909, %v703
        %v926 = vadd.f32 %v910, %v707
        %v927 = vadd.f32 %v911, %v711
        %v928 = vadd.f32 %v912, %v715
        %v929 = vadd.f32 %v913, %v719
        %v930 = vadd.f32 %v914, %v723
        %v931 = vadd.f32 %v915, %v727
        %p932 = scmp.gt.s32.totalorder %s26, 0
        %s933 = scalar_select %p932, 1, 0
        %s934 = scvt.s32.f32 %s933
        %v935 = vstv %s934
        %v936 = vmul.f32 %v916, %v935
        %v937 = vmul.f32 %v917, %v935
        %v938 = vmul.f32 %v918, %v935
        %v939 = vmul.f32 %v919, %v935
        %v940 = vmul.f32 %v920, %v935
        %v941 = vmul.f32 %v921, %v935
        %v942 = vmul.f32 %v922, %v935
        %v943 = vmul.f32 %v923, %v935
        %v944 = vmul.f32 %v924, %v935
        %v945 = vmul.f32 %v925, %v935
        %v946 = vmul.f32 %v926, %v935
        %v947 = vmul.f32 %v927, %v935
        %v948 = vmul.f32 %v928, %v935
        %v949 = vmul.f32 %v929, %v935
        %v950 = vmul.f32 %v930, %v935
        %v951 = vmul.f32 %v931, %v935
        %p952 = scmp.lt.s32.totalorder %s26, 1
        %s953 = scalar_select %p952, 1, 0
        %s954 = scvt.s32.f32 %s953
        %v955 = vstv %s954
        %v956 = vmul.f32 %v916, %v955
        %v957 = vmul.f32 %v917, %v955
        %v958 = vmul.f32 %v918, %v955
        %v959 = vmul.f32 %v919, %v955
        %v960 = vmul.f32 %v920, %v955
        %v961 = vmul.f32 %v921, %v955
        %v962 = vmul.f32 %v922, %v955
        %v963 = vmul.f32 %v923, %v955
        %v964 = vmul.f32 %v924, %v955
        %v965 = vmul.f32 %v925, %v955
        %v966 = vmul.f32 %v926, %v955
        %v967 = vmul.f32 %v927, %v955
        %v968 = vmul.f32 %v928, %v955
        %v969 = vmul.f32 %v929, %v955
        %v970 = vmul.f32 %v930, %v955
        %v971 = vmul.f32 %v931, %v955
        %v972 = vpack.c.bf16 %v730, %v729
        %v973 = vpack.c.bf16 %v732, %v731
        %v974 = vpack.c.bf16 %v734, %v733
        %v975 = vpack.c.bf16 %v736, %v735
        %v976 = vpack.c.bf16 %v738, %v737
        %v977 = vpack.c.bf16 %v740, %v739
        %v978 = vpack.c.bf16 %v742, %v741
        %v979 = vpack.c.bf16 %v744, %v743
        %s980 = scalar_lea.vmem %s3, 64
        %v981 = vld [vmem:[%s980] sm:$0xf]
        %v982 = vld [vmem:[%s980 + $0x4] sm:$0xf]
        %v983 = vld [vmem:[%s980 + $0x8] sm:$0xf]
        %v984 = vld [vmem:[%s980 + $0xc] sm:$0xf]
        %v985 = vld [vmem:[%s980 + $0x10] sm:$0xf]
        %v986 = vld [vmem:[%s980 + $0x14] sm:$0xf]
        %v987 = vld [vmem:[%s980 + $0x18] sm:$0xf]
        %v988 = vld [vmem:[%s980 + $0x1c] sm:$0xf]
        %v989 = vld [vmem:[%s980 + $0x20] sm:$0xf]
        %v990 = vld [vmem:[%s980 + $0x24] sm:$0xf]
        %v991 = vld [vmem:[%s980 + $0x28] sm:$0xf]
        %v992 = vld [vmem:[%s980 + $0x2c] sm:$0xf]
        %v993 = vld [vmem:[%s980 + $0x30] sm:$0xf]
        %v994 = vld [vmem:[%s980 + $0x34] sm:$0xf]
        %v995 = vld [vmem:[%s980 + $0x38] sm:$0xf]
        %v996 = vld [vmem:[%s980 + $0x3c] sm:$0xf]
        %997 = vrot.lane.b32.xlu0 %v729, 1
        %v998 = vpop.permute.xlu0 %997
        %999 = vrot.lane.b32.xlu0 %v730, 1
        %v1000 = vpop.permute.xlu0 %999
        %1001 = vrot.lane.b32.xlu0 %v731, 1
        %v1002 = vpop.permute.xlu0 %1001
        %1003 = vrot.lane.b32.xlu0 %v732, 1
        %v1004 = vpop.permute.xlu0 %1003
        %1005 = vrot.lane.b32.xlu0 %v733, 1
        %v1006 = vpop.permute.xlu0 %1005
        %1007 = vrot.lane.b32.xlu0 %v734, 1
        %v1008 = vpop.permute.xlu0 %1007
        %1009 = vrot.lane.b32.xlu0 %v735, 1
        %v1010 = vpop.permute.xlu0 %1009
        %1011 = vrot.lane.b32.xlu0 %v736, 1
        %v1012 = vpop.permute.xlu0 %1011
        %1013 = vrot.lane.b32.xlu0 %v737, 1
        %v1014 = vpop.permute.xlu0 %1013
        %1015 = vrot.lane.b32.xlu0 %v738, 1
        %v1016 = vpop.permute.xlu0 %1015
        %1017 = vrot.lane.b32.xlu0 %v739, 1
        %v1018 = vpop.permute.xlu0 %1017
        %1019 = vrot.lane.b32.xlu0 %v740, 1
        %v1020 = vpop.permute.xlu0 %1019
        %1021 = vrot.lane.b32.xlu0 %v741, 1
        %v1022 = vpop.permute.xlu0 %1021
        %1023 = vrot.lane.b32.xlu0 %v742, 1
        %v1024 = vpop.permute.xlu0 %1023
        %1025 = vrot.lane.b32.xlu0 %v743, 1
        %v1026 = vpop.permute.xlu0 %1025
        %1027 = vrot.lane.b32.xlu0 %v744, 1
        %v1028 = vpop.permute.xlu0 %1027
        %v1029 = vpack.c.bf16 %v998, %v998
        %v1030 = vpack.c.bf16 %v1000, %v1000
        %v1031 = vpack.c.bf16 %v1002, %v1002
        %v1032 = vpack.c.bf16 %v1004, %v1004
        %v1033 = vpack.c.bf16 %v1006, %v1006
        %v1034 = vpack.c.bf16 %v1008, %v1008
        %v1035 = vpack.c.bf16 %v1010, %v1010
        %v1036 = vpack.c.bf16 %v1012, %v1012
        %v1037 = vpack.c.bf16 %v1014, %v1014
        %v1038 = vpack.c.bf16 %v1016, %v1016
        %v1039 = vpack.c.bf16 %v1018, %v1018
        %v1040 = vpack.c.bf16 %v1020, %v1020
        %v1041 = vpack.c.bf16 %v1022, %v1022
        %v1042 = vpack.c.bf16 %v1024, %v1024
        %v1043 = vpack.c.bf16 %v1026, %v1026
        %v1044 = vpack.c.bf16 %v1028, %v1028
        %1045 = vst [vmem:[#allocation2] sm:$0xf] %v1029
        %1046 = vst [vmem:[#allocation2 + $0x4] sm:$0xf] %v1030
        %1047 = vst [vmem:[#allocation2 + $0x8] sm:$0xf] %v1031
        %1048 = vst [vmem:[#allocation2 + $0xc] sm:$0xf] %v1032
        %1049 = vst [vmem:[#allocation2 + $0x10] sm:$0xf] %v1033
        %1050 = vst [vmem:[#allocation2 + $0x14] sm:$0xf] %v1034
        %1051 = vst [vmem:[#allocation2 + $0x18] sm:$0xf] %v1035
        %1052 = vst [vmem:[#allocation2 + $0x1c] sm:$0xf] %v1036
        %1053 = vst [vmem:[#allocation2 + $0x20] sm:$0xf] %v1037
        %1054 = vst [vmem:[#allocation2 + $0x24] sm:$0xf] %v1038
        %1055 = vst [vmem:[#allocation2 + $0x28] sm:$0xf] %v1039
        %1056 = vst [vmem:[#allocation2 + $0x2c] sm:$0xf] %v1040
        %1057 = vst [vmem:[#allocation2 + $0x30] sm:$0xf] %v1041
        %1058 = vst [vmem:[#allocation2 + $0x34] sm:$0xf] %v1042
        %1059 = vst [vmem:[#allocation2 + $0x38] sm:$0xf] %v1043
        %1060 = vst [vmem:[#allocation2 + $0x3c] sm:$0xf] %v1044
        %v1061 = vpack.c.bf16 %v936, %v936
        %v1062 = vpack.c.bf16 %v937, %v937
        %v1063 = vpack.c.bf16 %v938, %v938
        %v1064 = vpack.c.bf16 %v939, %v939
        %v1065 = vpack.c.bf16 %v940, %v940
        %v1066 = vpack.c.bf16 %v941, %v941
        %v1067 = vpack.c.bf16 %v942, %v942
        %v1068 = vpack.c.bf16 %v943, %v943
        %v1069 = vpack.c.bf16 %v944, %v944
        %v1070 = vpack.c.bf16 %v945, %v945
        %v1071 = vpack.c.bf16 %v946, %v946
        %v1072 = vpack.c.bf16 %v947, %v947
        %v1073 = vpack.c.bf16 %v948, %v948
        %v1074 = vpack.c.bf16 %v949, %v949
        %v1075 = vpack.c.bf16 %v950, %v950
        %v1076 = vpack.c.bf16 %v951, %v951
        %vm1077 = vcmask 3072
        %1078 = vst.msk [vmem:[#allocation2] sm:$0xf] %vm1077, %v1061
        %1079 = vst.msk [vmem:[#allocation2 + $0x4] sm:$0xf] %vm1077, %v1062
        %1080 = vst.msk [vmem:[#allocation2 + $0x8] sm:$0xf] %vm1077, %v1063
        %1081 = vst.msk [vmem:[#allocation2 + $0xc] sm:$0xf] %vm1077, %v1064
        %1082 = vst.msk [vmem:[#allocation2 + $0x10] sm:$0xf] %vm1077, %v1065
        %1083 = vst.msk [vmem:[#allocation2 + $0x14] sm:$0xf] %vm1077, %v1066
        %1084 = vst.msk [vmem:[#allocation2 + $0x18] sm:$0xf] %vm1077, %v1067
        %1085 = vst.msk [vmem:[#allocation2 + $0x1c] sm:$0xf] %vm1077, %v1068
        %1086 = vst.msk [vmem:[#allocation2 + $0x20] sm:$0xf] %vm1077, %v1069
        %1087 = vst.msk [vmem:[#allocation2 + $0x24] sm:$0xf] %vm1077, %v1070
        %1088 = vst.msk [vmem:[#allocation2 + $0x28] sm:$0xf] %vm1077, %v1071
        %1089 = vst.msk [vmem:[#allocation2 + $0x2c] sm:$0xf] %vm1077, %v1072
        %1090 = vst.msk [vmem:[#allocation2 + $0x30] sm:$0xf] %vm1077, %v1073
        %1091 = vst.msk [vmem:[#allocation2 + $0x34] sm:$0xf] %vm1077, %v1074
        %1092 = vst.msk [vmem:[#allocation2 + $0x38] sm:$0xf] %vm1077, %v1075
        %1093 = vst.msk [vmem:[#allocation2 + $0x3c] sm:$0xf] %vm1077, %v1076
        %v1094 = vld [vmem:[%s3] sm:$0xf]
        %v1095 = vld [vmem:[%s3 + $0x4] sm:$0xf]
        %v1096 = vld [vmem:[%s3 + $0x8] sm:$0xf]
        %v1097 = vld [vmem:[%s3 + $0xc] sm:$0xf]
        %v1098 = vld [vmem:[%s3 + $0x10] sm:$0xf]
        %v1099 = vld [vmem:[%s3 + $0x14] sm:$0xf]
        %v1100 = vld [vmem:[%s3 + $0x18] sm:$0xf]
        %v1101 = vld [vmem:[%s3 + $0x1c] sm:$0xf]
        %v1102 = vld [vmem:[%s3 + $0x20] sm:$0xf]
        %v1103 = vld [vmem:[%s3 + $0x24] sm:$0xf]
        %v1104 = vld [vmem:[%s3 + $0x28] sm:$0xf]
        %v1105 = vld [vmem:[%s3 + $0x2c] sm:$0xf]
        %v1106 = vld [vmem:[%s3 + $0x30] sm:$0xf]
        %v1107 = vld [vmem:[%s3 + $0x34] sm:$0xf]
        %v1108 = vld [vmem:[%s3 + $0x38] sm:$0xf]
        %v1109 = vld [vmem:[%s3 + $0x3c] sm:$0xf]
        %v1110 = vld [vmem:[#allocation2] sm:$0xf]
        %v1111 = vld [vmem:[#allocation2 + $0x4] sm:$0xf]
        %v1112 = vld [vmem:[#allocation2 + $0x8] sm:$0xf]
        %v1113 = vld [vmem:[#allocation2 + $0xc] sm:$0xf]
        %v1114 = vld [vmem:[#allocation2 + $0x10] sm:$0xf]
        %v1115 = vld [vmem:[#allocation2 + $0x14] sm:$0xf]
        %v1116 = vld [vmem:[#allocation2 + $0x18] sm:$0xf]
        %v1117 = vld [vmem:[#allocation2 + $0x1c] sm:$0xf]
        %v1118 = vld [vmem:[#allocation2 + $0x20] sm:$0xf]
        %v1119 = vld [vmem:[#allocation2 + $0x24] sm:$0xf]
        %v1120 = vld [vmem:[#allocation2 + $0x28] sm:$0xf]
        %v1121 = vld [vmem:[#allocation2 + $0x2c] sm:$0xf]
        %v1122 = vld [vmem:[#allocation2 + $0x30] sm:$0xf]
        %v1123 = vld [vmem:[#allocation2 + $0x34] sm:$0xf]
        %v1124 = vld [vmem:[#allocation2 + $0x38] sm:$0xf]
        %v1125 = vld [vmem:[#allocation2 + $0x3c] sm:$0xf]
        %v1142 = vunpack.c.l.b16 %v1094
        %v1143 = vunpack.c.l.b16 %v1095
        %v1144 = vunpack.c.l.b16 %v1096
        %v1145 = vunpack.c.l.b16 %v1097
        %v1146 = vunpack.c.l.b16 %v1098
        %v1147 = vunpack.c.l.b16 %v1099
        %v1148 = vunpack.c.l.b16 %v1100
        %v1149 = vunpack.c.l.b16 %v1101
        %v1150 = vunpack.c.l.b16 %v1102
        %v1151 = vunpack.c.l.b16 %v1103
        %v1152 = vunpack.c.l.b16 %v1104
        %v1153 = vunpack.c.l.b16 %v1105
        %v1154 = vunpack.c.l.b16 %v1106
        %v1155 = vunpack.c.l.b16 %v1107
        %v1156 = vunpack.c.l.b16 %v1108
        %v1157 = vunpack.c.l.b16 %v1109
        %v1158 = vpack.c.b16 %v1143, %v1142
        %v1159 = vpack.c.b16 %v1145, %v1144
        %v1160 = vpack.c.b16 %v1147, %v1146
        %v1161 = vpack.c.b16 %v1149, %v1148
        %v1162 = vpack.c.b16 %v1151, %v1150
        %v1163 = vpack.c.b16 %v1153, %v1152
        %v1164 = vpack.c.b16 %v1155, %v1154
        %v1165 = vpack.c.b16 %v1157, %v1156
        %v1190 = vunpack.c.l.b16 %v1110
        %v1191 = vunpack.c.l.b16 %v1111
        %v1192 = vunpack.c.l.b16 %v1112
        %v1193 = vunpack.c.l.b16 %v1113
        %v1194 = vunpack.c.l.b16 %v1114
        %v1195 = vunpack.c.l.b16 %v1115
        %v1196 = vunpack.c.l.b16 %v1116
        %v1197 = vunpack.c.l.b16 %v1117
        %v1198 = vunpack.c.l.b16 %v1118
        %v1199 = vunpack.c.l.b16 %v1119
        %v1200 = vunpack.c.l.b16 %v1120
        %v1201 = vunpack.c.l.b16 %v1121
        %v1202 = vunpack.c.l.b16 %v1122
        %v1203 = vunpack.c.l.b16 %v1123
        %v1204 = vunpack.c.l.b16 %v1124
        %v1205 = vunpack.c.l.b16 %v1125
        %v1206 = vpack.c.b16 %v1191, %v1190
        %v1207 = vpack.c.b16 %v1193, %v1192
        %v1208 = vpack.c.b16 %v1195, %v1194
        %v1209 = vpack.c.b16 %v1197, %v1196
        %v1210 = vpack.c.b16 %v1199, %v1198
        %v1211 = vpack.c.b16 %v1201, %v1200
        %v1212 = vpack.c.b16 %v1203, %v1202
        %v1213 = vpack.c.b16 %v1205, %v1204
        %1222 = vmatpush.bf16.msra.mxu0 %v1213
        %1223 = vmatpush.bf16.msra.mxu0 %v1212
        %1224 = vmatpush.bf16.msra.mxu0 %v1211
        %1225 = vmatpush.bf16.msra.mxu0 %v1210
        %1226 = vmatpush.bf16.msra.mxu0 %v1209
        %1227 = vmatpush.bf16.msra.mxu0 %v1208
        %1228 = vmatpush.bf16.msra.mxu0 %v1207
        %1229 = vmatpush.bf16.msra.mxu0 %v1206
        %1230 = vmatmul.bf16.gmra.mxu0 %v1158
        %v1231 = vpop.f32.mrf.mxu0
        %v1232 = vadd.f32 0.0, %v1231
        %v1233 = vpop.f32.mrf.mxu0
        %v1234 = vadd.f32 0.0, %v1233
        %1235 = vmatmul.bf16.gmra.mxu0 %v1159
        %v1236 = vpop.f32.mrf.mxu0
        %v1237 = vadd.f32 0.0, %v1236
        %v1238 = vpop.f32.mrf.mxu0
        %v1239 = vadd.f32 0.0, %v1238
        %1240 = vmatmul.bf16.gmra.mxu0 %v1160
        %v1241 = vpop.f32.mrf.mxu0
        %v1242 = vadd.f32 0.0, %v1241
        %v1243 = vpop.f32.mrf.mxu0
        %v1244 = vadd.f32 0.0, %v1243
        %1245 = vmatmul.bf16.gmra.mxu0 %v1161
        %v1246 = vpop.f32.mrf.mxu0
        %v1247 = vadd.f32 0.0, %v1246
        %v1248 = vpop.f32.mrf.mxu0
        %v1249 = vadd.f32 0.0, %v1248
        %1250 = vmatmul.bf16.gmra.mxu0 %v1162
        %v1251 = vpop.f32.mrf.mxu0
        %v1252 = vadd.f32 0.0, %v1251
        %v1253 = vpop.f32.mrf.mxu0
        %v1254 = vadd.f32 0.0, %v1253
        %1255 = vmatmul.bf16.gmra.mxu0 %v1163
        %v1256 = vpop.f32.mrf.mxu0
        %v1257 = vadd.f32 0.0, %v1256
        %v1258 = vpop.f32.mrf.mxu0
        %v1259 = vadd.f32 0.0, %v1258
        %1260 = vmatmul.bf16.gmra.mxu0 %v1164
        %v1261 = vpop.f32.mrf.mxu0
        %v1262 = vadd.f32 0.0, %v1261
        %v1263 = vpop.f32.mrf.mxu0
        %v1264 = vadd.f32 0.0, %v1263
        %1265 = vmatmul.bf16.gmra.mxu0 %v1165
        %v1266 = vpop.f32.mrf.mxu0
        %v1267 = vadd.f32 0.0, %v1266
        %v1268 = vpop.f32.mrf.mxu0
        %v1269 = vadd.f32 0.0, %v1268
        %1270 = vdwg.mxu0
        %v1287 = vunpack.c.l.b16 %v981
        %v1288 = vunpack.c.l.b16 %v982
        %v1289 = vunpack.c.l.b16 %v983
        %v1290 = vunpack.c.l.b16 %v984
        %v1291 = vunpack.c.l.b16 %v985
        %v1292 = vunpack.c.l.b16 %v986
        %v1293 = vunpack.c.l.b16 %v987
        %v1294 = vunpack.c.l.b16 %v988
        %v1295 = vunpack.c.l.b16 %v989
        %v1296 = vunpack.c.l.b16 %v990
        %v1297 = vunpack.c.l.b16 %v991
        %v1298 = vunpack.c.l.b16 %v992
        %v1299 = vunpack.c.l.b16 %v993
        %v1300 = vunpack.c.l.b16 %v994
        %v1301 = vunpack.c.l.b16 %v995
        %v1302 = vunpack.c.l.b16 %v996
        %v1303 = vpack.c.b16 %v1288, %v1287
        %v1304 = vpack.c.b16 %v1290, %v1289
        %v1305 = vpack.c.b16 %v1292, %v1291
        %v1306 = vpack.c.b16 %v1294, %v1293
        %v1307 = vpack.c.b16 %v1296, %v1295
        %v1308 = vpack.c.b16 %v1298, %v1297
        %v1309 = vpack.c.b16 %v1300, %v1299
        %v1310 = vpack.c.b16 %v1302, %v1301
        %1319 = vmatpush.bf16.msra.mxu0 %v979
        %1320 = vmatpush.bf16.msra.mxu0 %v978
        %1321 = vmatpush.bf16.msra.mxu0 %v977
        %1322 = vmatpush.bf16.msra.mxu0 %v976
        %1323 = vmatpush.bf16.msra.mxu0 %v975
        %1324 = vmatpush.bf16.msra.mxu0 %v974
        %1325 = vmatpush.bf16.msra.mxu0 %v973
        %1326 = vmatpush.bf16.msra.mxu0 %v972
        %1327 = vmatmul.bf16.gmra.mxu0 %v1303
        %v1328 = vpop.f32.mrf.mxu0
        %v1329 = vadd.f32 %v1232, %v1328
        %v1330 = vpop.f32.mrf.mxu0
        %v1331 = vadd.f32 %v1234, %v1330
        %1332 = vmatmul.bf16.gmra.mxu0 %v1304
        %v1333 = vpop.f32.mrf.mxu0
        %v1334 = vadd.f32 %v1237, %v1333
        %v1335 = vpop.f32.mrf.mxu0
        %v1336 = vadd.f32 %v1239, %v1335
        %1337 = vmatmul.bf16.gmra.mxu0 %v1305
        %v1338 = vpop.f32.mrf.mxu0
        %v1339 = vadd.f32 %v1242, %v1338
        %v1340 = vpop.f32.mrf.mxu0
        %v1341 = vadd.f32 %v1244, %v1340
        %1342 = vmatmul.bf16.gmra.mxu0 %v1306
        %v1343 = vpop.f32.mrf.mxu0
        %v1344 = vadd.f32 %v1247, %v1343
        %v1345 = vpop.f32.mrf.mxu0
        %v1346 = vadd.f32 %v1249, %v1345
        %1347 = vmatmul.bf16.gmra.mxu0 %v1307
        %v1348 = vpop.f32.mrf.mxu0
        %v1349 = vadd.f32 %v1252, %v1348
        %v1350 = vpop.f32.mrf.mxu0
        %v1351 = vadd.f32 %v1254, %v1350
        %1352 = vmatmul.bf16.gmra.mxu0 %v1308
        %v1353 = vpop.f32.mrf.mxu0
        %v1354 = vadd.f32 %v1257, %v1353
        %v1355 = vpop.f32.mrf.mxu0
        %v1356 = vadd.f32 %v1259, %v1355
        %1357 = vmatmul.bf16.gmra.mxu0 %v1309
        %v1358 = vpop.f32.mrf.mxu0
        %v1359 = vadd.f32 %v1262, %v1358
        %v1360 = vpop.f32.mrf.mxu0
        %v1361 = vadd.f32 %v1264, %v1360
        %1362 = vmatmul.bf16.gmra.mxu0 %v1310
        %v1363 = vpop.f32.mrf.mxu0
        %v1364 = vadd.f32 %v1267, %v1363
        %v1365 = vpop.f32.mrf.mxu0
        %v1366 = vadd.f32 %v1269, %v1365
        %1367 = vdwg.mxu0
        %1368 = vrot.lane.b32.xlu0 %v729, 127
        %v1369 = vpop.permute.xlu0 %1368
        %1370 = vrot.lane.b32.xlu0 %v730, 127
        %v1371 = vpop.permute.xlu0 %1370
        %1372 = vrot.lane.b32.xlu0 %v731, 127
        %v1373 = vpop.permute.xlu0 %1372
        %1374 = vrot.lane.b32.xlu0 %v732, 127
        %v1375 = vpop.permute.xlu0 %1374
        %1376 = vrot.lane.b32.xlu0 %v733, 127
        %v1377 = vpop.permute.xlu0 %1376
        %1378 = vrot.lane.b32.xlu0 %v734, 127
        %v1379 = vpop.permute.xlu0 %1378
        %1380 = vrot.lane.b32.xlu0 %v735, 127
        %v1381 = vpop.permute.xlu0 %1380
        %1382 = vrot.lane.b32.xlu0 %v736, 127
        %v1383 = vpop.permute.xlu0 %1382
        %1384 = vrot.lane.b32.xlu0 %v737, 127
        %v1385 = vpop.permute.xlu0 %1384
        %1386 = vrot.lane.b32.xlu0 %v738, 127
        %v1387 = vpop.permute.xlu0 %1386
        %1388 = vrot.lane.b32.xlu0 %v739, 127
        %v1389 = vpop.permute.xlu0 %1388
        %1390 = vrot.lane.b32.xlu0 %v740, 127
        %v1391 = vpop.permute.xlu0 %1390
        %1392 = vrot.lane.b32.xlu0 %v741, 127
        %v1393 = vpop.permute.xlu0 %1392
        %1394 = vrot.lane.b32.xlu0 %v742, 127
        %v1395 = vpop.permute.xlu0 %1394
        %1396 = vrot.lane.b32.xlu0 %v743, 127
        %v1397 = vpop.permute.xlu0 %1396
        %1398 = vrot.lane.b32.xlu0 %v744, 127
        %v1399 = vpop.permute.xlu0 %1398
        %v1400 = vpack.c.bf16 %v1369, %v1369
        %v1401 = vpack.c.bf16 %v1371, %v1371
        %v1402 = vpack.c.bf16 %v1373, %v1373
        %v1403 = vpack.c.bf16 %v1375, %v1375
        %v1404 = vpack.c.bf16 %v1377, %v1377
        %v1405 = vpack.c.bf16 %v1379, %v1379
        %v1406 = vpack.c.bf16 %v1381, %v1381
        %v1407 = vpack.c.bf16 %v1383, %v1383
        %v1408 = vpack.c.bf16 %v1385, %v1385
        %v1409 = vpack.c.bf16 %v1387, %v1387
        %v1410 = vpack.c.bf16 %v1389, %v1389
        %v1411 = vpack.c.bf16 %v1391, %v1391
        %v1412 = vpack.c.bf16 %v1393, %v1393
        %v1413 = vpack.c.bf16 %v1395, %v1395
        %v1414 = vpack.c.bf16 %v1397, %v1397
        %v1415 = vpack.c.bf16 %v1399, %v1399
        %1416 = vst [vmem:[#allocation2] sm:$0xf] %v1400
        %1417 = vst [vmem:[#allocation2 + $0x4] sm:$0xf] %v1401
        %1418 = vst [vmem:[#allocation2 + $0x8] sm:$0xf] %v1402
        %1419 = vst [vmem:[#allocation2 + $0xc] sm:$0xf] %v1403
        %1420 = vst [vmem:[#allocation2 + $0x10] sm:$0xf] %v1404
        %1421 = vst [vmem:[#allocation2 + $0x14] sm:$0xf] %v1405
        %1422 = vst [vmem:[#allocation2 + $0x18] sm:$0xf] %v1406
        %1423 = vst [vmem:[#allocation2 + $0x1c] sm:$0xf] %v1407
        %1424 = vst [vmem:[#allocation2 + $0x20] sm:$0xf] %v1408
        %1425 = vst [vmem:[#allocation2 + $0x24] sm:$0xf] %v1409
        %1426 = vst [vmem:[#allocation2 + $0x28] sm:$0xf] %v1410
        %1427 = vst [vmem:[#allocation2 + $0x2c] sm:$0xf] %v1411
        %1428 = vst [vmem:[#allocation2 + $0x30] sm:$0xf] %v1412
        %1429 = vst [vmem:[#allocation2 + $0x34] sm:$0xf] %v1413
        %1430 = vst [vmem:[#allocation2 + $0x38] sm:$0xf] %v1414
        %1431 = vst [vmem:[#allocation2 + $0x3c] sm:$0xf] %v1415
        %v1432 = vpack.c.bf16 %v956, %v956
        %v1433 = vpack.c.bf16 %v957, %v957
        %v1434 = vpack.c.bf16 %v958, %v958
        %v1435 = vpack.c.bf16 %v959, %v959
        %v1436 = vpack.c.bf16 %v960, %v960
        %v1437 = vpack.c.bf16 %v961, %v961
        %v1438 = vpack.c.bf16 %v962, %v962
        %v1439 = vpack.c.bf16 %v963, %v963
        %v1440 = vpack.c.bf16 %v964, %v964
        %v1441 = vpack.c.bf16 %v965, %v965
        %v1442 = vpack.c.bf16 %v966, %v966
        %v1443 = vpack.c.bf16 %v967, %v967
        %v1444 = vpack.c.bf16 %v968, %v968
        %v1445 = vpack.c.bf16 %v969, %v969
        %v1446 = vpack.c.bf16 %v970, %v970
        %v1447 = vpack.c.bf16 %v971, %v971
        %1464 = vrot.lane.b32.xlu0 %v1432, 126
        %v1465 = vpop.permute.xlu0 %1464
        %1466 = vrot.lane.b32.xlu0 %v1433, 126
        %v1467 = vpop.permute.xlu0 %1466
        %1468 = vrot.lane.b32.xlu0 %v1434, 126
        %v1469 = vpop.permute.xlu0 %1468
        %1470 = vrot.lane.b32.xlu0 %v1435, 126
        %v1471 = vpop.permute.xlu0 %1470
        %1472 = vrot.lane.b32.xlu0 %v1436, 126
        %v1473 = vpop.permute.xlu0 %1472
        %1474 = vrot.lane.b32.xlu0 %v1437, 126
        %v1475 = vpop.permute.xlu0 %1474
        %1476 = vrot.lane.b32.xlu0 %v1438, 126
        %v1477 = vpop.permute.xlu0 %1476
        %1478 = vrot.lane.b32.xlu0 %v1439, 126
        %v1479 = vpop.permute.xlu0 %1478
        %1480 = vrot.lane.b32.xlu0 %v1440, 126
        %v1481 = vpop.permute.xlu0 %1480
        %1482 = vrot.lane.b32.xlu0 %v1441, 126
        %v1483 = vpop.permute.xlu0 %1482
        %1484 = vrot.lane.b32.xlu0 %v1442, 126
        %v1485 = vpop.permute.xlu0 %1484
        %1486 = vrot.lane.b32.xlu0 %v1443, 126
        %v1487 = vpop.permute.xlu0 %1486
        %1488 = vrot.lane.b32.xlu0 %v1444, 126
        %v1489 = vpop.permute.xlu0 %1488
        %1490 = vrot.lane.b32.xlu0 %v1445, 126
        %v1491 = vpop.permute.xlu0 %1490
        %1492 = vrot.lane.b32.xlu0 %v1446, 126
        %v1493 = vpop.permute.xlu0 %1492
        %1494 = vrot.lane.b32.xlu0 %v1447, 126
        %v1495 = vpop.permute.xlu0 %1494
        %vm1512 = vcmask 1044472
        %1513 = vst.msk [vmem:[#allocation2] sm:$0xf] %vm1512, %v1465
        %1514 = vst.msk [vmem:[#allocation2 + $0x4] sm:$0xf] %vm1512, %v1467
        %1515 = vst.msk [vmem:[#allocation2 + $0x8] sm:$0xf] %vm1512, %v1469
        %1516 = vst.msk [vmem:[#allocation2 + $0xc] sm:$0xf] %vm1512, %v1471
        %1517 = vst.msk [vmem:[#allocation2 + $0x10] sm:$0xf] %vm1512, %v1473
        %1518 = vst.msk [vmem:[#allocation2 + $0x14] sm:$0xf] %vm1512, %v1475
        %1519 = vst.msk [vmem:[#allocation2 + $0x18] sm:$0xf] %vm1512, %v1477
        %1520 = vst.msk [vmem:[#allocation2 + $0x1c] sm:$0xf] %vm1512, %v1479
        %1521 = vst.msk [vmem:[#allocation2 + $0x20] sm:$0xf] %vm1512, %v1481
        %1522 = vst.msk [vmem:[#allocation2 + $0x24] sm:$0xf] %vm1512, %v1483
        %1523 = vst.msk [vmem:[#allocation2 + $0x28] sm:$0xf] %vm1512, %v1485
        %1524 = vst.msk [vmem:[#allocation2 + $0x2c] sm:$0xf] %vm1512, %v1487
        %1525 = vst.msk [vmem:[#allocation2 + $0x30] sm:$0xf] %vm1512, %v1489
        %1526 = vst.msk [vmem:[#allocation2 + $0x34] sm:$0xf] %vm1512, %v1491
        %1527 = vst.msk [vmem:[#allocation2 + $0x38] sm:$0xf] %vm1512, %v1493
        %1528 = vst.msk [vmem:[#allocation2 + $0x3c] sm:$0xf] %vm1512, %v1495
        %s1529 = scalar_lea.vmem %s3, 128
        %v1530 = vld [vmem:[%s1529] sm:$0xf]
        %v1531 = vld [vmem:[%s1529 + $0x4] sm:$0xf]
        %v1532 = vld [vmem:[%s1529 + $0x8] sm:$0xf]
        %v1533 = vld [vmem:[%s1529 + $0xc] sm:$0xf]
        %v1534 = vld [vmem:[%s1529 + $0x10] sm:$0xf]
        %v1535 = vld [vmem:[%s1529 + $0x14] sm:$0xf]
        %v1536 = vld [vmem:[%s1529 + $0x18] sm:$0xf]
        %v1537 = vld [vmem:[%s1529 + $0x1c] sm:$0xf]
        %v1538 = vld [vmem:[%s1529 + $0x20] sm:$0xf]
        %v1539 = vld [vmem:[%s1529 + $0x24] sm:$0xf]
        %v1540 = vld [vmem:[%s1529 + $0x28] sm:$0xf]
        %v1541 = vld [vmem:[%s1529 + $0x2c] sm:$0xf]
        %v1542 = vld [vmem:[%s1529 + $0x30] sm:$0xf]
        %v1543 = vld [vmem:[%s1529 + $0x34] sm:$0xf]
        %v1544 = vld [vmem:[%s1529 + $0x38] sm:$0xf]
        %v1545 = vld [vmem:[%s1529 + $0x3c] sm:$0xf]
        %v1546 = vld [vmem:[#allocation2] sm:$0xf]
        %v1547 = vld [vmem:[#allocation2 + $0x4] sm:$0xf]
        %v1548 = vld [vmem:[#allocation2 + $0x8] sm:$0xf]
        %v1549 = vld [vmem:[#allocation2 + $0xc] sm:$0xf]
        %v1550 = vld [vmem:[#allocation2 + $0x10] sm:$0xf]
        %v1551 = vld [vmem:[#allocation2 + $0x14] sm:$0xf]
        %v1552 = vld [vmem:[#allocation2 + $0x18] sm:$0xf]
        %v1553 = vld [vmem:[#allocation2 + $0x1c] sm:$0xf]
        %v1554 = vld [vmem:[#allocation2 + $0x20] sm:$0xf]
        %v1555 = vld [vmem:[#allocation2 + $0x24] sm:$0xf]
        %v1556 = vld [vmem:[#allocation2 + $0x28] sm:$0xf]
        %v1557 = vld [vmem:[#allocation2 + $0x2c] sm:$0xf]
        %v1558 = vld [vmem:[#allocation2 + $0x30] sm:$0xf]
        %v1559 = vld [vmem:[#allocation2 + $0x34] sm:$0xf]
        %v1560 = vld [vmem:[#allocation2 + $0x38] sm:$0xf]
        %v1561 = vld [vmem:[#allocation2 + $0x3c] sm:$0xf]
        %v1578 = vunpack.c.l.b16 %v1530
        %v1579 = vunpack.c.l.b16 %v1531
        %v1580 = vunpack.c.l.b16 %v1532
        %v1581 = vunpack.c.l.b16 %v1533
        %v1582 = vunpack.c.l.b16 %v1534
        %v1583 = vunpack.c.l.b16 %v1535
        %v1584 = vunpack.c.l.b16 %v1536
        %v1585 = vunpack.c.l.b16 %v1537
        %v1586 = vunpack.c.l.b16 %v1538
        %v1587 = vunpack.c.l.b16 %v1539
        %v1588 = vunpack.c.l.b16 %v1540
        %v1589 = vunpack.c.l.b16 %v1541
        %v1590 = vunpack.c.l.b16 %v1542
        %v1591 = vunpack.c.l.b16 %v1543
        %v1592 = vunpack.c.l.b16 %v1544
        %v1593 = vunpack.c.l.b16 %v1545
        %v1594 = vpack.c.b16 %v1579, %v1578
        %v1595 = vpack.c.b16 %v1581, %v1580
        %v1596 = vpack.c.b16 %v1583, %v1582
        %v1597 = vpack.c.b16 %v1585, %v1584
        %v1598 = vpack.c.b16 %v1587, %v1586
        %v1599 = vpack.c.b16 %v1589, %v1588
        %v1600 = vpack.c.b16 %v1591, %v1590
        %v1601 = vpack.c.b16 %v1593, %v1592
        %v1626 = vunpack.c.l.b16 %v1546
        %v1627 = vunpack.c.l.b16 %v1547
        %v1628 = vunpack.c.l.b16 %v1548
        %v1629 = vunpack.c.l.b16 %v1549
        %v1630 = vunpack.c.l.b16 %v1550
        %v1631 = vunpack.c.l.b16 %v1551
        %v1632 = vunpack.c.l.b16 %v1552
        %v1633 = vunpack.c.l.b16 %v1553
        %v1634 = vunpack.c.l.b16 %v1554
        %v1635 = vunpack.c.l.b16 %v1555
        %v1636 = vunpack.c.l.b16 %v1556
        %v1637 = vunpack.c.l.b16 %v1557
        %v1638 = vunpack.c.l.b16 %v1558
        %v1639 = vunpack.c.l.b16 %v1559
        %v1640 = vunpack.c.l.b16 %v1560
        %v1641 = vunpack.c.l.b16 %v1561
        %v1642 = vpack.c.b16 %v1627, %v1626
        %v1643 = vpack.c.b16 %v1629, %v1628
        %v1644 = vpack.c.b16 %v1631, %v1630
        %v1645 = vpack.c.b16 %v1633, %v1632
        %v1646 = vpack.c.b16 %v1635, %v1634
        %v1647 = vpack.c.b16 %v1637, %v1636
        %v1648 = vpack.c.b16 %v1639, %v1638
        %v1649 = vpack.c.b16 %v1641, %v1640
        %1658 = vmatpush.bf16.msra.mxu0 %v1649
        %1659 = vmatpush.bf16.msra.mxu0 %v1648
        %1660 = vmatpush.bf16.msra.mxu0 %v1647
        %1661 = vmatpush.bf16.msra.mxu0 %v1646
        %1662 = vmatpush.bf16.msra.mxu0 %v1645
        %1663 = vmatpush.bf16.msra.mxu0 %v1644
        %1664 = vmatpush.bf16.msra.mxu0 %v1643
        %1665 = vmatpush.bf16.msra.mxu0 %v1642
        %1666 = vmatmul.bf16.gmra.mxu0 %v1594
        %v1667 = vpop.f32.mrf.mxu0
        %v1668 = vadd.f32 0.0, %v1667
        %v1669 = vpop.f32.mrf.mxu0
        %v1670 = vadd.f32 0.0, %v1669
        %1671 = vmatmul.bf16.gmra.mxu0 %v1595
        %v1672 = vpop.f32.mrf.mxu0
        %v1673 = vadd.f32 0.0, %v1672
        %v1674 = vpop.f32.mrf.mxu0
        %v1675 = vadd.f32 0.0, %v1674
        %1676 = vmatmul.bf16.gmra.mxu0 %v1596
        %v1677 = vpop.f32.mrf.mxu0
        %v1678 = vadd.f32 0.0, %v1677
        %v1679 = vpop.f32.mrf.mxu0
        %v1680 = vadd.f32 0.0, %v1679
        %1681 = vmatmul.bf16.gmra.mxu0 %v1597
        %v1682 = vpop.f32.mrf.mxu0
        %v1683 = vadd.f32 0.0, %v1682
        %v1684 = vpop.f32.mrf.mxu0
        %v1685 = vadd.f32 0.0, %v1684
        %1686 = vmatmul.bf16.gmra.mxu0 %v1598
        %v1687 = vpop.f32.mrf.mxu0
        %v1688 = vadd.f32 0.0, %v1687
        %v1689 = vpop.f32.mrf.mxu0
        %v1690 = vadd.f32 0.0, %v1689
        %1691 = vmatmul.bf16.gmra.mxu0 %v1599
        %v1692 = vpop.f32.mrf.mxu0
        %v1693 = vadd.f32 0.0, %v1692
        %v1694 = vpop.f32.mrf.mxu0
        %v1695 = vadd.f32 0.0, %v1694
        %1696 = vmatmul.bf16.gmra.mxu0 %v1600
        %v1697 = vpop.f32.mrf.mxu0
        %v1698 = vadd.f32 0.0, %v1697
        %v1699 = vpop.f32.mrf.mxu0
        %v1700 = vadd.f32 0.0, %v1699
        %1701 = vmatmul.bf16.gmra.mxu0 %v1601
        %v1702 = vpop.f32.mrf.mxu0
        %v1703 = vadd.f32 0.0, %v1702
        %v1704 = vpop.f32.mrf.mxu0
        %v1705 = vadd.f32 0.0, %v1704
        %1706 = vdwg.mxu0
        %v1707 = vadd.f32 %v1329, %v1668
        %v1708 = vadd.f32 %v1331, %v1670
        %v1709 = vadd.f32 %v1334, %v1673
        %v1710 = vadd.f32 %v1336, %v1675
        %v1711 = vadd.f32 %v1339, %v1678
        %v1712 = vadd.f32 %v1341, %v1680
        %v1713 = vadd.f32 %v1344, %v1683
        %v1714 = vadd.f32 %v1346, %v1685
        %v1715 = vadd.f32 %v1349, %v1688
        %v1716 = vadd.f32 %v1351, %v1690
        %v1717 = vadd.f32 %v1354, %v1693
        %v1718 = vadd.f32 %v1356, %v1695
        %v1719 = vadd.f32 %v1359, %v1698
        %v1720 = vadd.f32 %v1361, %v1700
        %v1721 = vadd.f32 %v1364, %v1703
        %v1722 = vadd.f32 %v1366, %v1705
        %v1723 = vadd.f32 %v424, %v1707
        %v1724 = vadd.f32 %v425, %v1708
        %v1725 = vadd.f32 %v426, %v1709
        %v1726 = vadd.f32 %v427, %v1710
        %v1727 = vadd.f32 %v428, %v1711
        %v1728 = vadd.f32 %v429, %v1712
        %v1729 = vadd.f32 %v430, %v1713
        %v1730 = vadd.f32 %v431, %v1714
        %v1731 = vadd.f32 %v432, %v1715
        %v1732 = vadd.f32 %v433, %v1716
        %v1733 = vadd.f32 %v434, %v1717
        %v1734 = vadd.f32 %v435, %v1718
        %v1735 = vadd.f32 %v436, %v1719
        %v1736 = vadd.f32 %v437, %v1720
        %v1737 = vadd.f32 %v438, %v1721
        %v1738 = vadd.f32 %v439, %v1722
        %1739 = vset.pattern.permute.xlu0 2
        %1740 = vperm.xlu0 %1739, %v440
        %v1741 = vpop.permute.xlu0 %1740
        %1743 = vset.pattern.permute.xlu0 2
        %1744 = vperm.xlu0 %1743, %v441
        %v1745 = vpop.permute.xlu0 %1744
        %1747 = vset.pattern.permute.xlu0 2
        %1748 = vperm.xlu0 %1747, %v442
        %v1749 = vpop.permute.xlu0 %1748
        %1751 = vset.pattern.permute.xlu0 2
        %1752 = vperm.xlu0 %1751, %v443
        %v1753 = vpop.permute.xlu0 %1752
        %1755 = vset.pattern.permute.xlu0 2
        %1756 = vperm.xlu0 %1755, %v444
        %v1757 = vpop.permute.xlu0 %1756
        %1759 = vset.pattern.permute.xlu0 2
        %1760 = vperm.xlu0 %1759, %v445
        %v1761 = vpop.permute.xlu0 %1760
        %1763 = vset.pattern.permute.xlu0 2
        %1764 = vperm.xlu0 %1763, %v446
        %v1765 = vpop.permute.xlu0 %1764
        %1767 = vset.pattern.permute.xlu0 2
        %1768 = vperm.xlu0 %1767, %v447
        %v1769 = vpop.permute.xlu0 %1768
        %1771 = vset.pattern.permute.xlu0 2
        %1772 = vperm.xlu0 %1771, %v448
        %v1773 = vpop.permute.xlu0 %1772
        %1775 = vset.pattern.permute.xlu0 2
        %1776 = vperm.xlu0 %1775, %v449
        %v1777 = vpop.permute.xlu0 %1776
        %1779 = vset.pattern.permute.xlu0 2
        %1780 = vperm.xlu0 %1779, %v450
        %v1781 = vpop.permute.xlu0 %1780
        %1783 = vset.pattern.permute.xlu0 2
        %1784 = vperm.xlu0 %1783, %v451
        %v1785 = vpop.permute.xlu0 %1784
        %1787 = vset.pattern.permute.xlu0 2
        %1788 = vperm.xlu0 %1787, %v452
        %v1789 = vpop.permute.xlu0 %1788
        %1791 = vset.pattern.permute.xlu0 2
        %1792 = vperm.xlu0 %1791, %v453
        %v1793 = vpop.permute.xlu0 %1792
        %1795 = vset.pattern.permute.xlu0 2
        %1796 = vperm.xlu0 %1795, %v454
        %v1797 = vpop.permute.xlu0 %1796
        %1799 = vset.pattern.permute.xlu0 2
        %1800 = vperm.xlu0 %1799, %v455
        %v1801 = vpop.permute.xlu0 %1800
        %v1803 = vadd.f32 %v1723, %v1741
        %v1804 = vadd.f32 %v1724, %v1745
        %v1805 = vadd.f32 %v1725, %v1749
        %v1806 = vadd.f32 %v1726, %v1753
        %v1807 = vadd.f32 %v1727, %v1757
        %v1808 = vadd.f32 %v1728, %v1761
        %v1809 = vadd.f32 %v1729, %v1765
        %v1810 = vadd.f32 %v1730, %v1769
        %v1811 = vadd.f32 %v1731, %v1773
        %v1812 = vadd.f32 %v1732, %v1777
        %v1813 = vadd.f32 %v1733, %v1781
        %v1814 = vadd.f32 %v1734, %v1785
        %v1815 = vadd.f32 %v1735, %v1789
        %v1816 = vadd.f32 %v1736, %v1793
        %v1817 = vadd.f32 %v1737, %v1797
        %v1818 = vadd.f32 %v1738, %v1801
        %v1819 = vadd.f32 %v1803, %v1804
        %v1820 = vadd.f32 %v1819, %v1805
        %v1821 = vadd.f32 %v1820, %v1806
        %v1822 = vadd.f32 %v1821, %v1807
        %v1823 = vadd.f32 %v1822, %v1808
        %v1824 = vadd.f32 %v1823, %v1809
        %v1825 = vadd.f32 %v1824, %v1810
        %v1826 = vadd.f32 %v1825, %v1811
        %v1827 = vadd.f32 %v1826, %v1812
        %v1828 = vadd.f32 %v1827, %v1813
        %v1829 = vadd.f32 %v1828, %v1814
        %v1830 = vadd.f32 %v1829, %v1815
        %v1831 = vadd.f32 %v1830, %v1816
        %v1832 = vadd.f32 %v1831, %v1817
        %v1833 = vadd.f32 %v1832, %v1818
        %v1834 = vrot.slane %v1833, 4
        %v1835 = vadd.f32 %v1833, %v1834
        %v1836 = vrot.slane %v1835, 2
        %v1837 = vadd.f32 %v1835, %v1836
        %v1838 = vrot.slane %v1837, 1
        %v1839 = vadd.f32 %v1837, %v1838
        %v1840 = vmul.f32 %v1839, %v483
        %v1841 = vmul.f32 %v1803, %v1803
        %v1842 = vmul.f32 %v1804, %v1804
        %v1843 = vmul.f32 %v1805, %v1805
        %v1844 = vmul.f32 %v1806, %v1806
        %v1845 = vmul.f32 %v1807, %v1807
        %v1846 = vmul.f32 %v1808, %v1808
        %v1847 = vmul.f32 %v1809, %v1809
        %v1848 = vmul.f32 %v1810, %v1810
        %v1849 = vmul.f32 %v1811, %v1811
        %v1850 = vmul.f32 %v1812, %v1812
        %v1851 = vmul.f32 %v1813, %v1813
        %v1852 = vmul.f32 %v1814, %v1814
        %v1853 = vmul.f32 %v1815, %v1815
        %v1854 = vmul.f32 %v1816, %v1816
        %v1855 = vmul.f32 %v1817, %v1817
        %v1856 = vmul.f32 %v1818, %v1818
        %v1857 = vadd.f32 %v1841, %v1842
        %v1858 = vadd.f32 %v1857, %v1843
        %v1859 = vadd.f32 %v1858, %v1844
        %v1860 = vadd.f32 %v1859, %v1845
        %v1861 = vadd.f32 %v1860, %v1846
        %v1862 = vadd.f32 %v1861, %v1847
        %v1863 = vadd.f32 %v1862, %v1848
        %v1864 = vadd.f32 %v1863, %v1849
        %v1865 = vadd.f32 %v1864, %v1850
        %v1866 = vadd.f32 %v1865, %v1851
        %v1867 = vadd.f32 %v1866, %v1852
        %v1868 = vadd.f32 %v1867, %v1853
        %v1869 = vadd.f32 %v1868, %v1854
        %v1870 = vadd.f32 %v1869, %v1855
        %v1871 = vadd.f32 %v1870, %v1856
        %v1872 = vrot.slane %v1871, 4
        %v1873 = vadd.f32 %v1871, %v1872
        %v1874 = vrot.slane %v1873, 2
        %v1875 = vadd.f32 %v1873, %v1874
        %v1876 = vrot.slane %v1875, 1
        %v1877 = vadd.f32 %v1875, %v1876
        %v1878 = vmul.f32 %v1877, %v483
        %v1879 = vmul.f32 %v1840, %v1840
        %v1880 = vsub.f32 %v1878, %v1879
        %v1881 = vmax.f32 %v1880, 0.0
        %v1882 = vsub.f32 %v1803, %v1840
        %v1883 = vsub.f32 %v1804, %v1840
        %v1884 = vsub.f32 %v1805, %v1840
        %v1885 = vsub.f32 %v1806, %v1840
        %v1886 = vsub.f32 %v1807, %v1840
        %v1887 = vsub.f32 %v1808, %v1840
        %v1888 = vsub.f32 %v1809, %v1840
        %v1889 = vsub.f32 %v1810, %v1840
        %v1890 = vsub.f32 %v1811, %v1840
        %v1891 = vsub.f32 %v1812, %v1840
        %v1892 = vsub.f32 %v1813, %v1840
        %v1893 = vsub.f32 %v1814, %v1840
        %v1894 = vsub.f32 %v1815, %v1840
        %v1895 = vsub.f32 %v1816, %v1840
        %v1896 = vsub.f32 %v1817, %v1840
        %v1897 = vsub.f32 %v1818, %v1840
        %v1898 = vadd.f32 %v1881, 1e-06
        %v1899 = vrsqrt.pop %v1898
        %v1900 = vmul.f32 %v1899, %v1898
        %v1901 = vmul.f32 %v1900, %v1899
        %v1902 = vmul.f32 0.5, %v1901
        %v1903 = vsub.f32 1.5, %v1902
        %v1904 = vmul.f32 %v1899, %v1903
        %vm1905 = vweird.f32 %v1898
        %vm1906 = vweird.f32 %v1899
        %vm1907 = vmor %vm1905, %vm1906
        %v1908 = vsel %vm1907, %v1899, %v1904
        %v1909 = vmul.f32 %v1882, %v1908
        %v1910 = vmul.f32 %v1883, %v1908
        %v1911 = vmul.f32 %v1884, %v1908
        %v1912 = vmul.f32 %v1885, %v1908
        %v1913 = vmul.f32 %v1886, %v1908
        %v1914 = vmul.f32 %v1887, %v1908
        %v1915 = vmul.f32 %v1888, %v1908
        %v1916 = vmul.f32 %v1889, %v1908
        %v1917 = vmul.f32 %v1890, %v1908
        %v1918 = vmul.f32 %v1891, %v1908
        %v1919 = vmul.f32 %v1892, %v1908
        %v1920 = vmul.f32 %v1893, %v1908
        %v1921 = vmul.f32 %v1894, %v1908
        %v1922 = vmul.f32 %v1895, %v1908
        %v1923 = vmul.f32 %v1896, %v1908
        %v1924 = vmul.f32 %v1897, %v1908
        %1925 = vset.pattern.permute.xlu0 3
        %1926 = vperm.xlu0 %1925, %v440
        %v1927 = vpop.permute.xlu0 %1926
        %1929 = vset.pattern.permute.xlu0 3
        %1930 = vperm.xlu0 %1929, %v441
        %v1931 = vpop.permute.xlu0 %1930
        %1933 = vset.pattern.permute.xlu0 3
        %1934 = vperm.xlu0 %1933, %v442
        %v1935 = vpop.permute.xlu0 %1934
        %1937 = vset.pattern.permute.xlu0 3
        %1938 = vperm.xlu0 %1937, %v443
        %v1939 = vpop.permute.xlu0 %1938
        %1941 = vset.pattern.permute.xlu0 3
        %1942 = vperm.xlu0 %1941, %v444
        %v1943 = vpop.permute.xlu0 %1942
        %1945 = vset.pattern.permute.xlu0 3
        %1946 = vperm.xlu0 %1945, %v445
        %v1947 = vpop.permute.xlu0 %1946
        %1949 = vset.pattern.permute.xlu0 3
        %1950 = vperm.xlu0 %1949, %v446
        %v1951 = vpop.permute.xlu0 %1950
        %1953 = vset.pattern.permute.xlu0 3
        %1954 = vperm.xlu0 %1953, %v447
        %v1955 = vpop.permute.xlu0 %1954
        %1957 = vset.pattern.permute.xlu0 3
        %1958 = vperm.xlu0 %1957, %v448
        %v1959 = vpop.permute.xlu0 %1958
        %1961 = vset.pattern.permute.xlu0 3
        %1962 = vperm.xlu0 %1961, %v449
        %v1963 = vpop.permute.xlu0 %1962
        %1965 = vset.pattern.permute.xlu0 3
        %1966 = vperm.xlu0 %1965, %v450
        %v1967 = vpop.permute.xlu0 %1966
        %1969 = vset.pattern.permute.xlu0 3
        %1970 = vperm.xlu0 %1969, %v451
        %v1971 = vpop.permute.xlu0 %1970
        %1973 = vset.pattern.permute.xlu0 3
        %1974 = vperm.xlu0 %1973, %v452
        %v1975 = vpop.permute.xlu0 %1974
        %1977 = vset.pattern.permute.xlu0 3
        %1978 = vperm.xlu0 %1977, %v453
        %v1979 = vpop.permute.xlu0 %1978
        %1981 = vset.pattern.permute.xlu0 3
        %1982 = vperm.xlu0 %1981, %v454
        %v1983 = vpop.permute.xlu0 %1982
        %1985 = vset.pattern.permute.xlu0 3
        %1986 = vperm.xlu0 %1985, %v455
        %v1987 = vpop.permute.xlu0 %1986
        %v1989 = vmul.f32 %v1909, %v1927
        %v1990 = vmul.f32 %v1910, %v1931
        %v1991 = vmul.f32 %v1911, %v1935
        %v1992 = vmul.f32 %v1912, %v1939
        %v1993 = vmul.f32 %v1913, %v1943
        %v1994 = vmul.f32 %v1914, %v1947
        %v1995 = vmul.f32 %v1915, %v1951
        %v1996 = vmul.f32 %v1916, %v1955
        %v1997 = vmul.f32 %v1917, %v1959
        %v1998 = vmul.f32 %v1918, %v1963
        %v1999 = vmul.f32 %v1919, %v1967
        %v2000 = vmul.f32 %v1920, %v1971
        %v2001 = vmul.f32 %v1921, %v1975
        %v2002 = vmul.f32 %v1922, %v1979
        %v2003 = vmul.f32 %v1923, %v1983
        %v2004 = vmul.f32 %v1924, %v1987
        %2005 = vset.pattern.permute.xlu0 4
        %2006 = vperm.xlu0 %2005, %v440
        %v2007 = vpop.permute.xlu0 %2006
        %2009 = vset.pattern.permute.xlu0 4
        %2010 = vperm.xlu0 %2009, %v441
        %v2011 = vpop.permute.xlu0 %2010
        %2013 = vset.pattern.permute.xlu0 4
        %2014 = vperm.xlu0 %2013, %v442
        %v2015 = vpop.permute.xlu0 %2014
        %2017 = vset.pattern.permute.xlu0 4
        %2018 = vperm.xlu0 %2017, %v443
        %v2019 = vpop.permute.xlu0 %2018
        %2021 = vset.pattern.permute.xlu0 4
        %2022 = vperm.xlu0 %2021, %v444
        %v2023 = vpop.permute.xlu0 %2022
        %2025 = vset.pattern.permute.xlu0 4
        %2026 = vperm.xlu0 %2025, %v445
        %v2027 = vpop.permute.xlu0 %2026
        %2029 = vset.pattern.permute.xlu0 4
        %2030 = vperm.xlu0 %2029, %v446
        %v2031 = vpop.permute.xlu0 %2030
        %2033 = vset.pattern.permute.xlu0 4
        %2034 = vperm.xlu0 %2033, %v447
        %v2035 = vpop.permute.xlu0 %2034
        %2037 = vset.pattern.permute.xlu0 4
        %2038 = vperm.xlu0 %2037, %v448
        %v2039 = vpop.permute.xlu0 %2038
        %2041 = vset.pattern.permute.xlu0 4
        %2042 = vperm.xlu0 %2041, %v449
        %v2043 = vpop.permute.xlu0 %2042
        %2045 = vset.pattern.permute.xlu0 4
        %2046 = vperm.xlu0 %2045, %v450
        %v2047 = vpop.permute.xlu0 %2046
        %2049 = vset.pattern.permute.xlu0 4
        %2050 = vperm.xlu0 %2049, %v451
        %v2051 = vpop.permute.xlu0 %2050
        %2053 = vset.pattern.permute.xlu0 4
        %2054 = vperm.xlu0 %2053, %v452
        %v2055 = vpop.permute.xlu0 %2054
        %2057 = vset.pattern.permute.xlu0 4
        %2058 = vperm.xlu0 %2057, %v453
        %v2059 = vpop.permute.xlu0 %2058
        %2061 = vset.pattern.permute.xlu0 4
        %2062 = vperm.xlu0 %2061, %v454
        %v2063 = vpop.permute.xlu0 %2062
        %2065 = vset.pattern.permute.xlu0 4
        %2066 = vperm.xlu0 %2065, %v455
        %v2067 = vpop.permute.xlu0 %2066
        %v2069 = vadd.f32 %v1989, %v2007
        %v2070 = vadd.f32 %v1990, %v2011
        %v2071 = vadd.f32 %v1991, %v2015
        %v2072 = vadd.f32 %v1992, %v2019
        %v2073 = vadd.f32 %v1993, %v2023
        %v2074 = vadd.f32 %v1994, %v2027
        %v2075 = vadd.f32 %v1995, %v2031
        %v2076 = vadd.f32 %v1996, %v2035
        %v2077 = vadd.f32 %v1997, %v2039
        %v2078 = vadd.f32 %v1998, %v2043
        %v2079 = vadd.f32 %v1999, %v2047
        %v2080 = vadd.f32 %v2000, %v2051
        %v2081 = vadd.f32 %v2001, %v2055
        %v2082 = vadd.f32 %v2002, %v2059
        %v2083 = vadd.f32 %v2003, %v2063
        %v2084 = vadd.f32 %v2004, %v2067
        %v2085 = vld [vmem:[%s4] sm:$0xf]
        %v2086 = vld [vmem:[%s4 + $0x4] sm:$0xf]
        %v2087 = vld [vmem:[%s4 + $0x8] sm:$0xf]
        %v2088 = vld [vmem:[%s4 + $0xc] sm:$0xf]
        %v2089 = vld [vmem:[%s4 + $0x10] sm:$0xf]
        %v2090 = vld [vmem:[%s4 + $0x14] sm:$0xf]
        %v2091 = vld [vmem:[%s4 + $0x18] sm:$0xf]
        %v2092 = vld [vmem:[%s4 + $0x1c] sm:$0xf]
        %v2093 = vld [vmem:[%s4 + $0x20] sm:$0xf]
        %v2094 = vld [vmem:[%s4 + $0x24] sm:$0xf]
        %v2095 = vld [vmem:[%s4 + $0x28] sm:$0xf]
        %v2096 = vld [vmem:[%s4 + $0x2c] sm:$0xf]
        %v2097 = vld [vmem:[%s4 + $0x30] sm:$0xf]
        %v2098 = vld [vmem:[%s4 + $0x34] sm:$0xf]
        %v2099 = vld [vmem:[%s4 + $0x38] sm:$0xf]
        %v2100 = vld [vmem:[%s4 + $0x3c] sm:$0xf]
        %v2101 = vld [vmem:[%s4 + $0x40] sm:$0xf]
        %v2102 = vld [vmem:[%s4 + $0x44] sm:$0xf]
        %v2103 = vld [vmem:[%s4 + $0x48] sm:$0xf]
        %v2104 = vld [vmem:[%s4 + $0x4c] sm:$0xf]
        %v2105 = vld [vmem:[%s4 + $0x50] sm:$0xf]
        %v2106 = vld [vmem:[%s4 + $0x54] sm:$0xf]
        %v2107 = vld [vmem:[%s4 + $0x58] sm:$0xf]
        %v2108 = vld [vmem:[%s4 + $0x5c] sm:$0xf]
        %v2109 = vld [vmem:[%s4 + $0x60] sm:$0xf]
        %v2110 = vld [vmem:[%s4 + $0x64] sm:$0xf]
        %v2111 = vld [vmem:[%s4 + $0x68] sm:$0xf]
        %v2112 = vld [vmem:[%s4 + $0x6c] sm:$0xf]
        %v2113 = vld [vmem:[%s4 + $0x70] sm:$0xf]
        %v2114 = vld [vmem:[%s4 + $0x74] sm:$0xf]
        %v2115 = vld [vmem:[%s4 + $0x78] sm:$0xf]
        %v2116 = vld [vmem:[%s4 + $0x7c] sm:$0xf]
        %v2117 = vld [vmem:[%s4 + $0x80] sm:$0xf]
        %v2118 = vld [vmem:[%s4 + $0x84] sm:$0xf]
        %v2119 = vld [vmem:[%s4 + $0x88] sm:$0xf]
        %v2120 = vld [vmem:[%s4 + $0x8c] sm:$0xf]
        %v2121 = vld [vmem:[%s4 + $0x90] sm:$0xf]
        %v2122 = vld [vmem:[%s4 + $0x94] sm:$0xf]
        %v2123 = vld [vmem:[%s4 + $0x98] sm:$0xf]
        %v2124 = vld [vmem:[%s4 + $0x9c] sm:$0xf]
        %v2125 = vld [vmem:[%s4 + $0xa0] sm:$0xf]
        %v2126 = vld [vmem:[%s4 + $0xa4] sm:$0xf]
        %v2127 = vld [vmem:[%s4 + $0xa8] sm:$0xf]
        %v2128 = vld [vmem:[%s4 + $0xac] sm:$0xf]
        %v2129 = vld [vmem:[%s4 + $0xb0] sm:$0xf]
        %v2130 = vld [vmem:[%s4 + $0xb4] sm:$0xf]
        %v2131 = vld [vmem:[%s4 + $0xb8] sm:$0xf]
        %v2132 = vld [vmem:[%s4 + $0xbc] sm:$0xf]
        %v2133 = vld [vmem:[%s4 + $0xc0] sm:$0xf]
        %v2134 = vld [vmem:[%s4 + $0xc4] sm:$0xf]
        %v2135 = vld [vmem:[%s4 + $0xc8] sm:$0xf]
        %v2136 = vld [vmem:[%s4 + $0xcc] sm:$0xf]
        %v2137 = vld [vmem:[%s4 + $0xd0] sm:$0xf]
        %v2138 = vld [vmem:[%s4 + $0xd4] sm:$0xf]
        %v2139 = vld [vmem:[%s4 + $0xd8] sm:$0xf]
        %v2140 = vld [vmem:[%s4 + $0xdc] sm:$0xf]
        %v2141 = vld [vmem:[%s4 + $0xe0] sm:$0xf]
        %v2142 = vld [vmem:[%s4 + $0xe4] sm:$0xf]
        %v2143 = vld [vmem:[%s4 + $0xe8] sm:$0xf]
        %v2144 = vld [vmem:[%s4 + $0xec] sm:$0xf]
        %v2145 = vld [vmem:[%s4 + $0xf0] sm:$0xf]
        %v2146 = vld [vmem:[%s4 + $0xf4] sm:$0xf]
        %v2147 = vld [vmem:[%s4 + $0xf8] sm:$0xf]
        %v2148 = vld [vmem:[%s4 + $0xfc] sm:$0xf]
        %v2149 = vpack.c.bf16 %v2070, %v2069
        %v2150 = vpack.c.bf16 %v2072, %v2071
        %v2151 = vpack.c.bf16 %v2074, %v2073
        %v2152 = vpack.c.bf16 %v2076, %v2075
        %v2153 = vpack.c.bf16 %v2078, %v2077
        %v2154 = vpack.c.bf16 %v2080, %v2079
        %v2155 = vpack.c.bf16 %v2082, %v2081
        %v2156 = vpack.c.bf16 %v2084, %v2083
        %v2157 = vld [vmem:[%s5] sm:$0xff]
        %v2158 = vld [vmem:[%s5 + $0x8] sm:$0xff]
        %v2159 = vld [vmem:[%s5 + $0x10] sm:$0xff]
        %v2160 = vld [vmem:[%s5 + $0x18] sm:$0xff]
        %v2161 = vld [vmem:[%s5 + $0x20] sm:$0xff]
        %v2162 = vld [vmem:[%s5 + $0x28] sm:$0xff]
        %v2163 = vld [vmem:[%s5 + $0x30] sm:$0xff]
        %v2164 = vld [vmem:[%s5 + $0x38] sm:$0xff]
        %v2165 = vld [vmem:[%s5 + $0x40] sm:$0xff]
        %v2166 = vld [vmem:[%s5 + $0x48] sm:$0xff]
        %v2167 = vld [vmem:[%s5 + $0x50] sm:$0xff]
        %v2168 = vld [vmem:[%s5 + $0x58] sm:$0xff]
        %v2169 = vld [vmem:[%s5 + $0x60] sm:$0xff]
        %v2170 = vld [vmem:[%s5 + $0x68] sm:$0xff]
        %v2171 = vld [vmem:[%s5 + $0x70] sm:$0xff]
        %v2172 = vld [vmem:[%s5 + $0x78] sm:$0xff]
        %v2173 = vld [vmem:[%s5 + $0x80] sm:$0xff]
        %v2174 = vld [vmem:[%s5 + $0x88] sm:$0xff]
        %v2175 = vld [vmem:[%s5 + $0x90] sm:$0xff]
        %v2176 = vld [vmem:[%s5 + $0x98] sm:$0xff]
        %v2177 = vld [vmem:[%s5 + $0xa0] sm:$0xff]
        %v2178 = vld [vmem:[%s5 + $0xa8] sm:$0xff]
        %v2179 = vld [vmem:[%s5 + $0xb0] sm:$0xff]
        %v2180 = vld [vmem:[%s5 + $0xb8] sm:$0xff]
        %v2181 = vld [vmem:[%s5 + $0xc0] sm:$0xff]
        %v2182 = vld [vmem:[%s5 + $0xc8] sm:$0xff]
        %v2183 = vld [vmem:[%s5 + $0xd0] sm:$0xff]
        %v2184 = vld [vmem:[%s5 + $0xd8] sm:$0xff]
        %v2185 = vld [vmem:[%s5 + $0xe0] sm:$0xff]
        %v2186 = vld [vmem:[%s5 + $0xe8] sm:$0xff]
        %v2187 = vld [vmem:[%s5 + $0xf0] sm:$0xff]
        %v2188 = vld [vmem:[%s5 + $0xf8] sm:$0xff]
        %v2189 = vld [vmem:[%s5 + $0x100] sm:$0xff]
        %v2190 = vld [vmem:[%s5 + $0x108] sm:$0xff]
        %v2191 = vld [vmem:[%s5 + $0x110] sm:$0xff]
        %v2192 = vld [vmem:[%s5 + $0x118] sm:$0xff]
        %v2193 = vld [vmem:[%s5 + $0x120] sm:$0xff]
        %v2194 = vld [vmem:[%s5 + $0x128] sm:$0xff]
        %v2195 = vld [vmem:[%s5 + $0x130] sm:$0xff]
        %v2196 = vld [vmem:[%s5 + $0x138] sm:$0xff]
        %v2197 = vld [vmem:[%s5 + $0x140] sm:$0xff]
        %v2198 = vld [vmem:[%s5 + $0x148] sm:$0xff]
        %v2199 = vld [vmem:[%s5 + $0x150] sm:$0xff]
        %v2200 = vld [vmem:[%s5 + $0x158] sm:$0xff]
        %v2201 = vld [vmem:[%s5 + $0x160] sm:$0xff]
        %v2202 = vld [vmem:[%s5 + $0x168] sm:$0xff]
        %v2203 = vld [vmem:[%s5 + $0x170] sm:$0xff]
        %v2204 = vld [vmem:[%s5 + $0x178] sm:$0xff]
        %v2205 = vld [vmem:[%s5 + $0x180] sm:$0xff]
        %v2206 = vld [vmem:[%s5 + $0x188] sm:$0xff]
        %v2207 = vld [vmem:[%s5 + $0x190] sm:$0xff]
        %v2208 = vld [vmem:[%s5 + $0x198] sm:$0xff]
        %v2209 = vld [vmem:[%s5 + $0x1a0] sm:$0xff]
        %v2210 = vld [vmem:[%s5 + $0x1a8] sm:$0xff]
        %v2211 = vld [vmem:[%s5 + $0x1b0] sm:$0xff]
        %v2212 = vld [vmem:[%s5 + $0x1b8] sm:$0xff]
        %v2213 = vld [vmem:[%s5 + $0x1c0] sm:$0xff]
        %v2214 = vld [vmem:[%s5 + $0x1c8] sm:$0xff]
        %v2215 = vld [vmem:[%s5 + $0x1d0] sm:$0xff]
        %v2216 = vld [vmem:[%s5 + $0x1d8] sm:$0xff]
        %v2217 = vld [vmem:[%s5 + $0x1e0] sm:$0xff]
        %v2218 = vld [vmem:[%s5 + $0x1e8] sm:$0xff]
        %v2219 = vld [vmem:[%s5 + $0x1f0] sm:$0xff]
        %v2220 = vld [vmem:[%s5 + $0x1f8] sm:$0xff]
        %2222 = vset.pattern.permute.xlu0 0
        %2223 = vperm.xlu0 %2222, %v2157
        %v2224 = vpop.permute.xlu0 %2223
        %2227 = vset.pattern.permute.xlu0 0
        %2228 = vperm.xlu0 %2227, %v2158
        %v2229 = vpop.permute.xlu0 %2228
        %2232 = vset.pattern.permute.xlu0 0
        %2233 = vperm.xlu0 %2232, %v2159
        %v2234 = vpop.permute.xlu0 %2233
        %2237 = vset.pattern.permute.xlu0 0
        %2238 = vperm.xlu0 %2237, %v2160
        %v2239 = vpop.permute.xlu0 %2238
        %2242 = vset.pattern.permute.xlu0 0
        %2243 = vperm.xlu0 %2242, %v2161
        %v2244 = vpop.permute.xlu0 %2243
        %2247 = vset.pattern.permute.xlu0 0
        %2248 = vperm.xlu0 %2247, %v2162
        %v2249 = vpop.permute.xlu0 %2248
        %2252 = vset.pattern.permute.xlu0 0
        %2253 = vperm.xlu0 %2252, %v2163
        %v2254 = vpop.permute.xlu0 %2253
        %2257 = vset.pattern.permute.xlu0 0
        %2258 = vperm.xlu0 %2257, %v2164
        %v2259 = vpop.permute.xlu0 %2258
        %2262 = vset.pattern.permute.xlu0 0
        %2263 = vperm.xlu0 %2262, %v2165
        %v2264 = vpop.permute.xlu0 %2263
        %2267 = vset.pattern.permute.xlu0 0
        %2268 = vperm.xlu0 %2267, %v2166
        %v2269 = vpop.permute.xlu0 %2268
        %2272 = vset.pattern.permute.xlu0 0
        %2273 = vperm.xlu0 %2272, %v2167
        %v2274 = vpop.permute.xlu0 %2273
        %2277 = vset.pattern.permute.xlu0 0
        %2278 = vperm.xlu0 %2277, %v2168
        %v2279 = vpop.permute.xlu0 %2278
        %2282 = vset.pattern.permute.xlu0 0
        %2283 = vperm.xlu0 %2282, %v2169
        %v2284 = vpop.permute.xlu0 %2283
        %2287 = vset.pattern.permute.xlu0 0
        %2288 = vperm.xlu0 %2287, %v2170
        %v2289 = vpop.permute.xlu0 %2288
        %2292 = vset.pattern.permute.xlu0 0
        %2293 = vperm.xlu0 %2292, %v2171
        %v2294 = vpop.permute.xlu0 %2293
        %2297 = vset.pattern.permute.xlu0 0
        %2298 = vperm.xlu0 %2297, %v2172
        %v2299 = vpop.permute.xlu0 %2298
        %2302 = vset.pattern.permute.xlu0 0
        %2303 = vperm.xlu0 %2302, %v2173
        %v2304 = vpop.permute.xlu0 %2303
        %2307 = vset.pattern.permute.xlu0 0
        %2308 = vperm.xlu0 %2307, %v2174
        %v2309 = vpop.permute.xlu0 %2308
        %2312 = vset.pattern.permute.xlu0 0
        %2313 = vperm.xlu0 %2312, %v2175
        %v2314 = vpop.permute.xlu0 %2313
        %2317 = vset.pattern.permute.xlu0 0
        %2318 = vperm.xlu0 %2317, %v2176
        %v2319 = vpop.permute.xlu0 %2318
        %2322 = vset.pattern.permute.xlu0 0
        %2323 = vperm.xlu0 %2322, %v2177
        %v2324 = vpop.permute.xlu0 %2323
        %2327 = vset.pattern.permute.xlu0 0
        %2328 = vperm.xlu0 %2327, %v2178
        %v2329 = vpop.permute.xlu0 %2328
        %2332 = vset.pattern.permute.xlu0 0
        %2333 = vperm.xlu0 %2332, %v2179
        %v2334 = vpop.permute.xlu0 %2333
        %2337 = vset.pattern.permute.xlu0 0
        %2338 = vperm.xlu0 %2337, %v2180
        %v2339 = vpop.permute.xlu0 %2338
        %2342 = vset.pattern.permute.xlu0 0
        %2343 = vperm.xlu0 %2342, %v2181
        %v2344 = vpop.permute.xlu0 %2343
        %2347 = vset.pattern.permute.xlu0 0
        %2348 = vperm.xlu0 %2347, %v2182
        %v2349 = vpop.permute.xlu0 %2348
        %2352 = vset.pattern.permute.xlu0 0
        %2353 = vperm.xlu0 %2352, %v2183
        %v2354 = vpop.permute.xlu0 %2353
        %2357 = vset.pattern.permute.xlu0 0
        %2358 = vperm.xlu0 %2357, %v2184
        %v2359 = vpop.permute.xlu0 %2358
        %2362 = vset.pattern.permute.xlu0 0
        %2363 = vperm.xlu0 %2362, %v2185
        %v2364 = vpop.permute.xlu0 %2363
        %2367 = vset.pattern.permute.xlu0 0
        %2368 = vperm.xlu0 %2367, %v2186
        %v2369 = vpop.permute.xlu0 %2368
        %2372 = vset.pattern.permute.xlu0 0
        %2373 = vperm.xlu0 %2372, %v2187
        %v2374 = vpop.permute.xlu0 %2373
        %2377 = vset.pattern.permute.xlu0 0
        %2378 = vperm.xlu0 %2377, %v2188
        %v2379 = vpop.permute.xlu0 %2378
        %2382 = vset.pattern.permute.xlu0 0
        %2383 = vperm.xlu0 %2382, %v2189
        %v2384 = vpop.permute.xlu0 %2383
        %2387 = vset.pattern.permute.xlu0 0
        %2388 = vperm.xlu0 %2387, %v2190
        %v2389 = vpop.permute.xlu0 %2388
        %2392 = vset.pattern.permute.xlu0 0
        %2393 = vperm.xlu0 %2392, %v2191
        %v2394 = vpop.permute.xlu0 %2393
        %2397 = vset.pattern.permute.xlu0 0
        %2398 = vperm.xlu0 %2397, %v2192
        %v2399 = vpop.permute.xlu0 %2398
        %2402 = vset.pattern.permute.xlu0 0
        %2403 = vperm.xlu0 %2402, %v2193
        %v2404 = vpop.permute.xlu0 %2403
        %2407 = vset.pattern.permute.xlu0 0
        %2408 = vperm.xlu0 %2407, %v2194
        %v2409 = vpop.permute.xlu0 %2408
        %2412 = vset.pattern.permute.xlu0 0
        %2413 = vperm.xlu0 %2412, %v2195
        %v2414 = vpop.permute.xlu0 %2413
        %2417 = vset.pattern.permute.xlu0 0
        %2418 = vperm.xlu0 %2417, %v2196
        %v2419 = vpop.permute.xlu0 %2418
        %2422 = vset.pattern.permute.xlu0 0
        %2423 = vperm.xlu0 %2422, %v2197
        %v2424 = vpop.permute.xlu0 %2423
        %2427 = vset.pattern.permute.xlu0 0
        %2428 = vperm.xlu0 %2427, %v2198
        %v2429 = vpop.permute.xlu0 %2428
        %2432 = vset.pattern.permute.xlu0 0
        %2433 = vperm.xlu0 %2432, %v2199
        %v2434 = vpop.permute.xlu0 %2433
        %2437 = vset.pattern.permute.xlu0 0
        %2438 = vperm.xlu0 %2437, %v2200
        %v2439 = vpop.permute.xlu0 %2438
        %2442 = vset.pattern.permute.xlu0 0
        %2443 = vperm.xlu0 %2442, %v2201
        %v2444 = vpop.permute.xlu0 %2443
        %2447 = vset.pattern.permute.xlu0 0
        %2448 = vperm.xlu0 %2447, %v2202
        %v2449 = vpop.permute.xlu0 %2448
        %2452 = vset.pattern.permute.xlu0 0
        %2453 = vperm.xlu0 %2452, %v2203
        %v2454 = vpop.permute.xlu0 %2453
        %2457 = vset.pattern.permute.xlu0 0
        %2458 = vperm.xlu0 %2457, %v2204
        %v2459 = vpop.permute.xlu0 %2458
        %2462 = vset.pattern.permute.xlu0 0
        %2463 = vperm.xlu0 %2462, %v2205
        %v2464 = vpop.permute.xlu0 %2463
        %2467 = vset.pattern.permute.xlu0 0
        %2468 = vperm.xlu0 %2467, %v2206
        %v2469 = vpop.permute.xlu0 %2468
        %2472 = vset.pattern.permute.xlu0 0
        %2473 = vperm.xlu0 %2472, %v2207
        %v2474 = vpop.permute.xlu0 %2473
        %2477 = vset.pattern.permute.xlu0 0
        %2478 = vperm.xlu0 %2477, %v2208
        %v2479 = vpop.permute.xlu0 %2478
        %2482 = vset.pattern.permute.xlu0 0
        %2483 = vperm.xlu0 %2482, %v2209
        %v2484 = vpop.permute.xlu0 %2483
        %2487 = vset.pattern.permute.xlu0 0
        %2488 = vperm.xlu0 %2487, %v2210
        %v2489 = vpop.permute.xlu0 %2488
        %2492 = vset.pattern.permute.xlu0 0
        %2493 = vperm.xlu0 %2492, %v2211
        %v2494 = vpop.permute.xlu0 %2493
        %2497 = vset.pattern.permute.xlu0 0
        %2498 = vperm.xlu0 %2497, %v2212
        %v2499 = vpop.permute.xlu0 %2498
        %2502 = vset.pattern.permute.xlu0 0
        %2503 = vperm.xlu0 %2502, %v2213
        %v2504 = vpop.permute.xlu0 %2503
        %2507 = vset.pattern.permute.xlu0 0
        %2508 = vperm.xlu0 %2507, %v2214
        %v2509 = vpop.permute.xlu0 %2508
        %2512 = vset.pattern.permute.xlu0 0
        %2513 = vperm.xlu0 %2512, %v2215
        %v2514 = vpop.permute.xlu0 %2513
        %2517 = vset.pattern.permute.xlu0 0
        %2518 = vperm.xlu0 %2517, %v2216
        %v2519 = vpop.permute.xlu0 %2518
        %2522 = vset.pattern.permute.xlu0 0
        %2523 = vperm.xlu0 %2522, %v2217
        %v2524 = vpop.permute.xlu0 %2523
        %2527 = vset.pattern.permute.xlu0 0
        %2528 = vperm.xlu0 %2527, %v2218
        %v2529 = vpop.permute.xlu0 %2528
        %2532 = vset.pattern.permute.xlu0 0
        %2533 = vperm.xlu0 %2532, %v2219
        %v2534 = vpop.permute.xlu0 %2533
        %2537 = vset.pattern.permute.xlu0 0
        %2538 = vperm.xlu0 %2537, %v2220
        %v2539 = vpop.permute.xlu0 %2538
        %v2605 = vunpack.c.l.b16 %v2085
        %v2606 = vunpack.c.l.b16 %v2086
        %v2607 = vunpack.c.l.b16 %v2087
        %v2608 = vunpack.c.l.b16 %v2088
        %v2609 = vunpack.c.l.b16 %v2089
        %v2610 = vunpack.c.l.b16 %v2090
        %v2611 = vunpack.c.l.b16 %v2091
        %v2612 = vunpack.c.l.b16 %v2092
        %v2613 = vunpack.c.l.b16 %v2093
        %v2614 = vunpack.c.l.b16 %v2094
        %v2615 = vunpack.c.l.b16 %v2095
        %v2616 = vunpack.c.l.b16 %v2096
        %v2617 = vunpack.c.l.b16 %v2097
        %v2618 = vunpack.c.l.b16 %v2098
        %v2619 = vunpack.c.l.b16 %v2099
        %v2620 = vunpack.c.l.b16 %v2100
        %v2621 = vunpack.c.l.b16 %v2101
        %v2622 = vunpack.c.l.b16 %v2102
        %v2623 = vunpack.c.l.b16 %v2103
        %v2624 = vunpack.c.l.b16 %v2104
        %v2625 = vunpack.c.l.b16 %v2105
        %v2626 = vunpack.c.l.b16 %v2106
        %v2627 = vunpack.c.l.b16 %v2107
        %v2628 = vunpack.c.l.b16 %v2108
        %v2629 = vunpack.c.l.b16 %v2109
        %v2630 = vunpack.c.l.b16 %v2110
        %v2631 = vunpack.c.l.b16 %v2111
        %v2632 = vunpack.c.l.b16 %v2112
        %v2633 = vunpack.c.l.b16 %v2113
        %v2634 = vunpack.c.l.b16 %v2114
        %v2635 = vunpack.c.l.b16 %v2115
        %v2636 = vunpack.c.l.b16 %v2116
        %v2637 = vunpack.c.l.b16 %v2117
        %v2638 = vunpack.c.l.b16 %v2118
        %v2639 = vunpack.c.l.b16 %v2119
        %v2640 = vunpack.c.l.b16 %v2120
        %v2641 = vunpack.c.l.b16 %v2121
        %v2642 = vunpack.c.l.b16 %v2122
        %v2643 = vunpack.c.l.b16 %v2123
        %v2644 = vunpack.c.l.b16 %v2124
        %v2645 = vunpack.c.l.b16 %v2125
        %v2646 = vunpack.c.l.b16 %v2126
        %v2647 = vunpack.c.l.b16 %v2127
        %v2648 = vunpack.c.l.b16 %v2128
        %v2649 = vunpack.c.l.b16 %v2129
        %v2650 = vunpack.c.l.b16 %v2130
        %v2651 = vunpack.c.l.b16 %v2131
        %v2652 = vunpack.c.l.b16 %v2132
        %v2653 = vunpack.c.l.b16 %v2133
        %v2654 = vunpack.c.l.b16 %v2134
        %v2655 = vunpack.c.l.b16 %v2135
        %v2656 = vunpack.c.l.b16 %v2136
        %v2657 = vunpack.c.l.b16 %v2137
        %v2658 = vunpack.c.l.b16 %v2138
        %v2659 = vunpack.c.l.b16 %v2139
        %v2660 = vunpack.c.l.b16 %v2140
        %v2661 = vunpack.c.l.b16 %v2141
        %v2662 = vunpack.c.l.b16 %v2142
        %v2663 = vunpack.c.l.b16 %v2143
        %v2664 = vunpack.c.l.b16 %v2144
        %v2665 = vunpack.c.l.b16 %v2145
        %v2666 = vunpack.c.l.b16 %v2146
        %v2667 = vunpack.c.l.b16 %v2147
        %v2668 = vunpack.c.l.b16 %v2148
        %v2669 = vpack.c.b16 %v2606, %v2605
        %v2670 = vpack.c.b16 %v2608, %v2607
        %v2671 = vpack.c.b16 %v2610, %v2609
        %v2672 = vpack.c.b16 %v2612, %v2611
        %v2673 = vpack.c.b16 %v2614, %v2613
        %v2674 = vpack.c.b16 %v2616, %v2615
        %v2675 = vpack.c.b16 %v2618, %v2617
        %v2676 = vpack.c.b16 %v2620, %v2619
        %v2677 = vpack.c.b16 %v2622, %v2621
        %v2678 = vpack.c.b16 %v2624, %v2623
        %v2679 = vpack.c.b16 %v2626, %v2625
        %v2680 = vpack.c.b16 %v2628, %v2627
        %v2681 = vpack.c.b16 %v2630, %v2629
        %v2682 = vpack.c.b16 %v2632, %v2631
        %v2683 = vpack.c.b16 %v2634, %v2633
        %v2684 = vpack.c.b16 %v2636, %v2635
        %v2685 = vpack.c.b16 %v2638, %v2637
        %v2686 = vpack.c.b16 %v2640, %v2639
        %v2687 = vpack.c.b16 %v2642, %v2641
        %v2688 = vpack.c.b16 %v2644, %v2643
        %v2689 = vpack.c.b16 %v2646, %v2645
        %v2690 = vpack.c.b16 %v2648, %v2647
        %v2691 = vpack.c.b16 %v2650, %v2649
        %v2692 = vpack.c.b16 %v2652, %v2651
        %v2693 = vpack.c.b16 %v2654, %v2653
        %v2694 = vpack.c.b16 %v2656, %v2655
        %v2695 = vpack.c.b16 %v2658, %v2657
        %v2696 = vpack.c.b16 %v2660, %v2659
        %v2697 = vpack.c.b16 %v2662, %v2661
        %v2698 = vpack.c.b16 %v2664, %v2663
        %v2699 = vpack.c.b16 %v2666, %v2665
        %v2700 = vpack.c.b16 %v2668, %v2667
        %2733 = vmatpush.bf16.msra.mxu0 %v2156
        %2734 = vmatpush.bf16.msra.mxu0 %v2155
        %2735 = vmatpush.bf16.msra.mxu0 %v2154
        %2736 = vmatpush.bf16.msra.mxu0 %v2153
        %2737 = vmatpush.bf16.msra.mxu0 %v2152
        %2738 = vmatpush.bf16.msra.mxu0 %v2151
        %2739 = vmatpush.bf16.msra.mxu0 %v2150
        %2740 = vmatpush.bf16.msra.mxu0 %v2149
        %2741 = vmatmul.bf16.gmra.mxu0 %v2669
        %v2742 = vpop.f32.mrf.mxu0
        %v2743 = vadd.f32 %v2224, %v2742
        %v2744 = vpop.f32.mrf.mxu0
        %v2745 = vadd.f32 %v2229, %v2744
        %2746 = vmatmul.bf16.gmra.mxu0 %v2670
        %v2747 = vpop.f32.mrf.mxu0
        %v2748 = vadd.f32 %v2234, %v2747
        %v2749 = vpop.f32.mrf.mxu0
        %v2750 = vadd.f32 %v2239, %v2749
        %2751 = vmatmul.bf16.gmra.mxu0 %v2671
        %v2752 = vpop.f32.mrf.mxu0
        %v2753 = vadd.f32 %v2244, %v2752
        %v2754 = vpop.f32.mrf.mxu0
        %v2755 = vadd.f32 %v2249, %v2754
        %2756 = vmatmul.bf16.gmra.mxu0 %v2672
        %v2757 = vpop.f32.mrf.mxu0
        %v2758 = vadd.f32 %v2254, %v2757
        %v2759 = vpop.f32.mrf.mxu0
        %v2760 = vadd.f32 %v2259, %v2759
        %2761 = vmatmul.bf16.gmra.mxu0 %v2673
        %v2762 = vpop.f32.mrf.mxu0
        %v2763 = vadd.f32 %v2264, %v2762
        %v2764 = vpop.f32.mrf.mxu0
        %v2765 = vadd.f32 %v2269, %v2764
        %2766 = vmatmul.bf16.gmra.mxu0 %v2674
        %v2767 = vpop.f32.mrf.mxu0
        %v2768 = vadd.f32 %v2274, %v2767
        %v2769 = vpop.f32.mrf.mxu0
        %v2770 = vadd.f32 %v2279, %v2769
        %2771 = vmatmul.bf16.gmra.mxu0 %v2675
        %v2772 = vpop.f32.mrf.mxu0
        %v2773 = vadd.f32 %v2284, %v2772
        %v2774 = vpop.f32.mrf.mxu0
        %v2775 = vadd.f32 %v2289, %v2774
        %2776 = vmatmul.bf16.gmra.mxu0 %v2676
        %v2777 = vpop.f32.mrf.mxu0
        %v2778 = vadd.f32 %v2294, %v2777
        %v2779 = vpop.f32.mrf.mxu0
        %v2780 = vadd.f32 %v2299, %v2779
        %2781 = vmatmul.bf16.gmra.mxu0 %v2677
        %v2782 = vpop.f32.mrf.mxu0
        %v2783 = vadd.f32 %v2304, %v2782
        %v2784 = vpop.f32.mrf.mxu0
        %v2785 = vadd.f32 %v2309, %v2784
        %2786 = vmatmul.bf16.gmra.mxu0 %v2678
        %v2787 = vpop.f32.mrf.mxu0
        %v2788 = vadd.f32 %v2314, %v2787
        %v2789 = vpop.f32.mrf.mxu0
        %v2790 = vadd.f32 %v2319, %v2789
        %2791 = vmatmul.bf16.gmra.mxu0 %v2679
        %v2792 = vpop.f32.mrf.mxu0
        %v2793 = vadd.f32 %v2324, %v2792
        %v2794 = vpop.f32.mrf.mxu0
        %v2795 = vadd.f32 %v2329, %v2794
        %2796 = vmatmul.bf16.gmra.mxu0 %v2680
        %v2797 = vpop.f32.mrf.mxu0
        %v2798 = vadd.f32 %v2334, %v2797
        %v2799 = vpop.f32.mrf.mxu0
        %v2800 = vadd.f32 %v2339, %v2799
        %2801 = vmatmul.bf16.gmra.mxu0 %v2681
        %v2802 = vpop.f32.mrf.mxu0
        %v2803 = vadd.f32 %v2344, %v2802
        %v2804 = vpop.f32.mrf.mxu0
        %v2805 = vadd.f32 %v2349, %v2804
        %2806 = vmatmul.bf16.gmra.mxu0 %v2682
        %v2807 = vpop.f32.mrf.mxu0
        %v2808 = vadd.f32 %v2354, %v2807
        %v2809 = vpop.f32.mrf.mxu0
        %v2810 = vadd.f32 %v2359, %v2809
        %2811 = vmatmul.bf16.gmra.mxu0 %v2683
        %v2812 = vpop.f32.mrf.mxu0
        %v2813 = vadd.f32 %v2364, %v2812
        %v2814 = vpop.f32.mrf.mxu0
        %v2815 = vadd.f32 %v2369, %v2814
        %2816 = vmatmul.bf16.gmra.mxu0 %v2684
        %v2817 = vpop.f32.mrf.mxu0
        %v2818 = vadd.f32 %v2374, %v2817
        %v2819 = vpop.f32.mrf.mxu0
        %v2820 = vadd.f32 %v2379, %v2819
        %2821 = vmatmul.bf16.gmra.mxu0 %v2685
        %v2822 = vpop.f32.mrf.mxu0
        %v2823 = vadd.f32 %v2384, %v2822
        %v2824 = vpop.f32.mrf.mxu0
        %v2825 = vadd.f32 %v2389, %v2824
        %2826 = vmatmul.bf16.gmra.mxu0 %v2686
        %v2827 = vpop.f32.mrf.mxu0
        %v2828 = vadd.f32 %v2394, %v2827
        %v2829 = vpop.f32.mrf.mxu0
        %v2830 = vadd.f32 %v2399, %v2829
        %2831 = vmatmul.bf16.gmra.mxu0 %v2687
        %v2832 = vpop.f32.mrf.mxu0
        %v2833 = vadd.f32 %v2404, %v2832
        %v2834 = vpop.f32.mrf.mxu0
        %v2835 = vadd.f32 %v2409, %v2834
        %2836 = vmatmul.bf16.gmra.mxu0 %v2688
        %v2837 = vpop.f32.mrf.mxu0
        %v2838 = vadd.f32 %v2414, %v2837
        %v2839 = vpop.f32.mrf.mxu0
        %v2840 = vadd.f32 %v2419, %v2839
        %2841 = vmatmul.bf16.gmra.mxu0 %v2689
        %v2842 = vpop.f32.mrf.mxu0
        %v2843 = vadd.f32 %v2424, %v2842
        %v2844 = vpop.f32.mrf.mxu0
        %v2845 = vadd.f32 %v2429, %v2844
        %2846 = vmatmul.bf16.gmra.mxu0 %v2690
        %v2847 = vpop.f32.mrf.mxu0
        %v2848 = vadd.f32 %v2434, %v2847
        %v2849 = vpop.f32.mrf.mxu0
        %v2850 = vadd.f32 %v2439, %v2849
        %2851 = vmatmul.bf16.gmra.mxu0 %v2691
        %v2852 = vpop.f32.mrf.mxu0
        %v2853 = vadd.f32 %v2444, %v2852
        %v2854 = vpop.f32.mrf.mxu0
        %v2855 = vadd.f32 %v2449, %v2854
        %2856 = vmatmul.bf16.gmra.mxu0 %v2692
        %v2857 = vpop.f32.mrf.mxu0
        %v2858 = vadd.f32 %v2454, %v2857
        %v2859 = vpop.f32.mrf.mxu0
        %v2860 = vadd.f32 %v2459, %v2859
        %2861 = vmatmul.bf16.gmra.mxu0 %v2693
        %v2862 = vpop.f32.mrf.mxu0
        %v2863 = vadd.f32 %v2464, %v2862
        %v2864 = vpop.f32.mrf.mxu0
        %v2865 = vadd.f32 %v2469, %v2864
        %2866 = vmatmul.bf16.gmra.mxu0 %v2694
        %v2867 = vpop.f32.mrf.mxu0
        %v2868 = vadd.f32 %v2474, %v2867
        %v2869 = vpop.f32.mrf.mxu0
        %v2870 = vadd.f32 %v2479, %v2869
        %2871 = vmatmul.bf16.gmra.mxu0 %v2695
        %v2872 = vpop.f32.mrf.mxu0
        %v2873 = vadd.f32 %v2484, %v2872
        %v2874 = vpop.f32.mrf.mxu0
        %v2875 = vadd.f32 %v2489, %v2874
        %2876 = vmatmul.bf16.gmra.mxu0 %v2696
        %v2877 = vpop.f32.mrf.mxu0
        %v2878 = vadd.f32 %v2494, %v2877
        %v2879 = vpop.f32.mrf.mxu0
        %v2880 = vadd.f32 %v2499, %v2879
        %2881 = vmatmul.bf16.gmra.mxu0 %v2697
        %v2882 = vpop.f32.mrf.mxu0
        %v2883 = vadd.f32 %v2504, %v2882
        %v2884 = vpop.f32.mrf.mxu0
        %v2885 = vadd.f32 %v2509, %v2884
        %2886 = vmatmul.bf16.gmra.mxu0 %v2698
        %v2887 = vpop.f32.mrf.mxu0
        %v2888 = vadd.f32 %v2514, %v2887
        %v2889 = vpop.f32.mrf.mxu0
        %v2890 = vadd.f32 %v2519, %v2889
        %2891 = vmatmul.bf16.gmra.mxu0 %v2699
        %v2892 = vpop.f32.mrf.mxu0
        %v2893 = vadd.f32 %v2524, %v2892
        %v2894 = vpop.f32.mrf.mxu0
        %v2895 = vadd.f32 %v2529, %v2894
        %2896 = vmatmul.bf16.gmra.mxu0 %v2700
        %v2897 = vpop.f32.mrf.mxu0
        %v2898 = vadd.f32 %v2534, %v2897
        %v2899 = vpop.f32.mrf.mxu0
        %v2900 = vadd.f32 %v2539, %v2899
        %2901 = vdwg.mxu0
        %v2902 = vmul.f32 %v2743, 0.5
        %v2903 = vmul.f32 %v2745, 0.5
        %v2904 = vmul.f32 %v2748, 0.5
        %v2905 = vmul.f32 %v2750, 0.5
        %v2906 = vmul.f32 %v2753, 0.5
        %v2907 = vmul.f32 %v2755, 0.5
        %v2908 = vmul.f32 %v2758, 0.5
        %v2909 = vmul.f32 %v2760, 0.5
        %v2910 = vmul.f32 %v2763, 0.5
        %v2911 = vmul.f32 %v2765, 0.5
        %v2912 = vmul.f32 %v2768, 0.5
        %v2913 = vmul.f32 %v2770, 0.5
        %v2914 = vmul.f32 %v2773, 0.5
        %v2915 = vmul.f32 %v2775, 0.5
        %v2916 = vmul.f32 %v2778, 0.5
        %v2917 = vmul.f32 %v2780, 0.5
        %v2918 = vmul.f32 %v2783, 0.5
        %v2919 = vmul.f32 %v2785, 0.5
        %v2920 = vmul.f32 %v2788, 0.5
        %v2921 = vmul.f32 %v2790, 0.5
        %v2922 = vmul.f32 %v2793, 0.5
        %v2923 = vmul.f32 %v2795, 0.5
        %v2924 = vmul.f32 %v2798, 0.5
        %v2925 = vmul.f32 %v2800, 0.5
        %v2926 = vmul.f32 %v2803, 0.5
        %v2927 = vmul.f32 %v2805, 0.5
        %v2928 = vmul.f32 %v2808, 0.5
        %v2929 = vmul.f32 %v2810, 0.5
        %v2930 = vmul.f32 %v2813, 0.5
        %v2931 = vmul.f32 %v2815, 0.5
        %v2932 = vmul.f32 %v2818, 0.5
        %v2933 = vmul.f32 %v2820, 0.5
        %v2934 = vmul.f32 %v2823, 0.5
        %v2935 = vmul.f32 %v2825, 0.5
        %v2936 = vmul.f32 %v2828, 0.5
        %v2937 = vmul.f32 %v2830, 0.5
        %v2938 = vmul.f32 %v2833, 0.5
        %v2939 = vmul.f32 %v2835, 0.5
        %v2940 = vmul.f32 %v2838, 0.5
        %v2941 = vmul.f32 %v2840, 0.5
        %v2942 = vmul.f32 %v2843, 0.5
        %v2943 = vmul.f32 %v2845, 0.5
        %v2944 = vmul.f32 %v2848, 0.5
        %v2945 = vmul.f32 %v2850, 0.5
        %v2946 = vmul.f32 %v2853, 0.5
        %v2947 = vmul.f32 %v2855, 0.5
        %v2948 = vmul.f32 %v2858, 0.5
        %v2949 = vmul.f32 %v2860, 0.5
        %v2950 = vmul.f32 %v2863, 0.5
        %v2951 = vmul.f32 %v2865, 0.5
        %v2952 = vmul.f32 %v2868, 0.5
        %v2953 = vmul.f32 %v2870, 0.5
        %v2954 = vmul.f32 %v2873, 0.5
        %v2955 = vmul.f32 %v2875, 0.5
        %v2956 = vmul.f32 %v2878, 0.5
        %v2957 = vmul.f32 %v2880, 0.5
        %v2958 = vmul.f32 %v2883, 0.5
        %v2959 = vmul.f32 %v2885, 0.5
        %v2960 = vmul.f32 %v2888, 0.5
        %v2961 = vmul.f32 %v2890, 0.5
        %v2962 = vmul.f32 %v2893, 0.5
        %v2963 = vmul.f32 %v2895, 0.5
        %v2964 = vmul.f32 %v2898, 0.5
        %v2965 = vmul.f32 %v2900, 0.5
        %v2966 = vmul.f32 %v2743, 0.70710677
        %v2967 = vmul.f32 %v2745, 0.70710677
        %v2968 = vmul.f32 %v2748, 0.70710677
        %v2969 = vmul.f32 %v2750, 0.70710677
        %v2970 = vmul.f32 %v2753, 0.70710677
        %v2971 = vmul.f32 %v2755, 0.70710677
        %v2972 = vmul.f32 %v2758, 0.70710677
        %v2973 = vmul.f32 %v2760, 0.70710677
        %v2974 = vmul.f32 %v2763, 0.70710677
        %v2975 = vmul.f32 %v2765, 0.70710677
        %v2976 = vmul.f32 %v2768, 0.70710677
        %v2977 = vmul.f32 %v2770, 0.70710677
        %v2978 = vmul.f32 %v2773, 0.70710677
        %v2979 = vmul.f32 %v2775, 0.70710677
        %v2980 = vmul.f32 %v2778, 0.70710677
        %v2981 = vmul.f32 %v2780, 0.70710677
        %v2982 = vmul.f32 %v2783, 0.70710677
        %v2983 = vmul.f32 %v2785, 0.70710677
        %v2984 = vmul.f32 %v2788, 0.70710677
        %v2985 = vmul.f32 %v2790, 0.70710677
        %v2986 = vmul.f32 %v2793, 0.70710677
        %v2987 = vmul.f32 %v2795, 0.70710677
        %v2988 = vmul.f32 %v2798, 0.70710677
        %v2989 = vmul.f32 %v2800, 0.70710677
        %v2990 = vmul.f32 %v2803, 0.70710677
        %v2991 = vmul.f32 %v2805, 0.70710677
        %v2992 = vmul.f32 %v2808, 0.70710677
        %v2993 = vmul.f32 %v2810, 0.70710677
        %v2994 = vmul.f32 %v2813, 0.70710677
        %v2995 = vmul.f32 %v2815, 0.70710677
        %v2996 = vmul.f32 %v2818, 0.70710677
        %v2997 = vmul.f32 %v2820, 0.70710677
        %v2998 = vmul.f32 %v2823, 0.70710677
        %v2999 = vmul.f32 %v2825, 0.70710677
        %v3000 = vmul.f32 %v2828, 0.70710677
        %v3001 = vmul.f32 %v2830, 0.70710677
        %v3002 = vmul.f32 %v2833, 0.70710677
        %v3003 = vmul.f32 %v2835, 0.70710677
        %v3004 = vmul.f32 %v2838, 0.70710677
        %v3005 = vmul.f32 %v2840, 0.70710677
        %v3006 = vmul.f32 %v2843, 0.70710677
        %v3007 = vmul.f32 %v2845, 0.70710677
        %v3008 = vmul.f32 %v2848, 0.70710677
        %v3009 = vmul.f32 %v2850, 0.70710677
        %v3010 = vmul.f32 %v2853, 0.70710677
        %v3011 = vmul.f32 %v2855, 0.70710677
        %v3012 = vmul.f32 %v2858, 0.70710677
        %v3013 = vmul.f32 %v2860, 0.70710677
        %v3014 = vmul.f32 %v2863, 0.70710677
        %v3015 = vmul.f32 %v2865, 0.70710677
        %v3016 = vmul.f32 %v2868, 0.70710677
        %v3017 = vmul.f32 %v2870, 0.70710677
        %v3018 = vmul.f32 %v2873, 0.70710677
        %v3019 = vmul.f32 %v2875, 0.70710677
        %v3020 = vmul.f32 %v2878, 0.70710677
        %v3021 = vmul.f32 %v2880, 0.70710677
        %v3022 = vmul.f32 %v2883, 0.70710677
        %v3023 = vmul.f32 %v2885, 0.70710677
        %v3024 = vmul.f32 %v2888, 0.70710677
        %v3025 = vmul.f32 %v2890, 0.70710677
        %v3026 = vmul.f32 %v2893, 0.70710677
        %v3027 = vmul.f32 %v2895, 0.70710677
        %v3028 = vmul.f32 %v2898, 0.70710677
        %v3029 = vmul.f32 %v2900, 0.70710677
        %v3030 = vmul.f32 %v2966, %v2966
        %v3031 = vmin.f32 16.0, %v3030
        %v3032 = vmul.f32 %v3031, 2.1237322e-06
        %v3033 = vadd.f32 %v3032, 0.00028619796
        %v3034 = vmul.f32 %v3031, %v3033
        %v3035 = vadd.f32 %v3034, 0.0036580483
        %v3036 = vmul.f32 %v3031, %v3035
        %v3037 = vadd.f32 %v3036, 0.05243302
        %v3038 = vmul.f32 %v3031, %v3037
        %v3039 = vadd.f32 %v3038, 0.18741608
        %v3040 = vmul.f32 %v3031, %v3039
        %v3041 = vadd.f32 %v3040, 1.1283791
        %v3042 = vmul.f32 %v2966, %v3041
        %v3043 = vmul.f32 %v3031, 3.8918573e-05
        %v3044 = vadd.f32 %v3043, 0.001143296
        %v3045 = vmul.f32 %v3031, %v3044
        %v3046 = vadd.f32 %v3045, 0.014752088
        %v3047 = vmul.f32 %v3031, %v3046
        %v3048 = vadd.f32 %v3047, 0.112945676
        %v3049 = vmul.f32 %v3031, %v3048
        %v3050 = vadd.f32 %v3049, 0.4994258
        %v3051 = vmul.f32 %v3031, %v3050
        %v3052 = vadd.f32 %v3051, 1.0
        %v3053 = vrcp.pop %v3052
        %v3054 = vmul.f32 %v3052, %v3053
        %v3055 = vsub.f32 1.0, %v3054
        %v3056 = vmul.f32 %v3053, %v3055
        %v3057 = vadd.f32 %v3053, %v3056
        %vm3058 = vweird.f32 %v3052
        %vm3059 = vweird.f32 %v3053
        %vm3060 = vmor %vm3058, %vm3059
        %v3061 = vsel %vm3060, %v3053, %v3057
        %v3062 = vand.u32 2147483647, %v3052
        %vm3063 = vcmp.eq.f32.partialorder %v3062, 8.507059e+37
        %v3064 = vand.u32 %v3052, 2147483648
        %v3065 = vor.u32 1.1754944e-38, %v3064
        %v3066 = vsel %vm3063, %v3065, %v3061
        %v3067 = vmul.f32 %v3042, %v3066
        %v3068 = vmin.f32 %v3067, 1.0
        %v3069 = vmax.f32 %v3068, -1.0
        %v3070 = vmul.f32 %v2967, %v2967
        %v3071 = vmin.f32 16.0, %v3070
        %v3072 = vmul.f32 %v3071, 2.1237322e-06
        %v3073 = vadd.f32 %v3072, 0.00028619796
        %v3074 = vmul.f32 %v3071, %v3073
        %v3075 = vadd.f32 %v3074, 0.0036580483
        %v3076 = vmul.f32 %v3071, %v3075
        %v3077 = vadd.f32 %v3076, 0.05243302
        %v3078 = vmul.f32 %v3071, %v3077
        %v3079 = vadd.f32 %v3078, 0.18741608
        %v3080 = vmul.f32 %v3071, %v3079
        %v3081 = vadd.f32 %v3080, 1.1283791
        %v3082 = vmul.f32 %v2967, %v3081
        %v3083 = vmul.f32 %v3071, 3.8918573e-05
        %v3084 = vadd.f32 %v3083, 0.001143296
        %v3085 = vmul.f32 %v3071, %v3084
        %v3086 = vadd.f32 %v3085, 0.014752088
        %v3087 = vmul.f32 %v3071, %v3086
        %v3088 = vadd.f32 %v3087, 0.112945676
        %v3089 = vmul.f32 %v3071, %v3088
        %v3090 = vadd.f32 %v3089, 0.4994258
        %v3091 = vmul.f32 %v3071, %v3090
        %v3092 = vadd.f32 %v3091, 1.0
        %v3093 = vrcp.pop %v3092
        %v3094 = vmul.f32 %v3092, %v3093
        %v3095 = vsub.f32 1.0, %v3094
        %v3096 = vmul.f32 %v3093, %v3095
        %v3097 = vadd.f32 %v3093, %v3096
        %vm3098 = vweird.f32 %v3092
        %vm3099 = vweird.f32 %v3093
        %vm3100 = vmor %vm3098, %vm3099
        %v3101 = vsel %vm3100, %v3093, %v3097
        %v3102 = vand.u32 2147483647, %v3092
        %vm3103 = vcmp.eq.f32.partialorder %v3102, 8.507059e+37
        %v3104 = vand.u32 %v3092, 2147483648
        %v3105 = vor.u32 1.1754944e-38, %v3104
        %v3106 = vsel %vm3103, %v3105, %v3101
        %v3107 = vmul.f32 %v3082, %v3106
        %v3108 = vmin.f32 %v3107, 1.0
        %v3109 = vmax.f32 %v3108, -1.0
        %v3110 = vmul.f32 %v2968, %v2968
        %v3111 = vmin.f32 16.0, %v3110
        %v3112 = vmul.f32 %v3111, 2.1237322e-06
        %v3113 = vadd.f32 %v3112, 0.00028619796
        %v3114 = vmul.f32 %v3111, %v3113
        %v3115 = vadd.f32 %v3114, 0.0036580483
        %v3116 = vmul.f32 %v3111, %v3115
        %v3117 = vadd.f32 %v3116, 0.05243302
        %v3118 = vmul.f32 %v3111, %v3117
        %v3119 = vadd.f32 %v3118, 0.18741608
        %v3120 = vmul.f32 %v3111, %v3119
        %v3121 = vadd.f32 %v3120, 1.1283791
        %v3122 = vmul.f32 %v2968, %v3121
        %v3123 = vmul.f32 %v3111, 3.8918573e-05
        %v3124 = vadd.f32 %v3123, 0.001143296
        %v3125 = vmul.f32 %v3111, %v3124
        %v3126 = vadd.f32 %v3125, 0.014752088
        %v3127 = vmul.f32 %v3111, %v3126
        %v3128 = vadd.f32 %v3127, 0.112945676
        %v3129 = vmul.f32 %v3111, %v3128
        %v3130 = vadd.f32 %v3129, 0.4994258
        %v3131 = vmul.f32 %v3111, %v3130
        %v3132 = vadd.f32 %v3131, 1.0
        %v3133 = vrcp.pop %v3132
        %v3134 = vmul.f32 %v3132, %v3133
        %v3135 = vsub.f32 1.0, %v3134
        %v3136 = vmul.f32 %v3133, %v3135
        %v3137 = vadd.f32 %v3133, %v3136
        %vm3138 = vweird.f32 %v3132
        %vm3139 = vweird.f32 %v3133
        %vm3140 = vmor %vm3138, %vm3139
        %v3141 = vsel %vm3140, %v3133, %v3137
        %v3142 = vand.u32 2147483647, %v3132
        %vm3143 = vcmp.eq.f32.partialorder %v3142, 8.507059e+37
        %v3144 = vand.u32 %v3132, 2147483648
        %v3145 = vor.u32 1.1754944e-38, %v3144
        %v3146 = vsel %vm3143, %v3145, %v3141
        %v3147 = vmul.f32 %v3122, %v3146
        %v3148 = vmin.f32 %v3147, 1.0
        %v3149 = vmax.f32 %v3148, -1.0
        %v3150 = vmul.f32 %v2969, %v2969
        %v3151 = vmin.f32 16.0, %v3150
        %v3152 = vmul.f32 %v3151, 2.1237322e-06
        %v3153 = vadd.f32 %v3152, 0.00028619796
        %v3154 = vmul.f32 %v3151, %v3153
        %v3155 = vadd.f32 %v3154, 0.0036580483
        %v3156 = vmul.f32 %v3151, %v3155
        %v3157 = vadd.f32 %v3156, 0.05243302
        %v3158 = vmul.f32 %v3151, %v3157
        %v3159 = vadd.f32 %v3158, 0.18741608
        %v3160 = vmul.f32 %v3151, %v3159
        %v3161 = vadd.f32 %v3160, 1.1283791
        %v3162 = vmul.f32 %v2969, %v3161
        %v3163 = vmul.f32 %v3151, 3.8918573e-05
        %v3164 = vadd.f32 %v3163, 0.001143296
        %v3165 = vmul.f32 %v3151, %v3164
        %v3166 = vadd.f32 %v3165, 0.014752088
        %v3167 = vmul.f32 %v3151, %v3166
        %v3168 = vadd.f32 %v3167, 0.112945676
        %v3169 = vmul.f32 %v3151, %v3168
        %v3170 = vadd.f32 %v3169, 0.4994258
        %v3171 = vmul.f32 %v3151, %v3170
        %v3172 = vadd.f32 %v3171, 1.0
        %v3173 = vrcp.pop %v3172
        %v3174 = vmul.f32 %v3172, %v3173
        %v3175 = vsub.f32 1.0, %v3174
        %v3176 = vmul.f32 %v3173, %v3175
        %v3177 = vadd.f32 %v3173, %v3176
        %vm3178 = vweird.f32 %v3172
        %vm3179 = vweird.f32 %v3173
        %vm3180 = vmor %vm3178, %vm3179
        %v3181 = vsel %vm3180, %v3173, %v3177
        %v3182 = vand.u32 2147483647, %v3172
        %vm3183 = vcmp.eq.f32.partialorder %v3182, 8.507059e+37
        %v3184 = vand.u32 %v3172, 2147483648
        %v3185 = vor.u32 1.1754944e-38, %v3184
        %v3186 = vsel %vm3183, %v3185, %v3181
        %v3187 = vmul.f32 %v3162, %v3186
        %v3188 = vmin.f32 %v3187, 1.0
        %v3189 = vmax.f32 %v3188, -1.0
        %v3190 = vmul.f32 %v2970, %v2970
        %v3191 = vmin.f32 16.0, %v3190
        %v3192 = vmul.f32 %v3191, 2.1237322e-06
        %v3193 = vadd.f32 %v3192, 0.00028619796
        %v3194 = vmul.f32 %v3191, %v3193
        %v3195 = vadd.f32 %v3194, 0.0036580483
        %v3196 = vmul.f32 %v3191, %v3195
        %v3197 = vadd.f32 %v3196, 0.05243302
        %v3198 = vmul.f32 %v3191, %v3197
        %v3199 = vadd.f32 %v3198, 0.18741608
        %v3200 = vmul.f32 %v3191, %v3199
        %v3201 = vadd.f32 %v3200, 1.1283791
        %v3202 = vmul.f32 %v2970, %v3201
        %v3203 = vmul.f32 %v3191, 3.8918573e-05
        %v3204 = vadd.f32 %v3203, 0.001143296
        %v3205 = vmul.f32 %v3191, %v3204
        %v3206 = vadd.f32 %v3205, 0.014752088
        %v3207 = vmul.f32 %v3191, %v3206
        %v3208 = vadd.f32 %v3207, 0.112945676
        %v3209 = vmul.f32 %v3191, %v3208
        %v3210 = vadd.f32 %v3209, 0.4994258
        %v3211 = vmul.f32 %v3191, %v3210
        %v3212 = vadd.f32 %v3211, 1.0
        %v3213 = vrcp.pop %v3212
        %v3214 = vmul.f32 %v3212, %v3213
        %v3215 = vsub.f32 1.0, %v3214
        %v3216 = vmul.f32 %v3213, %v3215
        %v3217 = vadd.f32 %v3213, %v3216
        %vm3218 = vweird.f32 %v3212
        %vm3219 = vweird.f32 %v3213
        %vm3220 = vmor %vm3218, %vm3219
        %v3221 = vsel %vm3220, %v3213, %v3217
        %v3222 = vand.u32 2147483647, %v3212
        %vm3223 = vcmp.eq.f32.partialorder %v3222, 8.507059e+37
        %v3224 = vand.u32 %v3212, 2147483648
        %v3225 = vor.u32 1.1754944e-38, %v3224
        %v3226 = vsel %vm3223, %v3225, %v3221
        %v3227 = vmul.f32 %v3202, %v3226
        %v3228 = vmin.f32 %v3227, 1.0
        %v3229 = vmax.f32 %v3228, -1.0
        %v3230 = vmul.f32 %v2971, %v2971
        %v3231 = vmin.f32 16.0, %v3230
        %v3232 = vmul.f32 %v3231, 2.1237322e-06
        %v3233 = vadd.f32 %v3232, 0.00028619796
        %v3234 = vmul.f32 %v3231, %v3233
        %v3235 = vadd.f32 %v3234, 0.0036580483
        %v3236 = vmul.f32 %v3231, %v3235
        %v3237 = vadd.f32 %v3236, 0.05243302
        %v3238 = vmul.f32 %v3231, %v3237
        %v3239 = vadd.f32 %v3238, 0.18741608
        %v3240 = vmul.f32 %v3231, %v3239
        %v3241 = vadd.f32 %v3240, 1.1283791
        %v3242 = vmul.f32 %v2971, %v3241
        %v3243 = vmul.f32 %v3231, 3.8918573e-05
        %v3244 = vadd.f32 %v3243, 0.001143296
        %v3245 = vmul.f32 %v3231, %v3244
        %v3246 = vadd.f32 %v3245, 0.014752088
        %v3247 = vmul.f32 %v3231, %v3246
        %v3248 = vadd.f32 %v3247, 0.112945676
        %v3249 = vmul.f32 %v3231, %v3248
        %v3250 = vadd.f32 %v3249, 0.4994258
        %v3251 = vmul.f32 %v3231, %v3250
        %v3252 = vadd.f32 %v3251, 1.0
        %v3253 = vrcp.pop %v3252
        %v3254 = vmul.f32 %v3252, %v3253
        %v3255 = vsub.f32 1.0, %v3254
        %v3256 = vmul.f32 %v3253, %v3255
        %v3257 = vadd.f32 %v3253, %v3256
        %vm3258 = vweird.f32 %v3252
        %vm3259 = vweird.f32 %v3253
        %vm3260 = vmor %vm3258, %vm3259
        %v3261 = vsel %vm3260, %v3253, %v3257
        %v3262 = vand.u32 2147483647, %v3252
        %vm3263 = vcmp.eq.f32.partialorder %v3262, 8.507059e+37
        %v3264 = vand.u32 %v3252, 2147483648
        %v3265 = vor.u32 1.1754944e-38, %v3264
        %v3266 = vsel %vm3263, %v3265, %v3261
        %v3267 = vmul.f32 %v3242, %v3266
        %v3268 = vmin.f32 %v3267, 1.0
        %v3269 = vmax.f32 %v3268, -1.0
        %v3270 = vmul.f32 %v2972, %v2972
        %v3271 = vmin.f32 16.0, %v3270
        %v3272 = vmul.f32 %v3271, 2.1237322e-06
        %v3273 = vadd.f32 %v3272, 0.00028619796
        %v3274 = vmul.f32 %v3271, %v3273
        %v3275 = vadd.f32 %v3274, 0.0036580483
        %v3276 = vmul.f32 %v3271, %v3275
        %v3277 = vadd.f32 %v3276, 0.05243302
        %v3278 = vmul.f32 %v3271, %v3277
        %v3279 = vadd.f32 %v3278, 0.18741608
        %v3280 = vmul.f32 %v3271, %v3279
        %v3281 = vadd.f32 %v3280, 1.1283791
        %v3282 = vmul.f32 %v2972, %v3281
        %v3283 = vmul.f32 %v3271, 3.8918573e-05
        %v3284 = vadd.f32 %v3283, 0.001143296
        %v3285 = vmul.f32 %v3271, %v3284
        %v3286 = vadd.f32 %v3285, 0.014752088
        %v3287 = vmul.f32 %v3271, %v3286
        %v3288 = vadd.f32 %v3287, 0.112945676
        %v3289 = vmul.f32 %v3271, %v3288
        %v3290 = vadd.f32 %v3289, 0.4994258
        %v3291 = vmul.f32 %v3271, %v3290
        %v3292 = vadd.f32 %v3291, 1.0
        %v3293 = vrcp.pop %v3292
        %v3294 = vmul.f32 %v3292, %v3293
        %v3295 = vsub.f32 1.0, %v3294
        %v3296 = vmul.f32 %v3293, %v3295
        %v3297 = vadd.f32 %v3293, %v3296
        %vm3298 = vweird.f32 %v3292
        %vm3299 = vweird.f32 %v3293
        %vm3300 = vmor %vm3298, %vm3299
        %v3301 = vsel %vm3300, %v3293, %v3297
        %v3302 = vand.u32 2147483647, %v3292
        %vm3303 = vcmp.eq.f32.partialorder %v3302, 8.507059e+37
        %v3304 = vand.u32 %v3292, 2147483648
        %v3305 = vor.u32 1.1754944e-38, %v3304
        %v3306 = vsel %vm3303, %v3305, %v3301
        %v3307 = vmul.f32 %v3282, %v3306
        %v3308 = vmin.f32 %v3307, 1.0
        %v3309 = vmax.f32 %v3308, -1.0
        %v3310 = vmul.f32 %v2973, %v2973
        %v3311 = vmin.f32 16.0, %v3310
        %v3312 = vmul.f32 %v3311, 2.1237322e-06
        %v3313 = vadd.f32 %v3312, 0.00028619796
        %v3314 = vmul.f32 %v3311, %v3313
        %v3315 = vadd.f32 %v3314, 0.0036580483
        %v3316 = vmul.f32 %v3311, %v3315
        %v3317 = vadd.f32 %v3316, 0.05243302
        %v3318 = vmul.f32 %v3311, %v3317
        %v3319 = vadd.f32 %v3318, 0.18741608
        %v3320 = vmul.f32 %v3311, %v3319
        %v3321 = vadd.f32 %v3320, 1.1283791
        %v3322 = vmul.f32 %v2973, %v3321
        %v3323 = vmul.f32 %v3311, 3.8918573e-05
        %v3324 = vadd.f32 %v3323, 0.001143296
        %v3325 = vmul.f32 %v3311, %v3324
        %v3326 = vadd.f32 %v3325, 0.014752088
        %v3327 = vmul.f32 %v3311, %v3326
        %v3328 = vadd.f32 %v3327, 0.112945676
        %v3329 = vmul.f32 %v3311, %v3328
        %v3330 = vadd.f32 %v3329, 0.4994258
        %v3331 = vmul.f32 %v3311, %v3330
        %v3332 = vadd.f32 %v3331, 1.0
        %v3333 = vrcp.pop %v3332
        %v3334 = vmul.f32 %v3332, %v3333
        %v3335 = vsub.f32 1.0, %v3334
        %v3336 = vmul.f32 %v3333, %v3335
        %v3337 = vadd.f32 %v3333, %v3336
        %vm3338 = vweird.f32 %v3332
        %vm3339 = vweird.f32 %v3333
        %vm3340 = vmor %vm3338, %vm3339
        %v3341 = vsel %vm3340, %v3333, %v3337
        %v3342 = vand.u32 2147483647, %v3332
        %vm3343 = vcmp.eq.f32.partialorder %v3342, 8.507059e+37
        %v3344 = vand.u32 %v3332, 2147483648
        %v3345 = vor.u32 1.1754944e-38, %v3344
        %v3346 = vsel %vm3343, %v3345, %v3341
        %v3347 = vmul.f32 %v3322, %v3346
        %v3348 = vmin.f32 %v3347, 1.0
        %v3349 = vmax.f32 %v3348, -1.0
        %v3350 = vmul.f32 %v2974, %v2974
        %v3351 = vmin.f32 16.0, %v3350
        %v3352 = vmul.f32 %v3351, 2.1237322e-06
        %v3353 = vadd.f32 %v3352, 0.00028619796
        %v3354 = vmul.f32 %v3351, %v3353
        %v3355 = vadd.f32 %v3354, 0.0036580483
        %v3356 = vmul.f32 %v3351, %v3355
        %v3357 = vadd.f32 %v3356, 0.05243302
        %v3358 = vmul.f32 %v3351, %v3357
        %v3359 = vadd.f32 %v3358, 0.18741608
        %v3360 = vmul.f32 %v3351, %v3359
        %v3361 = vadd.f32 %v3360, 1.1283791
        %v3362 = vmul.f32 %v2974, %v3361
        %v3363 = vmul.f32 %v3351, 3.8918573e-05
        %v3364 = vadd.f32 %v3363, 0.001143296
        %v3365 = vmul.f32 %v3351, %v3364
        %v3366 = vadd.f32 %v3365, 0.014752088
        %v3367 = vmul.f32 %v3351, %v3366
        %v3368 = vadd.f32 %v3367, 0.112945676
        %v3369 = vmul.f32 %v3351, %v3368
        %v3370 = vadd.f32 %v3369, 0.4994258
        %v3371 = vmul.f32 %v3351, %v3370
        %v3372 = vadd.f32 %v3371, 1.0
        %v3373 = vrcp.pop %v3372
        %v3374 = vmul.f32 %v3372, %v3373
        %v3375 = vsub.f32 1.0, %v3374
        %v3376 = vmul.f32 %v3373, %v3375
        %v3377 = vadd.f32 %v3373, %v3376
        %vm3378 = vweird.f32 %v3372
        %vm3379 = vweird.f32 %v3373
        %vm3380 = vmor %vm3378, %vm3379
        %v3381 = vsel %vm3380, %v3373, %v3377
        %v3382 = vand.u32 2147483647, %v3372
        %vm3383 = vcmp.eq.f32.partialorder %v3382, 8.507059e+37
        %v3384 = vand.u32 %v3372, 2147483648
        %v3385 = vor.u32 1.1754944e-38, %v3384
        %v3386 = vsel %vm3383, %v3385, %v3381
        %v3387 = vmul.f32 %v3362, %v3386
        %v3388 = vmin.f32 %v3387, 1.0
        %v3389 = vmax.f32 %v3388, -1.0
        %v3390 = vmul.f32 %v2975, %v2975
        %v3391 = vmin.f32 16.0, %v3390
        %v3392 = vmul.f32 %v3391, 2.1237322e-06
        %v3393 = vadd.f32 %v3392, 0.00028619796
        %v3394 = vmul.f32 %v3391, %v3393
        %v3395 = vadd.f32 %v3394, 0.0036580483
        %v3396 = vmul.f32 %v3391, %v3395
        %v3397 = vadd.f32 %v3396, 0.05243302
        %v3398 = vmul.f32 %v3391, %v3397
        %v3399 = vadd.f32 %v3398, 0.18741608
        %v3400 = vmul.f32 %v3391, %v3399
        %v3401 = vadd.f32 %v3400, 1.1283791
        %v3402 = vmul.f32 %v2975, %v3401
        %v3403 = vmul.f32 %v3391, 3.8918573e-05
        %v3404 = vadd.f32 %v3403, 0.001143296
        %v3405 = vmul.f32 %v3391, %v3404
        %v3406 = vadd.f32 %v3405, 0.014752088
        %v3407 = vmul.f32 %v3391, %v3406
        %v3408 = vadd.f32 %v3407, 0.112945676
        %v3409 = vmul.f32 %v3391, %v3408
        %v3410 = vadd.f32 %v3409, 0.4994258
        %v3411 = vmul.f32 %v3391, %v3410
        %v3412 = vadd.f32 %v3411, 1.0
        %v3413 = vrcp.pop %v3412
        %v3414 = vmul.f32 %v3412, %v3413
        %v3415 = vsub.f32 1.0, %v3414
        %v3416 = vmul.f32 %v3413, %v3415
        %v3417 = vadd.f32 %v3413, %v3416
        %vm3418 = vweird.f32 %v3412
        %vm3419 = vweird.f32 %v3413
        %vm3420 = vmor %vm3418, %vm3419
        %v3421 = vsel %vm3420, %v3413, %v3417
        %v3422 = vand.u32 2147483647, %v3412
        %vm3423 = vcmp.eq.f32.partialorder %v3422, 8.507059e+37
        %v3424 = vand.u32 %v3412, 2147483648
        %v3425 = vor.u32 1.1754944e-38, %v3424
        %v3426 = vsel %vm3423, %v3425, %v3421
        %v3427 = vmul.f32 %v3402, %v3426
        %v3428 = vmin.f32 %v3427, 1.0
        %v3429 = vmax.f32 %v3428, -1.0
        %v3430 = vmul.f32 %v2976, %v2976
        %v3431 = vmin.f32 16.0, %v3430
        %v3432 = vmul.f32 %v3431, 2.1237322e-06
        %v3433 = vadd.f32 %v3432, 0.00028619796
        %v3434 = vmul.f32 %v3431, %v3433
        %v3435 = vadd.f32 %v3434, 0.0036580483
        %v3436 = vmul.f32 %v3431, %v3435
        %v3437 = vadd.f32 %v3436, 0.05243302
        %v3438 = vmul.f32 %v3431, %v3437
        %v3439 = vadd.f32 %v3438, 0.18741608
        %v3440 = vmul.f32 %v3431, %v3439
        %v3441 = vadd.f32 %v3440, 1.1283791
        %v3442 = vmul.f32 %v2976, %v3441
        %v3443 = vmul.f32 %v3431, 3.8918573e-05
        %v3444 = vadd.f32 %v3443, 0.001143296
        %v3445 = vmul.f32 %v3431, %v3444
        %v3446 = vadd.f32 %v3445, 0.014752088
        %v3447 = vmul.f32 %v3431, %v3446
        %v3448 = vadd.f32 %v3447, 0.112945676
        %v3449 = vmul.f32 %v3431, %v3448
        %v3450 = vadd.f32 %v3449, 0.4994258
        %v3451 = vmul.f32 %v3431, %v3450
        %v3452 = vadd.f32 %v3451, 1.0
        %v3453 = vrcp.pop %v3452
        %v3454 = vmul.f32 %v3452, %v3453
        %v3455 = vsub.f32 1.0, %v3454
        %v3456 = vmul.f32 %v3453, %v3455
        %v3457 = vadd.f32 %v3453, %v3456
        %vm3458 = vweird.f32 %v3452
        %vm3459 = vweird.f32 %v3453
        %vm3460 = vmor %vm3458, %vm3459
        %v3461 = vsel %vm3460, %v3453, %v3457
        %v3462 = vand.u32 2147483647, %v3452
        %vm3463 = vcmp.eq.f32.partialorder %v3462, 8.507059e+37
        %v3464 = vand.u32 %v3452, 2147483648
        %v3465 = vor.u32 1.1754944e-38, %v3464
        %v3466 = vsel %vm3463, %v3465, %v3461
        %v3467 = vmul.f32 %v3442, %v3466
        %v3468 = vmin.f32 %v3467, 1.0
        %v3469 = vmax.f32 %v3468, -1.0
        %v3470 = vmul.f32 %v2977, %v2977
        %v3471 = vmin.f32 16.0, %v3470
        %v3472 = vmul.f32 %v3471, 2.1237322e-06
        %v3473 = vadd.f32 %v3472, 0.00028619796
        %v3474 = vmul.f32 %v3471, %v3473
        %v3475 = vadd.f32 %v3474, 0.0036580483
        %v3476 = vmul.f32 %v3471, %v3475
        %v3477 = vadd.f32 %v3476, 0.05243302
        %v3478 = vmul.f32 %v3471, %v3477
        %v3479 = vadd.f32 %v3478, 0.18741608
        %v3480 = vmul.f32 %v3471, %v3479
        %v3481 = vadd.f32 %v3480, 1.1283791
        %v3482 = vmul.f32 %v2977, %v3481
        %v3483 = vmul.f32 %v3471, 3.8918573e-05
        %v3484 = vadd.f32 %v3483, 0.001143296
        %v3485 = vmul.f32 %v3471, %v3484
        %v3486 = vadd.f32 %v3485, 0.014752088
        %v3487 = vmul.f32 %v3471, %v3486
        %v3488 = vadd.f32 %v3487, 0.112945676
        %v3489 = vmul.f32 %v3471, %v3488
        %v3490 = vadd.f32 %v3489, 0.4994258
        %v3491 = vmul.f32 %v3471, %v3490
        %v3492 = vadd.f32 %v3491, 1.0
        %v3493 = vrcp.pop %v3492
        %v3494 = vmul.f32 %v3492, %v3493
        %v3495 = vsub.f32 1.0, %v3494
        %v3496 = vmul.f32 %v3493, %v3495
        %v3497 = vadd.f32 %v3493, %v3496
        %vm3498 = vweird.f32 %v3492
        %vm3499 = vweird.f32 %v3493
        %vm3500 = vmor %vm3498, %vm3499
        %v3501 = vsel %vm3500, %v3493, %v3497
        %v3502 = vand.u32 2147483647, %v3492
        %vm3503 = vcmp.eq.f32.partialorder %v3502, 8.507059e+37
        %v3504 = vand.u32 %v3492, 2147483648
        %v3505 = vor.u32 1.1754944e-38, %v3504
        %v3506 = vsel %vm3503, %v3505, %v3501
        %v3507 = vmul.f32 %v3482, %v3506
        %v3508 = vmin.f32 %v3507, 1.0
        %v3509 = vmax.f32 %v3508, -1.0
        %v3510 = vmul.f32 %v2978, %v2978
        %v3511 = vmin.f32 16.0, %v3510
        %v3512 = vmul.f32 %v3511, 2.1237322e-06
        %v3513 = vadd.f32 %v3512, 0.00028619796
        %v3514 = vmul.f32 %v3511, %v3513
        %v3515 = vadd.f32 %v3514, 0.0036580483
        %v3516 = vmul.f32 %v3511, %v3515
        %v3517 = vadd.f32 %v3516, 0.05243302
        %v3518 = vmul.f32 %v3511, %v3517
        %v3519 = vadd.f32 %v3518, 0.18741608
        %v3520 = vmul.f32 %v3511, %v3519
        %v3521 = vadd.f32 %v3520, 1.1283791
        %v3522 = vmul.f32 %v2978, %v3521
        %v3523 = vmul.f32 %v3511, 3.8918573e-05
        %v3524 = vadd.f32 %v3523, 0.001143296
        %v3525 = vmul.f32 %v3511, %v3524
        %v3526 = vadd.f32 %v3525, 0.014752088
        %v3527 = vmul.f32 %v3511, %v3526
        %v3528 = vadd.f32 %v3527, 0.112945676
        %v3529 = vmul.f32 %v3511, %v3528
        %v3530 = vadd.f32 %v3529, 0.4994258
        %v3531 = vmul.f32 %v3511, %v3530
        %v3532 = vadd.f32 %v3531, 1.0
        %v3533 = vrcp.pop %v3532
        %v3534 = vmul.f32 %v3532, %v3533
        %v3535 = vsub.f32 1.0, %v3534
        %v3536 = vmul.f32 %v3533, %v3535
        %v3537 = vadd.f32 %v3533, %v3536
        %vm3538 = vweird.f32 %v3532
        %vm3539 = vweird.f32 %v3533
        %vm3540 = vmor %vm3538, %vm3539
        %v3541 = vsel %vm3540, %v3533, %v3537
        %v3542 = vand.u32 2147483647, %v3532
        %vm3543 = vcmp.eq.f32.partialorder %v3542, 8.507059e+37
        %v3544 = vand.u32 %v3532, 2147483648
        %v3545 = vor.u32 1.1754944e-38, %v3544
        %v3546 = vsel %vm3543, %v3545, %v3541
        %v3547 = vmul.f32 %v3522, %v3546
        %v3548 = vmin.f32 %v3547, 1.0
        %v3549 = vmax.f32 %v3548, -1.0
        %v3550 = vmul.f32 %v2979, %v2979
        %v3551 = vmin.f32 16.0, %v3550
        %v3552 = vmul.f32 %v3551, 2.1237322e-06
        %v3553 = vadd.f32 %v3552, 0.00028619796
        %v3554 = vmul.f32 %v3551, %v3553
        %v3555 = vadd.f32 %v3554, 0.0036580483
        %v3556 = vmul.f32 %v3551, %v3555
        %v3557 = vadd.f32 %v3556, 0.05243302
        %v3558 = vmul.f32 %v3551, %v3557
        %v3559 = vadd.f32 %v3558, 0.18741608
        %v3560 = vmul.f32 %v3551, %v3559
        %v3561 = vadd.f32 %v3560, 1.1283791
        %v3562 = vmul.f32 %v2979, %v3561
        %v3563 = vmul.f32 %v3551, 3.8918573e-05
        %v3564 = vadd.f32 %v3563, 0.001143296
        %v3565 = vmul.f32 %v3551, %v3564
        %v3566 = vadd.f32 %v3565, 0.014752088
        %v3567 = vmul.f32 %v3551, %v3566
        %v3568 = vadd.f32 %v3567, 0.112945676
        %v3569 = vmul.f32 %v3551, %v3568
        %v3570 = vadd.f32 %v3569, 0.4994258
        %v3571 = vmul.f32 %v3551, %v3570
        %v3572 = vadd.f32 %v3571, 1.0
        %v3573 = vrcp.pop %v3572
        %v3574 = vmul.f32 %v3572, %v3573
        %v3575 = vsub.f32 1.0, %v3574
        %v3576 = vmul.f32 %v3573, %v3575
        %v3577 = vadd.f32 %v3573, %v3576
        %vm3578 = vweird.f32 %v3572
        %vm3579 = vweird.f32 %v3573
        %vm3580 = vmor %vm3578, %vm3579
        %v3581 = vsel %vm3580, %v3573, %v3577
        %v3582 = vand.u32 2147483647, %v3572
        %vm3583 = vcmp.eq.f32.partialorder %v3582, 8.507059e+37
        %v3584 = vand.u32 %v3572, 2147483648
        %v3585 = vor.u32 1.1754944e-38, %v3584
        %v3586 = vsel %vm3583, %v3585, %v3581
        %v3587 = vmul.f32 %v3562, %v3586
        %v3588 = vmin.f32 %v3587, 1.0
        %v3589 = vmax.f32 %v3588, -1.0
        %v3590 = vmul.f32 %v2980, %v2980
        %v3591 = vmin.f32 16.0, %v3590
        %v3592 = vmul.f32 %v3591, 2.1237322e-06
        %v3593 = vadd.f32 %v3592, 0.00028619796
        %v3594 = vmul.f32 %v3591, %v3593
        %v3595 = vadd.f32 %v3594, 0.0036580483
        %v3596 = vmul.f32 %v3591, %v3595
        %v3597 = vadd.f32 %v3596, 0.05243302
        %v3598 = vmul.f32 %v3591, %v3597
        %v3599 = vadd.f32 %v3598, 0.18741608
        %v3600 = vmul.f32 %v3591, %v3599
        %v3601 = vadd.f32 %v3600, 1.1283791
        %v3602 = vmul.f32 %v2980, %v3601
        %v3603 = vmul.f32 %v3591, 3.8918573e-05
        %v3604 = vadd.f32 %v3603, 0.001143296
        %v3605 = vmul.f32 %v3591, %v3604
        %v3606 = vadd.f32 %v3605, 0.014752088
        %v3607 = vmul.f32 %v3591, %v3606
        %v3608 = vadd.f32 %v3607, 0.112945676
        %v3609 = vmul.f32 %v3591, %v3608
        %v3610 = vadd.f32 %v3609, 0.4994258
        %v3611 = vmul.f32 %v3591, %v3610
        %v3612 = vadd.f32 %v3611, 1.0
        %v3613 = vrcp.pop %v3612
        %v3614 = vmul.f32 %v3612, %v3613
        %v3615 = vsub.f32 1.0, %v3614
        %v3616 = vmul.f32 %v3613, %v3615
        %v3617 = vadd.f32 %v3613, %v3616
        %vm3618 = vweird.f32 %v3612
        %vm3619 = vweird.f32 %v3613
        %vm3620 = vmor %vm3618, %vm3619
        %v3621 = vsel %vm3620, %v3613, %v3617
        %v3622 = vand.u32 2147483647, %v3612
        %vm3623 = vcmp.eq.f32.partialorder %v3622, 8.507059e+37
        %v3624 = vand.u32 %v3612, 2147483648
        %v3625 = vor.u32 1.1754944e-38, %v3624
        %v3626 = vsel %vm3623, %v3625, %v3621
        %v3627 = vmul.f32 %v3602, %v3626
        %v3628 = vmin.f32 %v3627, 1.0
        %v3629 = vmax.f32 %v3628, -1.0
        %v3630 = vmul.f32 %v2981, %v2981
        %v3631 = vmin.f32 16.0, %v3630
        %v3632 = vmul.f32 %v3631, 2.1237322e-06
        %v3633 = vadd.f32 %v3632, 0.00028619796
        %v3634 = vmul.f32 %v3631, %v3633
        %v3635 = vadd.f32 %v3634, 0.0036580483
        %v3636 = vmul.f32 %v3631, %v3635
        %v3637 = vadd.f32 %v3636, 0.05243302
        %v3638 = vmul.f32 %v3631, %v3637
        %v3639 = vadd.f32 %v3638, 0.18741608
        %v3640 = vmul.f32 %v3631, %v3639
        %v3641 = vadd.f32 %v3640, 1.1283791
        %v3642 = vmul.f32 %v2981, %v3641
        %v3643 = vmul.f32 %v3631, 3.8918573e-05
        %v3644 = vadd.f32 %v3643, 0.001143296
        %v3645 = vmul.f32 %v3631, %v3644
        %v3646 = vadd.f32 %v3645, 0.014752088
        %v3647 = vmul.f32 %v3631, %v3646
        %v3648 = vadd.f32 %v3647, 0.112945676
        %v3649 = vmul.f32 %v3631, %v3648
        %v3650 = vadd.f32 %v3649, 0.4994258
        %v3651 = vmul.f32 %v3631, %v3650
        %v3652 = vadd.f32 %v3651, 1.0
        %v3653 = vrcp.pop %v3652
        %v3654 = vmul.f32 %v3652, %v3653
        %v3655 = vsub.f32 1.0, %v3654
        %v3656 = vmul.f32 %v3653, %v3655
        %v3657 = vadd.f32 %v3653, %v3656
        %vm3658 = vweird.f32 %v3652
        %vm3659 = vweird.f32 %v3653
        %vm3660 = vmor %vm3658, %vm3659
        %v3661 = vsel %vm3660, %v3653, %v3657
        %v3662 = vand.u32 2147483647, %v3652
        %vm3663 = vcmp.eq.f32.partialorder %v3662, 8.507059e+37
        %v3664 = vand.u32 %v3652, 2147483648
        %v3665 = vor.u32 1.1754944e-38, %v3664
        %v3666 = vsel %vm3663, %v3665, %v3661
        %v3667 = vmul.f32 %v3642, %v3666
        %v3668 = vmin.f32 %v3667, 1.0
        %v3669 = vmax.f32 %v3668, -1.0
        %v3670 = vmul.f32 %v2982, %v2982
        %v3671 = vmin.f32 16.0, %v3670
        %v3672 = vmul.f32 %v3671, 2.1237322e-06
        %v3673 = vadd.f32 %v3672, 0.00028619796
        %v3674 = vmul.f32 %v3671, %v3673
        %v3675 = vadd.f32 %v3674, 0.0036580483
        %v3676 = vmul.f32 %v3671, %v3675
        %v3677 = vadd.f32 %v3676, 0.05243302
        %v3678 = vmul.f32 %v3671, %v3677
        %v3679 = vadd.f32 %v3678, 0.18741608
        %v3680 = vmul.f32 %v3671, %v3679
        %v3681 = vadd.f32 %v3680, 1.1283791
        %v3682 = vmul.f32 %v2982, %v3681
        %v3683 = vmul.f32 %v3671, 3.8918573e-05
        %v3684 = vadd.f32 %v3683, 0.001143296
        %v3685 = vmul.f32 %v3671, %v3684
        %v3686 = vadd.f32 %v3685, 0.014752088
        %v3687 = vmul.f32 %v3671, %v3686
        %v3688 = vadd.f32 %v3687, 0.112945676
        %v3689 = vmul.f32 %v3671, %v3688
        %v3690 = vadd.f32 %v3689, 0.4994258
        %v3691 = vmul.f32 %v3671, %v3690
        %v3692 = vadd.f32 %v3691, 1.0
        %v3693 = vrcp.pop %v3692
        %v3694 = vmul.f32 %v3692, %v3693
        %v3695 = vsub.f32 1.0, %v3694
        %v3696 = vmul.f32 %v3693, %v3695
        %v3697 = vadd.f32 %v3693, %v3696
        %vm3698 = vweird.f32 %v3692
        %vm3699 = vweird.f32 %v3693
        %vm3700 = vmor %vm3698, %vm3699
        %v3701 = vsel %vm3700, %v3693, %v3697
        %v3702 = vand.u32 2147483647, %v3692
        %vm3703 = vcmp.eq.f32.partialorder %v3702, 8.507059e+37
        %v3704 = vand.u32 %v3692, 2147483648
        %v3705 = vor.u32 1.1754944e-38, %v3704
        %v3706 = vsel %vm3703, %v3705, %v3701
        %v3707 = vmul.f32 %v3682, %v3706
        %v3708 = vmin.f32 %v3707, 1.0
        %v3709 = vmax.f32 %v3708, -1.0
        %v3710 = vmul.f32 %v2983, %v2983
        %v3711 = vmin.f32 16.0, %v3710
        %v3712 = vmul.f32 %v3711, 2.1237322e-06
        %v3713 = vadd.f32 %v3712, 0.00028619796
        %v3714 = vmul.f32 %v3711, %v3713
        %v3715 = vadd.f32 %v3714, 0.0036580483
        %v3716 = vmul.f32 %v3711, %v3715
        %v3717 = vadd.f32 %v3716, 0.05243302
        %v3718 = vmul.f32 %v3711, %v3717
        %v3719 = vadd.f32 %v3718, 0.18741608
        %v3720 = vmul.f32 %v3711, %v3719
        %v3721 = vadd.f32 %v3720, 1.1283791
        %v3722 = vmul.f32 %v2983, %v3721
        %v3723 = vmul.f32 %v3711, 3.8918573e-05
        %v3724 = vadd.f32 %v3723, 0.001143296
        %v3725 = vmul.f32 %v3711, %v3724
        %v3726 = vadd.f32 %v3725, 0.014752088
        %v3727 = vmul.f32 %v3711, %v3726
        %v3728 = vadd.f32 %v3727, 0.112945676
        %v3729 = vmul.f32 %v3711, %v3728
        %v3730 = vadd.f32 %v3729, 0.4994258
        %v3731 = vmul.f32 %v3711, %v3730
        %v3732 = vadd.f32 %v3731, 1.0
        %v3733 = vrcp.pop %v3732
        %v3734 = vmul.f32 %v3732, %v3733
        %v3735 = vsub.f32 1.0, %v3734
        %v3736 = vmul.f32 %v3733, %v3735
        %v3737 = vadd.f32 %v3733, %v3736
        %vm3738 = vweird.f32 %v3732
        %vm3739 = vweird.f32 %v3733
        %vm3740 = vmor %vm3738, %vm3739
        %v3741 = vsel %vm3740, %v3733, %v3737
        %v3742 = vand.u32 2147483647, %v3732
        %vm3743 = vcmp.eq.f32.partialorder %v3742, 8.507059e+37
        %v3744 = vand.u32 %v3732, 2147483648
        %v3745 = vor.u32 1.1754944e-38, %v3744
        %v3746 = vsel %vm3743, %v3745, %v3741
        %v3747 = vmul.f32 %v3722, %v3746
        %v3748 = vmin.f32 %v3747, 1.0
        %v3749 = vmax.f32 %v3748, -1.0
        %v3750 = vmul.f32 %v2984, %v2984
        %v3751 = vmin.f32 16.0, %v3750
        %v3752 = vmul.f32 %v3751, 2.1237322e-06
        %v3753 = vadd.f32 %v3752, 0.00028619796
        %v3754 = vmul.f32 %v3751, %v3753
        %v3755 = vadd.f32 %v3754, 0.0036580483
        %v3756 = vmul.f32 %v3751, %v3755
        %v3757 = vadd.f32 %v3756, 0.05243302
        %v3758 = vmul.f32 %v3751, %v3757
        %v3759 = vadd.f32 %v3758, 0.18741608
        %v3760 = vmul.f32 %v3751, %v3759
        %v3761 = vadd.f32 %v3760, 1.1283791
        %v3762 = vmul.f32 %v2984, %v3761
        %v3763 = vmul.f32 %v3751, 3.8918573e-05
        %v3764 = vadd.f32 %v3763, 0.001143296
        %v3765 = vmul.f32 %v3751, %v3764
        %v3766 = vadd.f32 %v3765, 0.014752088
        %v3767 = vmul.f32 %v3751, %v3766
        %v3768 = vadd.f32 %v3767, 0.112945676
        %v3769 = vmul.f32 %v3751, %v3768
        %v3770 = vadd.f32 %v3769, 0.4994258
        %v3771 = vmul.f32 %v3751, %v3770
        %v3772 = vadd.f32 %v3771, 1.0
        %v3773 = vrcp.pop %v3772
        %v3774 = vmul.f32 %v3772, %v3773
        %v3775 = vsub.f32 1.0, %v3774
        %v3776 = vmul.f32 %v3773, %v3775
        %v3777 = vadd.f32 %v3773, %v3776
        %vm3778 = vweird.f32 %v3772
        %vm3779 = vweird.f32 %v3773
        %vm3780 = vmor %vm3778, %vm3779
        %v3781 = vsel %vm3780, %v3773, %v3777
        %v3782 = vand.u32 2147483647, %v3772
        %vm3783 = vcmp.eq.f32.partialorder %v3782, 8.507059e+37
        %v3784 = vand.u32 %v3772, 2147483648
        %v3785 = vor.u32 1.1754944e-38, %v3784
        %v3786 = vsel %vm3783, %v3785, %v3781
        %v3787 = vmul.f32 %v3762, %v3786
        %v3788 = vmin.f32 %v3787, 1.0
        %v3789 = vmax.f32 %v3788, -1.0
        %v3790 = vmul.f32 %v2985, %v2985
        %v3791 = vmin.f32 16.0, %v3790
        %v3792 = vmul.f32 %v3791, 2.1237322e-06
        %v3793 = vadd.f32 %v3792, 0.00028619796
        %v3794 = vmul.f32 %v3791, %v3793
        %v3795 = vadd.f32 %v3794, 0.0036580483
        %v3796 = vmul.f32 %v3791, %v3795
        %v3797 = vadd.f32 %v3796, 0.05243302
        %v3798 = vmul.f32 %v3791, %v3797
        %v3799 = vadd.f32 %v3798, 0.18741608
        %v3800 = vmul.f32 %v3791, %v3799
        %v3801 = vadd.f32 %v3800, 1.1283791
        %v3802 = vmul.f32 %v2985, %v3801
        %v3803 = vmul.f32 %v3791, 3.8918573e-05
        %v3804 = vadd.f32 %v3803, 0.001143296
        %v3805 = vmul.f32 %v3791, %v3804
        %v3806 = vadd.f32 %v3805, 0.014752088
        %v3807 = vmul.f32 %v3791, %v3806
        %v3808 = vadd.f32 %v3807, 0.112945676
        %v3809 = vmul.f32 %v3791, %v3808
        %v3810 = vadd.f32 %v3809, 0.4994258
        %v3811 = vmul.f32 %v3791, %v3810
        %v3812 = vadd.f32 %v3811, 1.0
        %v3813 = vrcp.pop %v3812
        %v3814 = vmul.f32 %v3812, %v3813
        %v3815 = vsub.f32 1.0, %v3814
        %v3816 = vmul.f32 %v3813, %v3815
        %v3817 = vadd.f32 %v3813, %v3816
        %vm3818 = vweird.f32 %v3812
        %vm3819 = vweird.f32 %v3813
        %vm3820 = vmor %vm3818, %vm3819
        %v3821 = vsel %vm3820, %v3813, %v3817
        %v3822 = vand.u32 2147483647, %v3812
        %vm3823 = vcmp.eq.f32.partialorder %v3822, 8.507059e+37
        %v3824 = vand.u32 %v3812, 2147483648
        %v3825 = vor.u32 1.1754944e-38, %v3824
        %v3826 = vsel %vm3823, %v3825, %v3821
        %v3827 = vmul.f32 %v3802, %v3826
        %v3828 = vmin.f32 %v3827, 1.0
        %v3829 = vmax.f32 %v3828, -1.0
        %v3830 = vmul.f32 %v2986, %v2986
        %v3831 = vmin.f32 16.0, %v3830
        %v3832 = vmul.f32 %v3831, 2.1237322e-06
        %v3833 = vadd.f32 %v3832, 0.00028619796
        %v3834 = vmul.f32 %v3831, %v3833
        %v3835 = vadd.f32 %v3834, 0.0036580483
        %v3836 = vmul.f32 %v3831, %v3835
        %v3837 = vadd.f32 %v3836, 0.05243302
        %v3838 = vmul.f32 %v3831, %v3837
        %v3839 = vadd.f32 %v3838, 0.18741608
        %v3840 = vmul.f32 %v3831, %v3839
        %v3841 = vadd.f32 %v3840, 1.1283791
        %v3842 = vmul.f32 %v2986, %v3841
        %v3843 = vmul.f32 %v3831, 3.8918573e-05
        %v3844 = vadd.f32 %v3843, 0.001143296
        %v3845 = vmul.f32 %v3831, %v3844
        %v3846 = vadd.f32 %v3845, 0.014752088
        %v3847 = vmul.f32 %v3831, %v3846
        %v3848 = vadd.f32 %v3847, 0.112945676
        %v3849 = vmul.f32 %v3831, %v3848
        %v3850 = vadd.f32 %v3849, 0.4994258
        %v3851 = vmul.f32 %v3831, %v3850
        %v3852 = vadd.f32 %v3851, 1.0
        %v3853 = vrcp.pop %v3852
        %v3854 = vmul.f32 %v3852, %v3853
        %v3855 = vsub.f32 1.0, %v3854
        %v3856 = vmul.f32 %v3853, %v3855
        %v3857 = vadd.f32 %v3853, %v3856
        %vm3858 = vweird.f32 %v3852
        %vm3859 = vweird.f32 %v3853
        %vm3860 = vmor %vm3858, %vm3859
        %v3861 = vsel %vm3860, %v3853, %v3857
        %v3862 = vand.u32 2147483647, %v3852
        %vm3863 = vcmp.eq.f32.partialorder %v3862, 8.507059e+37
        %v3864 = vand.u32 %v3852, 2147483648
        %v3865 = vor.u32 1.1754944e-38, %v3864
        %v3866 = vsel %vm3863, %v3865, %v3861
        %v3867 = vmul.f32 %v3842, %v3866
        %v3868 = vmin.f32 %v3867, 1.0
        %v3869 = vmax.f32 %v3868, -1.0
        %v3870 = vmul.f32 %v2987, %v2987
        %v3871 = vmin.f32 16.0, %v3870
        %v3872 = vmul.f32 %v3871, 2.1237322e-06
        %v3873 = vadd.f32 %v3872, 0.00028619796
        %v3874 = vmul.f32 %v3871, %v3873
        %v3875 = vadd.f32 %v3874, 0.0036580483
        %v3876 = vmul.f32 %v3871, %v3875
        %v3877 = vadd.f32 %v3876, 0.05243302
        %v3878 = vmul.f32 %v3871, %v3877
        %v3879 = vadd.f32 %v3878, 0.18741608
        %v3880 = vmul.f32 %v3871, %v3879
        %v3881 = vadd.f32 %v3880, 1.1283791
        %v3882 = vmul.f32 %v2987, %v3881
        %v3883 = vmul.f32 %v3871, 3.8918573e-05
        %v3884 = vadd.f32 %v3883, 0.001143296
        %v3885 = vmul.f32 %v3871, %v3884
        %v3886 = vadd.f32 %v3885, 0.014752088
        %v3887 = vmul.f32 %v3871, %v3886
        %v3888 = vadd.f32 %v3887, 0.112945676
        %v3889 = vmul.f32 %v3871, %v3888
        %v3890 = vadd.f32 %v3889, 0.4994258
        %v3891 = vmul.f32 %v3871, %v3890
        %v3892 = vadd.f32 %v3891, 1.0
        %v3893 = vrcp.pop %v3892
        %v3894 = vmul.f32 %v3892, %v3893
        %v3895 = vsub.f32 1.0, %v3894
        %v3896 = vmul.f32 %v3893, %v3895
        %v3897 = vadd.f32 %v3893, %v3896
        %vm3898 = vweird.f32 %v3892
        %vm3899 = vweird.f32 %v3893
        %vm3900 = vmor %vm3898, %vm3899
        %v3901 = vsel %vm3900, %v3893, %v3897
        %v3902 = vand.u32 2147483647, %v3892
        %vm3903 = vcmp.eq.f32.partialorder %v3902, 8.507059e+37
        %v3904 = vand.u32 %v3892, 2147483648
        %v3905 = vor.u32 1.1754944e-38, %v3904
        %v3906 = vsel %vm3903, %v3905, %v3901
        %v3907 = vmul.f32 %v3882, %v3906
        %v3908 = vmin.f32 %v3907, 1.0
        %v3909 = vmax.f32 %v3908, -1.0
        %v3910 = vmul.f32 %v2988, %v2988
        %v3911 = vmin.f32 16.0, %v3910
        %v3912 = vmul.f32 %v3911, 2.1237322e-06
        %v3913 = vadd.f32 %v3912, 0.00028619796
        %v3914 = vmul.f32 %v3911, %v3913
        %v3915 = vadd.f32 %v3914, 0.0036580483
        %v3916 = vmul.f32 %v3911, %v3915
        %v3917 = vadd.f32 %v3916, 0.05243302
        %v3918 = vmul.f32 %v3911, %v3917
        %v3919 = vadd.f32 %v3918, 0.18741608
        %v3920 = vmul.f32 %v3911, %v3919
        %v3921 = vadd.f32 %v3920, 1.1283791
        %v3922 = vmul.f32 %v2988, %v3921
        %v3923 = vmul.f32 %v3911, 3.8918573e-05
        %v3924 = vadd.f32 %v3923, 0.001143296
        %v3925 = vmul.f32 %v3911, %v3924
        %v3926 = vadd.f32 %v3925, 0.014752088
        %v3927 = vmul.f32 %v3911, %v3926
        %v3928 = vadd.f32 %v3927, 0.112945676
        %v3929 = vmul.f32 %v3911, %v3928
        %v3930 = vadd.f32 %v3929, 0.4994258
        %v3931 = vmul.f32 %v3911, %v3930
        %v3932 = vadd.f32 %v3931, 1.0
        %v3933 = vrcp.pop %v3932
        %v3934 = vmul.f32 %v3932, %v3933
        %v3935 = vsub.f32 1.0, %v3934
        %v3936 = vmul.f32 %v3933, %v3935
        %v3937 = vadd.f32 %v3933, %v3936
        %vm3938 = vweird.f32 %v3932
        %vm3939 = vweird.f32 %v3933
        %vm3940 = vmor %vm3938, %vm3939
        %v3941 = vsel %vm3940, %v3933, %v3937
        %v3942 = vand.u32 2147483647, %v3932
        %vm3943 = vcmp.eq.f32.partialorder %v3942, 8.507059e+37
        %v3944 = vand.u32 %v3932, 2147483648
        %v3945 = vor.u32 1.1754944e-38, %v3944
        %v3946 = vsel %vm3943, %v3945, %v3941
        %v3947 = vmul.f32 %v3922, %v3946
        %v3948 = vmin.f32 %v3947, 1.0
        %v3949 = vmax.f32 %v3948, -1.0
        %v3950 = vmul.f32 %v2989, %v2989
        %v3951 = vmin.f32 16.0, %v3950
        %v3952 = vmul.f32 %v3951, 2.1237322e-06
        %v3953 = vadd.f32 %v3952, 0.00028619796
        %v3954 = vmul.f32 %v3951, %v3953
        %v3955 = vadd.f32 %v3954, 0.0036580483
        %v3956 = vmul.f32 %v3951, %v3955
        %v3957 = vadd.f32 %v3956, 0.05243302
        %v3958 = vmul.f32 %v3951, %v3957
        %v3959 = vadd.f32 %v3958, 0.18741608
        %v3960 = vmul.f32 %v3951, %v3959
        %v3961 = vadd.f32 %v3960, 1.1283791
        %v3962 = vmul.f32 %v2989, %v3961
        %v3963 = vmul.f32 %v3951, 3.8918573e-05
        %v3964 = vadd.f32 %v3963, 0.001143296
        %v3965 = vmul.f32 %v3951, %v3964
        %v3966 = vadd.f32 %v3965, 0.014752088
        %v3967 = vmul.f32 %v3951, %v3966
        %v3968 = vadd.f32 %v3967, 0.112945676
        %v3969 = vmul.f32 %v3951, %v3968
        %v3970 = vadd.f32 %v3969, 0.4994258
        %v3971 = vmul.f32 %v3951, %v3970
        %v3972 = vadd.f32 %v3971, 1.0
        %v3973 = vrcp.pop %v3972
        %v3974 = vmul.f32 %v3972, %v3973
        %v3975 = vsub.f32 1.0, %v3974
        %v3976 = vmul.f32 %v3973, %v3975
        %v3977 = vadd.f32 %v3973, %v3976
        %vm3978 = vweird.f32 %v3972
        %vm3979 = vweird.f32 %v3973
        %vm3980 = vmor %vm3978, %vm3979
        %v3981 = vsel %vm3980, %v3973, %v3977
        %v3982 = vand.u32 2147483647, %v3972
        %vm3983 = vcmp.eq.f32.partialorder %v3982, 8.507059e+37
        %v3984 = vand.u32 %v3972, 2147483648
        %v3985 = vor.u32 1.1754944e-38, %v3984
        %v3986 = vsel %vm3983, %v3985, %v3981
        %v3987 = vmul.f32 %v3962, %v3986
        %v3988 = vmin.f32 %v3987, 1.0
        %v3989 = vmax.f32 %v3988, -1.0
        %v3990 = vmul.f32 %v2990, %v2990
        %v3991 = vmin.f32 16.0, %v3990
        %v3992 = vmul.f32 %v3991, 2.1237322e-06
        %v3993 = vadd.f32 %v3992, 0.00028619796
        %v3994 = vmul.f32 %v3991, %v3993
        %v3995 = vadd.f32 %v3994, 0.0036580483
        %v3996 = vmul.f32 %v3991, %v3995
        %v3997 = vadd.f32 %v3996, 0.05243302
        %v3998 = vmul.f32 %v3991, %v3997
        %v3999 = vadd.f32 %v3998, 0.18741608
        %v4000 = vmul.f32 %v3991, %v3999
        %v4001 = vadd.f32 %v4000, 1.1283791
        %v4002 = vmul.f32 %v2990, %v4001
        %v4003 = vmul.f32 %v3991, 3.8918573e-05
        %v4004 = vadd.f32 %v4003, 0.001143296
        %v4005 = vmul.f32 %v3991, %v4004
        %v4006 = vadd.f32 %v4005, 0.014752088
        %v4007 = vmul.f32 %v3991, %v4006
        %v4008 = vadd.f32 %v4007, 0.112945676
        %v4009 = vmul.f32 %v3991, %v4008
        %v4010 = vadd.f32 %v4009, 0.4994258
        %v4011 = vmul.f32 %v3991, %v4010
        %v4012 = vadd.f32 %v4011, 1.0
        %v4013 = vrcp.pop %v4012
        %v4014 = vmul.f32 %v4012, %v4013
        %v4015 = vsub.f32 1.0, %v4014
        %v4016 = vmul.f32 %v4013, %v4015
        %v4017 = vadd.f32 %v4013, %v4016
        %vm4018 = vweird.f32 %v4012
        %vm4019 = vweird.f32 %v4013
        %vm4020 = vmor %vm4018, %vm4019
        %v4021 = vsel %vm4020, %v4013, %v4017
        %v4022 = vand.u32 2147483647, %v4012
        %vm4023 = vcmp.eq.f32.partialorder %v4022, 8.507059e+37
        %v4024 = vand.u32 %v4012, 2147483648
        %v4025 = vor.u32 1.1754944e-38, %v4024
        %v4026 = vsel %vm4023, %v4025, %v4021
        %v4027 = vmul.f32 %v4002, %v4026
        %v4028 = vmin.f32 %v4027, 1.0
        %v4029 = vmax.f32 %v4028, -1.0
        %v4030 = vmul.f32 %v2991, %v2991
        %v4031 = vmin.f32 16.0, %v4030
        %v4032 = vmul.f32 %v4031, 2.1237322e-06
        %v4033 = vadd.f32 %v4032, 0.00028619796
        %v4034 = vmul.f32 %v4031, %v4033
        %v4035 = vadd.f32 %v4034, 0.0036580483
        %v4036 = vmul.f32 %v4031, %v4035
        %v4037 = vadd.f32 %v4036, 0.05243302
        %v4038 = vmul.f32 %v4031, %v4037
        %v4039 = vadd.f32 %v4038, 0.18741608
        %v4040 = vmul.f32 %v4031, %v4039
        %v4041 = vadd.f32 %v4040, 1.1283791
        %v4042 = vmul.f32 %v2991, %v4041
        %v4043 = vmul.f32 %v4031, 3.8918573e-05
        %v4044 = vadd.f32 %v4043, 0.001143296
        %v4045 = vmul.f32 %v4031, %v4044
        %v4046 = vadd.f32 %v4045, 0.014752088
        %v4047 = vmul.f32 %v4031, %v4046
        %v4048 = vadd.f32 %v4047, 0.112945676
        %v4049 = vmul.f32 %v4031, %v4048
        %v4050 = vadd.f32 %v4049, 0.4994258
        %v4051 = vmul.f32 %v4031, %v4050
        %v4052 = vadd.f32 %v4051, 1.0
        %v4053 = vrcp.pop %v4052
        %v4054 = vmul.f32 %v4052, %v4053
        %v4055 = vsub.f32 1.0, %v4054
        %v4056 = vmul.f32 %v4053, %v4055
        %v4057 = vadd.f32 %v4053, %v4056
        %vm4058 = vweird.f32 %v4052
        %vm4059 = vweird.f32 %v4053
        %vm4060 = vmor %vm4058, %vm4059
        %v4061 = vsel %vm4060, %v4053, %v4057
        %v4062 = vand.u32 2147483647, %v4052
        %vm4063 = vcmp.eq.f32.partialorder %v4062, 8.507059e+37
        %v4064 = vand.u32 %v4052, 2147483648
        %v4065 = vor.u32 1.1754944e-38, %v4064
        %v4066 = vsel %vm4063, %v4065, %v4061
        %v4067 = vmul.f32 %v4042, %v4066
        %v4068 = vmin.f32 %v4067, 1.0
        %v4069 = vmax.f32 %v4068, -1.0
        %v4070 = vmul.f32 %v2992, %v2992
        %v4071 = vmin.f32 16.0, %v4070
        %v4072 = vmul.f32 %v4071, 2.1237322e-06
        %v4073 = vadd.f32 %v4072, 0.00028619796
        %v4074 = vmul.f32 %v4071, %v4073
        %v4075 = vadd.f32 %v4074, 0.0036580483
        %v4076 = vmul.f32 %v4071, %v4075
        %v4077 = vadd.f32 %v4076, 0.05243302
        %v4078 = vmul.f32 %v4071, %v4077
        %v4079 = vadd.f32 %v4078, 0.18741608
        %v4080 = vmul.f32 %v4071, %v4079
        %v4081 = vadd.f32 %v4080, 1.1283791
        %v4082 = vmul.f32 %v2992, %v4081
        %v4083 = vmul.f32 %v4071, 3.8918573e-05
        %v4084 = vadd.f32 %v4083, 0.001143296
        %v4085 = vmul.f32 %v4071, %v4084
        %v4086 = vadd.f32 %v4085, 0.014752088
        %v4087 = vmul.f32 %v4071, %v4086
        %v4088 = vadd.f32 %v4087, 0.112945676
        %v4089 = vmul.f32 %v4071, %v4088
        %v4090 = vadd.f32 %v4089, 0.4994258
        %v4091 = vmul.f32 %v4071, %v4090
        %v4092 = vadd.f32 %v4091, 1.0
        %v4093 = vrcp.pop %v4092
        %v4094 = vmul.f32 %v4092, %v4093
        %v4095 = vsub.f32 1.0, %v4094
        %v4096 = vmul.f32 %v4093, %v4095
        %v4097 = vadd.f32 %v4093, %v4096
        %vm4098 = vweird.f32 %v4092
        %vm4099 = vweird.f32 %v4093
        %vm4100 = vmor %vm4098, %vm4099
        %v4101 = vsel %vm4100, %v4093, %v4097
        %v4102 = vand.u32 2147483647, %v4092
        %vm4103 = vcmp.eq.f32.partialorder %v4102, 8.507059e+37
        %v4104 = vand.u32 %v4092, 2147483648
        %v4105 = vor.u32 1.1754944e-38, %v4104
        %v4106 = vsel %vm4103, %v4105, %v4101
        %v4107 = vmul.f32 %v4082, %v4106
        %v4108 = vmin.f32 %v4107, 1.0
        %v4109 = vmax.f32 %v4108, -1.0
        %v4110 = vmul.f32 %v2993, %v2993
        %v4111 = vmin.f32 16.0, %v4110
        %v4112 = vmul.f32 %v4111, 2.1237322e-06
        %v4113 = vadd.f32 %v4112, 0.00028619796
        %v4114 = vmul.f32 %v4111, %v4113
        %v4115 = vadd.f32 %v4114, 0.0036580483
        %v4116 = vmul.f32 %v4111, %v4115
        %v4117 = vadd.f32 %v4116, 0.05243302
        %v4118 = vmul.f32 %v4111, %v4117
        %v4119 = vadd.f32 %v4118, 0.18741608
        %v4120 = vmul.f32 %v4111, %v4119
        %v4121 = vadd.f32 %v4120, 1.1283791
        %v4122 = vmul.f32 %v2993, %v4121
        %v4123 = vmul.f32 %v4111, 3.8918573e-05
        %v4124 = vadd.f32 %v4123, 0.001143296
        %v4125 = vmul.f32 %v4111, %v4124
        %v4126 = vadd.f32 %v4125, 0.014752088
        %v4127 = vmul.f32 %v4111, %v4126
        %v4128 = vadd.f32 %v4127, 0.112945676
        %v4129 = vmul.f32 %v4111, %v4128
        %v4130 = vadd.f32 %v4129, 0.4994258
        %v4131 = vmul.f32 %v4111, %v4130
        %v4132 = vadd.f32 %v4131, 1.0
        %v4133 = vrcp.pop %v4132
        %v4134 = vmul.f32 %v4132, %v4133
        %v4135 = vsub.f32 1.0, %v4134
        %v4136 = vmul.f32 %v4133, %v4135
        %v4137 = vadd.f32 %v4133, %v4136
        %vm4138 = vweird.f32 %v4132
        %vm4139 = vweird.f32 %v4133
        %vm4140 = vmor %vm4138, %vm4139
        %v4141 = vsel %vm4140, %v4133, %v4137
        %v4142 = vand.u32 2147483647, %v4132
        %vm4143 = vcmp.eq.f32.partialorder %v4142, 8.507059e+37
        %v4144 = vand.u32 %v4132, 2147483648
        %v4145 = vor.u32 1.1754944e-38, %v4144
        %v4146 = vsel %vm4143, %v4145, %v4141
        %v4147 = vmul.f32 %v4122, %v4146
        %v4148 = vmin.f32 %v4147, 1.0
        %v4149 = vmax.f32 %v4148, -1.0
        %v4150 = vmul.f32 %v2994, %v2994
        %v4151 = vmin.f32 16.0, %v4150
        %v4152 = vmul.f32 %v4151, 2.1237322e-06
        %v4153 = vadd.f32 %v4152, 0.00028619796
        %v4154 = vmul.f32 %v4151, %v4153
        %v4155 = vadd.f32 %v4154, 0.0036580483
        %v4156 = vmul.f32 %v4151, %v4155
        %v4157 = vadd.f32 %v4156, 0.05243302
        %v4158 = vmul.f32 %v4151, %v4157
        %v4159 = vadd.f32 %v4158, 0.18741608
        %v4160 = vmul.f32 %v4151, %v4159
        %v4161 = vadd.f32 %v4160, 1.1283791
        %v4162 = vmul.f32 %v2994, %v4161
        %v4163 = vmul.f32 %v4151, 3.8918573e-05
        %v4164 = vadd.f32 %v4163, 0.001143296
        %v4165 = vmul.f32 %v4151, %v4164
        %v4166 = vadd.f32 %v4165, 0.014752088
        %v4167 = vmul.f32 %v4151, %v4166
        %v4168 = vadd.f32 %v4167, 0.112945676
        %v4169 = vmul.f32 %v4151, %v4168
        %v4170 = vadd.f32 %v4169, 0.4994258
        %v4171 = vmul.f32 %v4151, %v4170
        %v4172 = vadd.f32 %v4171, 1.0
        %v4173 = vrcp.pop %v4172
        %v4174 = vmul.f32 %v4172, %v4173
        %v4175 = vsub.f32 1.0, %v4174
        %v4176 = vmul.f32 %v4173, %v4175
        %v4177 = vadd.f32 %v4173, %v4176
        %vm4178 = vweird.f32 %v4172
        %vm4179 = vweird.f32 %v4173
        %vm4180 = vmor %vm4178, %vm4179
        %v4181 = vsel %vm4180, %v4173, %v4177
        %v4182 = vand.u32 2147483647, %v4172
        %vm4183 = vcmp.eq.f32.partialorder %v4182, 8.507059e+37
        %v4184 = vand.u32 %v4172, 2147483648
        %v4185 = vor.u32 1.1754944e-38, %v4184
        %v4186 = vsel %vm4183, %v4185, %v4181
        %v4187 = vmul.f32 %v4162, %v4186
        %v4188 = vmin.f32 %v4187, 1.0
        %v4189 = vmax.f32 %v4188, -1.0
        %v4190 = vmul.f32 %v2995, %v2995
        %v4191 = vmin.f32 16.0, %v4190
        %v4192 = vmul.f32 %v4191, 2.1237322e-06
        %v4193 = vadd.f32 %v4192, 0.00028619796
        %v4194 = vmul.f32 %v4191, %v4193
        %v4195 = vadd.f32 %v4194, 0.0036580483
        %v4196 = vmul.f32 %v4191, %v4195
        %v4197 = vadd.f32 %v4196, 0.05243302
        %v4198 = vmul.f32 %v4191, %v4197
        %v4199 = vadd.f32 %v4198, 0.18741608
        %v4200 = vmul.f32 %v4191, %v4199
        %v4201 = vadd.f32 %v4200, 1.1283791
        %v4202 = vmul.f32 %v2995, %v4201
        %v4203 = vmul.f32 %v4191, 3.8918573e-05
        %v4204 = vadd.f32 %v4203, 0.001143296
        %v4205 = vmul.f32 %v4191, %v4204
        %v4206 = vadd.f32 %v4205, 0.014752088
        %v4207 = vmul.f32 %v4191, %v4206
        %v4208 = vadd.f32 %v4207, 0.112945676
        %v4209 = vmul.f32 %v4191, %v4208
        %v4210 = vadd.f32 %v4209, 0.4994258
        %v4211 = vmul.f32 %v4191, %v4210
        %v4212 = vadd.f32 %v4211, 1.0
        %v4213 = vrcp.pop %v4212
        %v4214 = vmul.f32 %v4212, %v4213
        %v4215 = vsub.f32 1.0, %v4214
        %v4216 = vmul.f32 %v4213, %v4215
        %v4217 = vadd.f32 %v4213, %v4216
        %vm4218 = vweird.f32 %v4212
        %vm4219 = vweird.f32 %v4213
        %vm4220 = vmor %vm4218, %vm4219
        %v4221 = vsel %vm4220, %v4213, %v4217
        %v4222 = vand.u32 2147483647, %v4212
        %vm4223 = vcmp.eq.f32.partialorder %v4222, 8.507059e+37
        %v4224 = vand.u32 %v4212, 2147483648
        %v4225 = vor.u32 1.1754944e-38, %v4224
        %v4226 = vsel %vm4223, %v4225, %v4221
        %v4227 = vmul.f32 %v4202, %v4226
        %v4228 = vmin.f32 %v4227, 1.0
        %v4229 = vmax.f32 %v4228, -1.0
        %v4230 = vmul.f32 %v2996, %v2996
        %v4231 = vmin.f32 16.0, %v4230
        %v4232 = vmul.f32 %v4231, 2.1237322e-06
        %v4233 = vadd.f32 %v4232, 0.00028619796
        %v4234 = vmul.f32 %v4231, %v4233
        %v4235 = vadd.f32 %v4234, 0.0036580483
        %v4236 = vmul.f32 %v4231, %v4235
        %v4237 = vadd.f32 %v4236, 0.05243302
        %v4238 = vmul.f32 %v4231, %v4237
        %v4239 = vadd.f32 %v4238, 0.18741608
        %v4240 = vmul.f32 %v4231, %v4239
        %v4241 = vadd.f32 %v4240, 1.1283791
        %v4242 = vmul.f32 %v2996, %v4241
        %v4243 = vmul.f32 %v4231, 3.8918573e-05
        %v4244 = vadd.f32 %v4243, 0.001143296
        %v4245 = vmul.f32 %v4231, %v4244
        %v4246 = vadd.f32 %v4245, 0.014752088
        %v4247 = vmul.f32 %v4231, %v4246
        %v4248 = vadd.f32 %v4247, 0.112945676
        %v4249 = vmul.f32 %v4231, %v4248
        %v4250 = vadd.f32 %v4249, 0.4994258
        %v4251 = vmul.f32 %v4231, %v4250
        %v4252 = vadd.f32 %v4251, 1.0
        %v4253 = vrcp.pop %v4252
        %v4254 = vmul.f32 %v4252, %v4253
        %v4255 = vsub.f32 1.0, %v4254
        %v4256 = vmul.f32 %v4253, %v4255
        %v4257 = vadd.f32 %v4253, %v4256
        %vm4258 = vweird.f32 %v4252
        %vm4259 = vweird.f32 %v4253
        %vm4260 = vmor %vm4258, %vm4259
        %v4261 = vsel %vm4260, %v4253, %v4257
        %v4262 = vand.u32 2147483647, %v4252
        %vm4263 = vcmp.eq.f32.partialorder %v4262, 8.507059e+37
        %v4264 = vand.u32 %v4252, 2147483648
        %v4265 = vor.u32 1.1754944e-38, %v4264
        %v4266 = vsel %vm4263, %v4265, %v4261
        %v4267 = vmul.f32 %v4242, %v4266
        %v4268 = vmin.f32 %v4267, 1.0
        %v4269 = vmax.f32 %v4268, -1.0
        %v4270 = vmul.f32 %v2997, %v2997
        %v4271 = vmin.f32 16.0, %v4270
        %v4272 = vmul.f32 %v4271, 2.1237322e-06
        %v4273 = vadd.f32 %v4272, 0.00028619796
        %v4274 = vmul.f32 %v4271, %v4273
        %v4275 = vadd.f32 %v4274, 0.0036580483
        %v4276 = vmul.f32 %v4271, %v4275
        %v4277 = vadd.f32 %v4276, 0.05243302
        %v4278 = vmul.f32 %v4271, %v4277
        %v4279 = vadd.f32 %v4278, 0.18741608
        %v4280 = vmul.f32 %v4271, %v4279
        %v4281 = vadd.f32 %v4280, 1.1283791
        %v4282 = vmul.f32 %v2997, %v4281
        %v4283 = vmul.f32 %v4271, 3.8918573e-05
        %v4284 = vadd.f32 %v4283, 0.001143296
        %v4285 = vmul.f32 %v4271, %v4284
        %v4286 = vadd.f32 %v4285, 0.014752088
        %v4287 = vmul.f32 %v4271, %v4286
        %v4288 = vadd.f32 %v4287, 0.112945676
        %v4289 = vmul.f32 %v4271, %v4288
        %v4290 = vadd.f32 %v4289, 0.4994258
        %v4291 = vmul.f32 %v4271, %v4290
        %v4292 = vadd.f32 %v4291, 1.0
        %v4293 = vrcp.pop %v4292
        %v4294 = vmul.f32 %v4292, %v4293
        %v4295 = vsub.f32 1.0, %v4294
        %v4296 = vmul.f32 %v4293, %v4295
        %v4297 = vadd.f32 %v4293, %v4296
        %vm4298 = vweird.f32 %v4292
        %vm4299 = vweird.f32 %v4293
        %vm4300 = vmor %vm4298, %vm4299
        %v4301 = vsel %vm4300, %v4293, %v4297
        %v4302 = vand.u32 2147483647, %v4292
        %vm4303 = vcmp.eq.f32.partialorder %v4302, 8.507059e+37
        %v4304 = vand.u32 %v4292, 2147483648
        %v4305 = vor.u32 1.1754944e-38, %v4304
        %v4306 = vsel %vm4303, %v4305, %v4301
        %v4307 = vmul.f32 %v4282, %v4306
        %v4308 = vmin.f32 %v4307, 1.0
        %v4309 = vmax.f32 %v4308, -1.0
        %v4310 = vmul.f32 %v2998, %v2998
        %v4311 = vmin.f32 16.0, %v4310
        %v4312 = vmul.f32 %v4311, 2.1237322e-06
        %v4313 = vadd.f32 %v4312, 0.00028619796
        %v4314 = vmul.f32 %v4311, %v4313
        %v4315 = vadd.f32 %v4314, 0.0036580483
        %v4316 = vmul.f32 %v4311, %v4315
        %v4317 = vadd.f32 %v4316, 0.05243302
        %v4318 = vmul.f32 %v4311, %v4317
        %v4319 = vadd.f32 %v4318, 0.18741608
        %v4320 = vmul.f32 %v4311, %v4319
        %v4321 = vadd.f32 %v4320, 1.1283791
        %v4322 = vmul.f32 %v2998, %v4321
        %v4323 = vmul.f32 %v4311, 3.8918573e-05
        %v4324 = vadd.f32 %v4323, 0.001143296
        %v4325 = vmul.f32 %v4311, %v4324
        %v4326 = vadd.f32 %v4325, 0.014752088
        %v4327 = vmul.f32 %v4311, %v4326
        %v4328 = vadd.f32 %v4327, 0.112945676
        %v4329 = vmul.f32 %v4311, %v4328
        %v4330 = vadd.f32 %v4329, 0.4994258
        %v4331 = vmul.f32 %v4311, %v4330
        %v4332 = vadd.f32 %v4331, 1.0
        %v4333 = vrcp.pop %v4332
        %v4334 = vmul.f32 %v4332, %v4333
        %v4335 = vsub.f32 1.0, %v4334
        %v4336 = vmul.f32 %v4333, %v4335
        %v4337 = vadd.f32 %v4333, %v4336
        %vm4338 = vweird.f32 %v4332
        %vm4339 = vweird.f32 %v4333
        %vm4340 = vmor %vm4338, %vm4339
        %v4341 = vsel %vm4340, %v4333, %v4337
        %v4342 = vand.u32 2147483647, %v4332
        %vm4343 = vcmp.eq.f32.partialorder %v4342, 8.507059e+37
        %v4344 = vand.u32 %v4332, 2147483648
        %v4345 = vor.u32 1.1754944e-38, %v4344
        %v4346 = vsel %vm4343, %v4345, %v4341
        %v4347 = vmul.f32 %v4322, %v4346
        %v4348 = vmin.f32 %v4347, 1.0
        %v4349 = vmax.f32 %v4348, -1.0
        %v4350 = vmul.f32 %v2999, %v2999
        %v4351 = vmin.f32 16.0, %v4350
        %v4352 = vmul.f32 %v4351, 2.1237322e-06
        %v4353 = vadd.f32 %v4352, 0.00028619796
        %v4354 = vmul.f32 %v4351, %v4353
        %v4355 = vadd.f32 %v4354, 0.0036580483
        %v4356 = vmul.f32 %v4351, %v4355
        %v4357 = vadd.f32 %v4356, 0.05243302
        %v4358 = vmul.f32 %v4351, %v4357
        %v4359 = vadd.f32 %v4358, 0.18741608
        %v4360 = vmul.f32 %v4351, %v4359
        %v4361 = vadd.f32 %v4360, 1.1283791
        %v4362 = vmul.f32 %v2999, %v4361
        %v4363 = vmul.f32 %v4351, 3.8918573e-05
        %v4364 = vadd.f32 %v4363, 0.001143296
        %v4365 = vmul.f32 %v4351, %v4364
        %v4366 = vadd.f32 %v4365, 0.014752088
        %v4367 = vmul.f32 %v4351, %v4366
        %v4368 = vadd.f32 %v4367, 0.112945676
        %v4369 = vmul.f32 %v4351, %v4368
        %v4370 = vadd.f32 %v4369, 0.4994258
        %v4371 = vmul.f32 %v4351, %v4370
        %v4372 = vadd.f32 %v4371, 1.0
        %v4373 = vrcp.pop %v4372
        %v4374 = vmul.f32 %v4372, %v4373
        %v4375 = vsub.f32 1.0, %v4374
        %v4376 = vmul.f32 %v4373, %v4375
        %v4377 = vadd.f32 %v4373, %v4376
        %vm4378 = vweird.f32 %v4372
        %vm4379 = vweird.f32 %v4373
        %vm4380 = vmor %vm4378, %vm4379
        %v4381 = vsel %vm4380, %v4373, %v4377
        %v4382 = vand.u32 2147483647, %v4372
        %vm4383 = vcmp.eq.f32.partialorder %v4382, 8.507059e+37
        %v4384 = vand.u32 %v4372, 2147483648
        %v4385 = vor.u32 1.1754944e-38, %v4384
        %v4386 = vsel %vm4383, %v4385, %v4381
        %v4387 = vmul.f32 %v4362, %v4386
        %v4388 = vmin.f32 %v4387, 1.0
        %v4389 = vmax.f32 %v4388, -1.0
        %v4390 = vmul.f32 %v3000, %v3000
        %v4391 = vmin.f32 16.0, %v4390
        %v4392 = vmul.f32 %v4391, 2.1237322e-06
        %v4393 = vadd.f32 %v4392, 0.00028619796
        %v4394 = vmul.f32 %v4391, %v4393
        %v4395 = vadd.f32 %v4394, 0.0036580483
        %v4396 = vmul.f32 %v4391, %v4395
        %v4397 = vadd.f32 %v4396, 0.05243302
        %v4398 = vmul.f32 %v4391, %v4397
        %v4399 = vadd.f32 %v4398, 0.18741608
        %v4400 = vmul.f32 %v4391, %v4399
        %v4401 = vadd.f32 %v4400, 1.1283791
        %v4402 = vmul.f32 %v3000, %v4401
        %v4403 = vmul.f32 %v4391, 3.8918573e-05
        %v4404 = vadd.f32 %v4403, 0.001143296
        %v4405 = vmul.f32 %v4391, %v4404
        %v4406 = vadd.f32 %v4405, 0.014752088
        %v4407 = vmul.f32 %v4391, %v4406
        %v4408 = vadd.f32 %v4407, 0.112945676
        %v4409 = vmul.f32 %v4391, %v4408
        %v4410 = vadd.f32 %v4409, 0.4994258
        %v4411 = vmul.f32 %v4391, %v4410
        %v4412 = vadd.f32 %v4411, 1.0
        %v4413 = vrcp.pop %v4412
        %v4414 = vmul.f32 %v4412, %v4413
        %v4415 = vsub.f32 1.0, %v4414
        %v4416 = vmul.f32 %v4413, %v4415
        %v4417 = vadd.f32 %v4413, %v4416
        %vm4418 = vweird.f32 %v4412
        %vm4419 = vweird.f32 %v4413
        %vm4420 = vmor %vm4418, %vm4419
        %v4421 = vsel %vm4420, %v4413, %v4417
        %v4422 = vand.u32 2147483647, %v4412
        %vm4423 = vcmp.eq.f32.partialorder %v4422, 8.507059e+37
        %v4424 = vand.u32 %v4412, 2147483648
        %v4425 = vor.u32 1.1754944e-38, %v4424
        %v4426 = vsel %vm4423, %v4425, %v4421
        %v4427 = vmul.f32 %v4402, %v4426
        %v4428 = vmin.f32 %v4427, 1.0
        %v4429 = vmax.f32 %v4428, -1.0
        %v4430 = vmul.f32 %v3001, %v3001
        %v4431 = vmin.f32 16.0, %v4430
        %v4432 = vmul.f32 %v4431, 2.1237322e-06
        %v4433 = vadd.f32 %v4432, 0.00028619796
        %v4434 = vmul.f32 %v4431, %v4433
        %v4435 = vadd.f32 %v4434, 0.0036580483
        %v4436 = vmul.f32 %v4431, %v4435
        %v4437 = vadd.f32 %v4436, 0.05243302
        %v4438 = vmul.f32 %v4431, %v4437
        %v4439 = vadd.f32 %v4438, 0.18741608
        %v4440 = vmul.f32 %v4431, %v4439
        %v4441 = vadd.f32 %v4440, 1.1283791
        %v4442 = vmul.f32 %v3001, %v4441
        %v4443 = vmul.f32 %v4431, 3.8918573e-05
        %v4444 = vadd.f32 %v4443, 0.001143296
        %v4445 = vmul.f32 %v4431, %v4444
        %v4446 = vadd.f32 %v4445, 0.014752088
        %v4447 = vmul.f32 %v4431, %v4446
        %v4448 = vadd.f32 %v4447, 0.112945676
        %v4449 = vmul.f32 %v4431, %v4448
        %v4450 = vadd.f32 %v4449, 0.4994258
        %v4451 = vmul.f32 %v4431, %v4450
        %v4452 = vadd.f32 %v4451, 1.0
        %v4453 = vrcp.pop %v4452
        %v4454 = vmul.f32 %v4452, %v4453
        %v4455 = vsub.f32 1.0, %v4454
        %v4456 = vmul.f32 %v4453, %v4455
        %v4457 = vadd.f32 %v4453, %v4456
        %vm4458 = vweird.f32 %v4452
        %vm4459 = vweird.f32 %v4453
        %vm4460 = vmor %vm4458, %vm4459
        %v4461 = vsel %vm4460, %v4453, %v4457
        %v4462 = vand.u32 2147483647, %v4452
        %vm4463 = vcmp.eq.f32.partialorder %v4462, 8.507059e+37
        %v4464 = vand.u32 %v4452, 2147483648
        %v4465 = vor.u32 1.1754944e-38, %v4464
        %v4466 = vsel %vm4463, %v4465, %v4461
        %v4467 = vmul.f32 %v4442, %v4466
        %v4468 = vmin.f32 %v4467, 1.0
        %v4469 = vmax.f32 %v4468, -1.0
        %v4470 = vmul.f32 %v3002, %v3002
        %v4471 = vmin.f32 16.0, %v4470
        %v4472 = vmul.f32 %v4471, 2.1237322e-06
        %v4473 = vadd.f32 %v4472, 0.00028619796
        %v4474 = vmul.f32 %v4471, %v4473
        %v4475 = vadd.f32 %v4474, 0.0036580483
        %v4476 = vmul.f32 %v4471, %v4475
        %v4477 = vadd.f32 %v4476, 0.05243302
        %v4478 = vmul.f32 %v4471, %v4477
        %v4479 = vadd.f32 %v4478, 0.18741608
        %v4480 = vmul.f32 %v4471, %v4479
        %v4481 = vadd.f32 %v4480, 1.1283791
        %v4482 = vmul.f32 %v3002, %v4481
        %v4483 = vmul.f32 %v4471, 3.8918573e-05
        %v4484 = vadd.f32 %v4483, 0.001143296
        %v4485 = vmul.f32 %v4471, %v4484
        %v4486 = vadd.f32 %v4485, 0.014752088
        %v4487 = vmul.f32 %v4471, %v4486
        %v4488 = vadd.f32 %v4487, 0.112945676
        %v4489 = vmul.f32 %v4471, %v4488
        %v4490 = vadd.f32 %v4489, 0.4994258
        %v4491 = vmul.f32 %v4471, %v4490
        %v4492 = vadd.f32 %v4491, 1.0
        %v4493 = vrcp.pop %v4492
        %v4494 = vmul.f32 %v4492, %v4493
        %v4495 = vsub.f32 1.0, %v4494
        %v4496 = vmul.f32 %v4493, %v4495
        %v4497 = vadd.f32 %v4493, %v4496
        %vm4498 = vweird.f32 %v4492
        %vm4499 = vweird.f32 %v4493
        %vm4500 = vmor %vm4498, %vm4499
        %v4501 = vsel %vm4500, %v4493, %v4497
        %v4502 = vand.u32 2147483647, %v4492
        %vm4503 = vcmp.eq.f32.partialorder %v4502, 8.507059e+37
        %v4504 = vand.u32 %v4492, 2147483648
        %v4505 = vor.u32 1.1754944e-38, %v4504
        %v4506 = vsel %vm4503, %v4505, %v4501
        %v4507 = vmul.f32 %v4482, %v4506
        %v4508 = vmin.f32 %v4507, 1.0
        %v4509 = vmax.f32 %v4508, -1.0
        %v4510 = vmul.f32 %v3003, %v3003
        %v4511 = vmin.f32 16.0, %v4510
        %v4512 = vmul.f32 %v4511, 2.1237322e-06
        %v4513 = vadd.f32 %v4512, 0.00028619796
        %v4514 = vmul.f32 %v4511, %v4513
        %v4515 = vadd.f32 %v4514, 0.0036580483
        %v4516 = vmul.f32 %v4511, %v4515
        %v4517 = vadd.f32 %v4516, 0.05243302
        %v4518 = vmul.f32 %v4511, %v4517
        %v4519 = vadd.f32 %v4518, 0.18741608
        %v4520 = vmul.f32 %v4511, %v4519
        %v4521 = vadd.f32 %v4520, 1.1283791
        %v4522 = vmul.f32 %v3003, %v4521
        %v4523 = vmul.f32 %v4511, 3.8918573e-05
        %v4524 = vadd.f32 %v4523, 0.001143296
        %v4525 = vmul.f32 %v4511, %v4524
        %v4526 = vadd.f32 %v4525, 0.014752088
        %v4527 = vmul.f32 %v4511, %v4526
        %v4528 = vadd.f32 %v4527, 0.112945676
        %v4529 = vmul.f32 %v4511, %v4528
        %v4530 = vadd.f32 %v4529, 0.4994258
        %v4531 = vmul.f32 %v4511, %v4530
        %v4532 = vadd.f32 %v4531, 1.0
        %v4533 = vrcp.pop %v4532
        %v4534 = vmul.f32 %v4532, %v4533
        %v4535 = vsub.f32 1.0, %v4534
        %v4536 = vmul.f32 %v4533, %v4535
        %v4537 = vadd.f32 %v4533, %v4536
        %vm4538 = vweird.f32 %v4532
        %vm4539 = vweird.f32 %v4533
        %vm4540 = vmor %vm4538, %vm4539
        %v4541 = vsel %vm4540, %v4533, %v4537
        %v4542 = vand.u32 2147483647, %v4532
        %vm4543 = vcmp.eq.f32.partialorder %v4542, 8.507059e+37
        %v4544 = vand.u32 %v4532, 2147483648
        %v4545 = vor.u32 1.1754944e-38, %v4544
        %v4546 = vsel %vm4543, %v4545, %v4541
        %v4547 = vmul.f32 %v4522, %v4546
        %v4548 = vmin.f32 %v4547, 1.0
        %v4549 = vmax.f32 %v4548, -1.0
        %v4550 = vmul.f32 %v3004, %v3004
        %v4551 = vmin.f32 16.0, %v4550
        %v4552 = vmul.f32 %v4551, 2.1237322e-06
        %v4553 = vadd.f32 %v4552, 0.00028619796
        %v4554 = vmul.f32 %v4551, %v4553
        %v4555 = vadd.f32 %v4554, 0.0036580483
        %v4556 = vmul.f32 %v4551, %v4555
        %v4557 = vadd.f32 %v4556, 0.05243302
        %v4558 = vmul.f32 %v4551, %v4557
        %v4559 = vadd.f32 %v4558, 0.18741608
        %v4560 = vmul.f32 %v4551, %v4559
        %v4561 = vadd.f32 %v4560, 1.1283791
        %v4562 = vmul.f32 %v3004, %v4561
        %v4563 = vmul.f32 %v4551, 3.8918573e-05
        %v4564 = vadd.f32 %v4563, 0.001143296
        %v4565 = vmul.f32 %v4551, %v4564
        %v4566 = vadd.f32 %v4565, 0.014752088
        %v4567 = vmul.f32 %v4551, %v4566
        %v4568 = vadd.f32 %v4567, 0.112945676
        %v4569 = vmul.f32 %v4551, %v4568
        %v4570 = vadd.f32 %v4569, 0.4994258
        %v4571 = vmul.f32 %v4551, %v4570
        %v4572 = vadd.f32 %v4571, 1.0
        %v4573 = vrcp.pop %v4572
        %v4574 = vmul.f32 %v4572, %v4573
        %v4575 = vsub.f32 1.0, %v4574
        %v4576 = vmul.f32 %v4573, %v4575
        %v4577 = vadd.f32 %v4573, %v4576
        %vm4578 = vweird.f32 %v4572
        %vm4579 = vweird.f32 %v4573
        %vm4580 = vmor %vm4578, %vm4579
        %v4581 = vsel %vm4580, %v4573, %v4577
        %v4582 = vand.u32 2147483647, %v4572
        %vm4583 = vcmp.eq.f32.partialorder %v4582, 8.507059e+37
        %v4584 = vand.u32 %v4572, 2147483648
        %v4585 = vor.u32 1.1754944e-38, %v4584
        %v4586 = vsel %vm4583, %v4585, %v4581
        %v4587 = vmul.f32 %v4562, %v4586
        %v4588 = vmin.f32 %v4587, 1.0
        %v4589 = vmax.f32 %v4588, -1.0
        %v4590 = vmul.f32 %v3005, %v3005
        %v4591 = vmin.f32 16.0, %v4590
        %v4592 = vmul.f32 %v4591, 2.1237322e-06
        %v4593 = vadd.f32 %v4592, 0.00028619796
        %v4594 = vmul.f32 %v4591, %v4593
        %v4595 = vadd.f32 %v4594, 0.0036580483
        %v4596 = vmul.f32 %v4591, %v4595
        %v4597 = vadd.f32 %v4596, 0.05243302
        %v4598 = vmul.f32 %v4591, %v4597
        %v4599 = vadd.f32 %v4598, 0.18741608
        %v4600 = vmul.f32 %v4591, %v4599
        %v4601 = vadd.f32 %v4600, 1.1283791
        %v4602 = vmul.f32 %v3005, %v4601
        %v4603 = vmul.f32 %v4591, 3.8918573e-05
        %v4604 = vadd.f32 %v4603, 0.001143296
        %v4605 = vmul.f32 %v4591, %v4604
        %v4606 = vadd.f32 %v4605, 0.014752088
        %v4607 = vmul.f32 %v4591, %v4606
        %v4608 = vadd.f32 %v4607, 0.112945676
        %v4609 = vmul.f32 %v4591, %v4608
        %v4610 = vadd.f32 %v4609, 0.4994258
        %v4611 = vmul.f32 %v4591, %v4610
        %v4612 = vadd.f32 %v4611, 1.0
        %v4613 = vrcp.pop %v4612
        %v4614 = vmul.f32 %v4612, %v4613
        %v4615 = vsub.f32 1.0, %v4614
        %v4616 = vmul.f32 %v4613, %v4615
        %v4617 = vadd.f32 %v4613, %v4616
        %vm4618 = vweird.f32 %v4612
        %vm4619 = vweird.f32 %v4613
        %vm4620 = vmor %vm4618, %vm4619
        %v4621 = vsel %vm4620, %v4613, %v4617
        %v4622 = vand.u32 2147483647, %v4612
        %vm4623 = vcmp.eq.f32.partialorder %v4622, 8.507059e+37
        %v4624 = vand.u32 %v4612, 2147483648
        %v4625 = vor.u32 1.1754944e-38, %v4624
        %v4626 = vsel %vm4623, %v4625, %v4621
        %v4627 = vmul.f32 %v4602, %v4626
        %v4628 = vmin.f32 %v4627, 1.0
        %v4629 = vmax.f32 %v4628, -1.0
        %v4630 = vmul.f32 %v3006, %v3006
        %v4631 = vmin.f32 16.0, %v4630
        %v4632 = vmul.f32 %v4631, 2.1237322e-06
        %v4633 = vadd.f32 %v4632, 0.00028619796
        %v4634 = vmul.f32 %v4631, %v4633
        %v4635 = vadd.f32 %v4634, 0.0036580483
        %v4636 = vmul.f32 %v4631, %v4635
        %v4637 = vadd.f32 %v4636, 0.05243302
        %v4638 = vmul.f32 %v4631, %v4637
        %v4639 = vadd.f32 %v4638, 0.18741608
        %v4640 = vmul.f32 %v4631, %v4639
        %v4641 = vadd.f32 %v4640, 1.1283791
        %v4642 = vmul.f32 %v3006, %v4641
        %v4643 = vmul.f32 %v4631, 3.8918573e-05
        %v4644 = vadd.f32 %v4643, 0.001143296
        %v4645 = vmul.f32 %v4631, %v4644
        %v4646 = vadd.f32 %v4645, 0.014752088
        %v4647 = vmul.f32 %v4631, %v4646
        %v4648 = vadd.f32 %v4647, 0.112945676
        %v4649 = vmul.f32 %v4631, %v4648
        %v4650 = vadd.f32 %v4649, 0.4994258
        %v4651 = vmul.f32 %v4631, %v4650
        %v4652 = vadd.f32 %v4651, 1.0
        %v4653 = vrcp.pop %v4652
        %v4654 = vmul.f32 %v4652, %v4653
        %v4655 = vsub.f32 1.0, %v4654
        %v4656 = vmul.f32 %v4653, %v4655
        %v4657 = vadd.f32 %v4653, %v4656
        %vm4658 = vweird.f32 %v4652
        %vm4659 = vweird.f32 %v4653
        %vm4660 = vmor %vm4658, %vm4659
        %v4661 = vsel %vm4660, %v4653, %v4657
        %v4662 = vand.u32 2147483647, %v4652
        %vm4663 = vcmp.eq.f32.partialorder %v4662, 8.507059e+37
        %v4664 = vand.u32 %v4652, 2147483648
        %v4665 = vor.u32 1.1754944e-38, %v4664
        %v4666 = vsel %vm4663, %v4665, %v4661
        %v4667 = vmul.f32 %v4642, %v4666
        %v4668 = vmin.f32 %v4667, 1.0
        %v4669 = vmax.f32 %v4668, -1.0
        %v4670 = vmul.f32 %v3007, %v3007
        %v4671 = vmin.f32 16.0, %v4670
        %v4672 = vmul.f32 %v4671, 2.1237322e-06
        %v4673 = vadd.f32 %v4672, 0.00028619796
        %v4674 = vmul.f32 %v4671, %v4673
        %v4675 = vadd.f32 %v4674, 0.0036580483
        %v4676 = vmul.f32 %v4671, %v4675
        %v4677 = vadd.f32 %v4676, 0.05243302
        %v4678 = vmul.f32 %v4671, %v4677
        %v4679 = vadd.f32 %v4678, 0.18741608
        %v4680 = vmul.f32 %v4671, %v4679
        %v4681 = vadd.f32 %v4680, 1.1283791
        %v4682 = vmul.f32 %v3007, %v4681
        %v4683 = vmul.f32 %v4671, 3.8918573e-05
        %v4684 = vadd.f32 %v4683, 0.001143296
        %v4685 = vmul.f32 %v4671, %v4684
        %v4686 = vadd.f32 %v4685, 0.014752088
        %v4687 = vmul.f32 %v4671, %v4686
        %v4688 = vadd.f32 %v4687, 0.112945676
        %v4689 = vmul.f32 %v4671, %v4688
        %v4690 = vadd.f32 %v4689, 0.4994258
        %v4691 = vmul.f32 %v4671, %v4690
        %v4692 = vadd.f32 %v4691, 1.0
        %v4693 = vrcp.pop %v4692
        %v4694 = vmul.f32 %v4692, %v4693
        %v4695 = vsub.f32 1.0, %v4694
        %v4696 = vmul.f32 %v4693, %v4695
        %v4697 = vadd.f32 %v4693, %v4696
        %vm4698 = vweird.f32 %v4692
        %vm4699 = vweird.f32 %v4693
        %vm4700 = vmor %vm4698, %vm4699
        %v4701 = vsel %vm4700, %v4693, %v4697
        %v4702 = vand.u32 2147483647, %v4692
        %vm4703 = vcmp.eq.f32.partialorder %v4702, 8.507059e+37
        %v4704 = vand.u32 %v4692, 2147483648
        %v4705 = vor.u32 1.1754944e-38, %v4704
        %v4706 = vsel %vm4703, %v4705, %v4701
        %v4707 = vmul.f32 %v4682, %v4706
        %v4708 = vmin.f32 %v4707, 1.0
        %v4709 = vmax.f32 %v4708, -1.0
        %v4710 = vmul.f32 %v3008, %v3008
        %v4711 = vmin.f32 16.0, %v4710
        %v4712 = vmul.f32 %v4711, 2.1237322e-06
        %v4713 = vadd.f32 %v4712, 0.00028619796
        %v4714 = vmul.f32 %v4711, %v4713
        %v4715 = vadd.f32 %v4714, 0.0036580483
        %v4716 = vmul.f32 %v4711, %v4715
        %v4717 = vadd.f32 %v4716, 0.05243302
        %v4718 = vmul.f32 %v4711, %v4717
        %v4719 = vadd.f32 %v4718, 0.18741608
        %v4720 = vmul.f32 %v4711, %v4719
        %v4721 = vadd.f32 %v4720, 1.1283791
        %v4722 = vmul.f32 %v3008, %v4721
        %v4723 = vmul.f32 %v4711, 3.8918573e-05
        %v4724 = vadd.f32 %v4723, 0.001143296
        %v4725 = vmul.f32 %v4711, %v4724
        %v4726 = vadd.f32 %v4725, 0.014752088
        %v4727 = vmul.f32 %v4711, %v4726
        %v4728 = vadd.f32 %v4727, 0.112945676
        %v4729 = vmul.f32 %v4711, %v4728
        %v4730 = vadd.f32 %v4729, 0.4994258
        %v4731 = vmul.f32 %v4711, %v4730
        %v4732 = vadd.f32 %v4731, 1.0
        %v4733 = vrcp.pop %v4732
        %v4734 = vmul.f32 %v4732, %v4733
        %v4735 = vsub.f32 1.0, %v4734
        %v4736 = vmul.f32 %v4733, %v4735
        %v4737 = vadd.f32 %v4733, %v4736
        %vm4738 = vweird.f32 %v4732
        %vm4739 = vweird.f32 %v4733
        %vm4740 = vmor %vm4738, %vm4739
        %v4741 = vsel %vm4740, %v4733, %v4737
        %v4742 = vand.u32 2147483647, %v4732
        %vm4743 = vcmp.eq.f32.partialorder %v4742, 8.507059e+37
        %v4744 = vand.u32 %v4732, 2147483648
        %v4745 = vor.u32 1.1754944e-38, %v4744
        %v4746 = vsel %vm4743, %v4745, %v4741
        %v4747 = vmul.f32 %v4722, %v4746
        %v4748 = vmin.f32 %v4747, 1.0
        %v4749 = vmax.f32 %v4748, -1.0
        %v4750 = vmul.f32 %v3009, %v3009
        %v4751 = vmin.f32 16.0, %v4750
        %v4752 = vmul.f32 %v4751, 2.1237322e-06
        %v4753 = vadd.f32 %v4752, 0.00028619796
        %v4754 = vmul.f32 %v4751, %v4753
        %v4755 = vadd.f32 %v4754, 0.0036580483
        %v4756 = vmul.f32 %v4751, %v4755
        %v4757 = vadd.f32 %v4756, 0.05243302
        %v4758 = vmul.f32 %v4751, %v4757
        %v4759 = vadd.f32 %v4758, 0.18741608
        %v4760 = vmul.f32 %v4751, %v4759
        %v4761 = vadd.f32 %v4760, 1.1283791
        %v4762 = vmul.f32 %v3009, %v4761
        %v4763 = vmul.f32 %v4751, 3.8918573e-05
        %v4764 = vadd.f32 %v4763, 0.001143296
        %v4765 = vmul.f32 %v4751, %v4764
        %v4766 = vadd.f32 %v4765, 0.014752088
        %v4767 = vmul.f32 %v4751, %v4766
        %v4768 = vadd.f32 %v4767, 0.112945676
        %v4769 = vmul.f32 %v4751, %v4768
        %v4770 = vadd.f32 %v4769, 0.4994258
        %v4771 = vmul.f32 %v4751, %v4770
        %v4772 = vadd.f32 %v4771, 1.0
        %v4773 = vrcp.pop %v4772
        %v4774 = vmul.f32 %v4772, %v4773
        %v4775 = vsub.f32 1.0, %v4774
        %v4776 = vmul.f32 %v4773, %v4775
        %v4777 = vadd.f32 %v4773, %v4776
        %vm4778 = vweird.f32 %v4772
        %vm4779 = vweird.f32 %v4773
        %vm4780 = vmor %vm4778, %vm4779
        %v4781 = vsel %vm4780, %v4773, %v4777
        %v4782 = vand.u32 2147483647, %v4772
        %vm4783 = vcmp.eq.f32.partialorder %v4782, 8.507059e+37
        %v4784 = vand.u32 %v4772, 2147483648
        %v4785 = vor.u32 1.1754944e-38, %v4784
        %v4786 = vsel %vm4783, %v4785, %v4781
        %v4787 = vmul.f32 %v4762, %v4786
        %v4788 = vmin.f32 %v4787, 1.0
        %v4789 = vmax.f32 %v4788, -1.0
        %v4790 = vmul.f32 %v3010, %v3010
        %v4791 = vmin.f32 16.0, %v4790
        %v4792 = vmul.f32 %v4791, 2.1237322e-06
        %v4793 = vadd.f32 %v4792, 0.00028619796
        %v4794 = vmul.f32 %v4791, %v4793
        %v4795 = vadd.f32 %v4794, 0.0036580483
        %v4796 = vmul.f32 %v4791, %v4795
        %v4797 = vadd.f32 %v4796, 0.05243302
        %v4798 = vmul.f32 %v4791, %v4797
        %v4799 = vadd.f32 %v4798, 0.18741608
        %v4800 = vmul.f32 %v4791, %v4799
        %v4801 = vadd.f32 %v4800, 1.1283791
        %v4802 = vmul.f32 %v3010, %v4801
        %v4803 = vmul.f32 %v4791, 3.8918573e-05
        %v4804 = vadd.f32 %v4803, 0.001143296
        %v4805 = vmul.f32 %v4791, %v4804
        %v4806 = vadd.f32 %v4805, 0.014752088
        %v4807 = vmul.f32 %v4791, %v4806
        %v4808 = vadd.f32 %v4807, 0.112945676
        %v4809 = vmul.f32 %v4791, %v4808
        %v4810 = vadd.f32 %v4809, 0.4994258
        %v4811 = vmul.f32 %v4791, %v4810
        %v4812 = vadd.f32 %v4811, 1.0
        %v4813 = vrcp.pop %v4812
        %v4814 = vmul.f32 %v4812, %v4813
        %v4815 = vsub.f32 1.0, %v4814
        %v4816 = vmul.f32 %v4813, %v4815
        %v4817 = vadd.f32 %v4813, %v4816
        %vm4818 = vweird.f32 %v4812
        %vm4819 = vweird.f32 %v4813
        %vm4820 = vmor %vm4818, %vm4819
        %v4821 = vsel %vm4820, %v4813, %v4817
        %v4822 = vand.u32 2147483647, %v4812
        %vm4823 = vcmp.eq.f32.partialorder %v4822, 8.507059e+37
        %v4824 = vand.u32 %v4812, 2147483648
        %v4825 = vor.u32 1.1754944e-38, %v4824
        %v4826 = vsel %vm4823, %v4825, %v4821
        %v4827 = vmul.f32 %v4802, %v4826
        %v4828 = vmin.f32 %v4827, 1.0
        %v4829 = vmax.f32 %v4828, -1.0
        %v4830 = vmul.f32 %v3011, %v3011
        %v4831 = vmin.f32 16.0, %v4830
        %v4832 = vmul.f32 %v4831, 2.1237322e-06
        %v4833 = vadd.f32 %v4832, 0.00028619796
        %v4834 = vmul.f32 %v4831, %v4833
        %v4835 = vadd.f32 %v4834, 0.0036580483
        %v4836 = vmul.f32 %v4831, %v4835
        %v4837 = vadd.f32 %v4836, 0.05243302
        %v4838 = vmul.f32 %v4831, %v4837
        %v4839 = vadd.f32 %v4838, 0.18741608
        %v4840 = vmul.f32 %v4831, %v4839
        %v4841 = vadd.f32 %v4840, 1.1283791
        %v4842 = vmul.f32 %v3011, %v4841
        %v4843 = vmul.f32 %v4831, 3.8918573e-05
        %v4844 = vadd.f32 %v4843, 0.001143296
        %v4845 = vmul.f32 %v4831, %v4844
        %v4846 = vadd.f32 %v4845, 0.014752088
        %v4847 = vmul.f32 %v4831, %v4846
        %v4848 = vadd.f32 %v4847, 0.112945676
        %v4849 = vmul.f32 %v4831, %v4848
        %v4850 = vadd.f32 %v4849, 0.4994258
        %v4851 = vmul.f32 %v4831, %v4850
        %v4852 = vadd.f32 %v4851, 1.0
        %v4853 = vrcp.pop %v4852
        %v4854 = vmul.f32 %v4852, %v4853
        %v4855 = vsub.f32 1.0, %v4854
        %v4856 = vmul.f32 %v4853, %v4855
        %v4857 = vadd.f32 %v4853, %v4856
        %vm4858 = vweird.f32 %v4852
        %vm4859 = vweird.f32 %v4853
        %vm4860 = vmor %vm4858, %vm4859
        %v4861 = vsel %vm4860, %v4853, %v4857
        %v4862 = vand.u32 2147483647, %v4852
        %vm4863 = vcmp.eq.f32.partialorder %v4862, 8.507059e+37
        %v4864 = vand.u32 %v4852, 2147483648
        %v4865 = vor.u32 1.1754944e-38, %v4864
        %v4866 = vsel %vm4863, %v4865, %v4861
        %v4867 = vmul.f32 %v4842, %v4866
        %v4868 = vmin.f32 %v4867, 1.0
        %v4869 = vmax.f32 %v4868, -1.0
        %v4870 = vmul.f32 %v3012, %v3012
        %v4871 = vmin.f32 16.0, %v4870
        %v4872 = vmul.f32 %v4871, 2.1237322e-06
        %v4873 = vadd.f32 %v4872, 0.00028619796
        %v4874 = vmul.f32 %v4871, %v4873
        %v4875 = vadd.f32 %v4874, 0.0036580483
        %v4876 = vmul.f32 %v4871, %v4875
        %v4877 = vadd.f32 %v4876, 0.05243302
        %v4878 = vmul.f32 %v4871, %v4877
        %v4879 = vadd.f32 %v4878, 0.18741608
        %v4880 = vmul.f32 %v4871, %v4879
        %v4881 = vadd.f32 %v4880, 1.1283791
        %v4882 = vmul.f32 %v3012, %v4881
        %v4883 = vmul.f32 %v4871, 3.8918573e-05
        %v4884 = vadd.f32 %v4883, 0.001143296
        %v4885 = vmul.f32 %v4871, %v4884
        %v4886 = vadd.f32 %v4885, 0.014752088
        %v4887 = vmul.f32 %v4871, %v4886
        %v4888 = vadd.f32 %v4887, 0.112945676
        %v4889 = vmul.f32 %v4871, %v4888
        %v4890 = vadd.f32 %v4889, 0.4994258
        %v4891 = vmul.f32 %v4871, %v4890
        %v4892 = vadd.f32 %v4891, 1.0
        %v4893 = vrcp.pop %v4892
        %v4894 = vmul.f32 %v4892, %v4893
        %v4895 = vsub.f32 1.0, %v4894
        %v4896 = vmul.f32 %v4893, %v4895
        %v4897 = vadd.f32 %v4893, %v4896
        %vm4898 = vweird.f32 %v4892
        %vm4899 = vweird.f32 %v4893
        %vm4900 = vmor %vm4898, %vm4899
        %v4901 = vsel %vm4900, %v4893, %v4897
        %v4902 = vand.u32 2147483647, %v4892
        %vm4903 = vcmp.eq.f32.partialorder %v4902, 8.507059e+37
        %v4904 = vand.u32 %v4892, 2147483648
        %v4905 = vor.u32 1.1754944e-38, %v4904
        %v4906 = vsel %vm4903, %v4905, %v4901
        %v4907 = vmul.f32 %v4882, %v4906
        %v4908 = vmin.f32 %v4907, 1.0
        %v4909 = vmax.f32 %v4908, -1.0
        %v4910 = vmul.f32 %v3013, %v3013
        %v4911 = vmin.f32 16.0, %v4910
        %v4912 = vmul.f32 %v4911, 2.1237322e-06
        %v4913 = vadd.f32 %v4912, 0.00028619796
        %v4914 = vmul.f32 %v4911, %v4913
        %v4915 = vadd.f32 %v4914, 0.0036580483
        %v4916 = vmul.f32 %v4911, %v4915
        %v4917 = vadd.f32 %v4916, 0.05243302
        %v4918 = vmul.f32 %v4911, %v4917
        %v4919 = vadd.f32 %v4918, 0.18741608
        %v4920 = vmul.f32 %v4911, %v4919
        %v4921 = vadd.f32 %v4920, 1.1283791
        %v4922 = vmul.f32 %v3013, %v4921
        %v4923 = vmul.f32 %v4911, 3.8918573e-05
        %v4924 = vadd.f32 %v4923, 0.001143296
        %v4925 = vmul.f32 %v4911, %v4924
        %v4926 = vadd.f32 %v4925, 0.014752088
        %v4927 = vmul.f32 %v4911, %v4926
        %v4928 = vadd.f32 %v4927, 0.112945676
        %v4929 = vmul.f32 %v4911, %v4928
        %v4930 = vadd.f32 %v4929, 0.4994258
        %v4931 = vmul.f32 %v4911, %v4930
        %v4932 = vadd.f32 %v4931, 1.0
        %v4933 = vrcp.pop %v4932
        %v4934 = vmul.f32 %v4932, %v4933
        %v4935 = vsub.f32 1.0, %v4934
        %v4936 = vmul.f32 %v4933, %v4935
        %v4937 = vadd.f32 %v4933, %v4936
        %vm4938 = vweird.f32 %v4932
        %vm4939 = vweird.f32 %v4933
        %vm4940 = vmor %vm4938, %vm4939
        %v4941 = vsel %vm4940, %v4933, %v4937
        %v4942 = vand.u32 2147483647, %v4932
        %vm4943 = vcmp.eq.f32.partialorder %v4942, 8.507059e+37
        %v4944 = vand.u32 %v4932, 2147483648
        %v4945 = vor.u32 1.1754944e-38, %v4944
        %v4946 = vsel %vm4943, %v4945, %v4941
        %v4947 = vmul.f32 %v4922, %v4946
        %v4948 = vmin.f32 %v4947, 1.0
        %v4949 = vmax.f32 %v4948, -1.0
        %v4950 = vmul.f32 %v3014, %v3014
        %v4951 = vmin.f32 16.0, %v4950
        %v4952 = vmul.f32 %v4951, 2.1237322e-06
        %v4953 = vadd.f32 %v4952, 0.00028619796
        %v4954 = vmul.f32 %v4951, %v4953
        %v4955 = vadd.f32 %v4954, 0.0036580483
        %v4956 = vmul.f32 %v4951, %v4955
        %v4957 = vadd.f32 %v4956, 0.05243302
        %v4958 = vmul.f32 %v4951, %v4957
        %v4959 = vadd.f32 %v4958, 0.18741608
        %v4960 = vmul.f32 %v4951, %v4959
        %v4961 = vadd.f32 %v4960, 1.1283791
        %v4962 = vmul.f32 %v3014, %v4961
        %v4963 = vmul.f32 %v4951, 3.8918573e-05
        %v4964 = vadd.f32 %v4963, 0.001143296
        %v4965 = vmul.f32 %v4951, %v4964
        %v4966 = vadd.f32 %v4965, 0.014752088
        %v4967 = vmul.f32 %v4951, %v4966
        %v4968 = vadd.f32 %v4967, 0.112945676
        %v4969 = vmul.f32 %v4951, %v4968
        %v4970 = vadd.f32 %v4969, 0.4994258
        %v4971 = vmul.f32 %v4951, %v4970
        %v4972 = vadd.f32 %v4971, 1.0
        %v4973 = vrcp.pop %v4972
        %v4974 = vmul.f32 %v4972, %v4973
        %v4975 = vsub.f32 1.0, %v4974
        %v4976 = vmul.f32 %v4973, %v4975
        %v4977 = vadd.f32 %v4973, %v4976
        %vm4978 = vweird.f32 %v4972
        %vm4979 = vweird.f32 %v4973
        %vm4980 = vmor %vm4978, %vm4979
        %v4981 = vsel %vm4980, %v4973, %v4977
        %v4982 = vand.u32 2147483647, %v4972
        %vm4983 = vcmp.eq.f32.partialorder %v4982, 8.507059e+37
        %v4984 = vand.u32 %v4972, 2147483648
        %v4985 = vor.u32 1.1754944e-38, %v4984
        %v4986 = vsel %vm4983, %v4985, %v4981
        %v4987 = vmul.f32 %v4962, %v4986
        %v4988 = vmin.f32 %v4987, 1.0
        %v4989 = vmax.f32 %v4988, -1.0
        %v4990 = vmul.f32 %v3015, %v3015
        %v4991 = vmin.f32 16.0, %v4990
        %v4992 = vmul.f32 %v4991, 2.1237322e-06
        %v4993 = vadd.f32 %v4992, 0.00028619796
        %v4994 = vmul.f32 %v4991, %v4993
        %v4995 = vadd.f32 %v4994, 0.0036580483
        %v4996 = vmul.f32 %v4991, %v4995
        %v4997 = vadd.f32 %v4996, 0.05243302
        %v4998 = vmul.f32 %v4991, %v4997
        %v4999 = vadd.f32 %v4998, 0.18741608
        %v5000 = vmul.f32 %v4991, %v4999
        %v5001 = vadd.f32 %v5000, 1.1283791
        %v5002 = vmul.f32 %v3015, %v5001
        %v5003 = vmul.f32 %v4991, 3.8918573e-05
        %v5004 = vadd.f32 %v5003, 0.001143296
        %v5005 = vmul.f32 %v4991, %v5004
        %v5006 = vadd.f32 %v5005, 0.014752088
        %v5007 = vmul.f32 %v4991, %v5006
        %v5008 = vadd.f32 %v5007, 0.112945676
        %v5009 = vmul.f32 %v4991, %v5008
        %v5010 = vadd.f32 %v5009, 0.4994258
        %v5011 = vmul.f32 %v4991, %v5010
        %v5012 = vadd.f32 %v5011, 1.0
        %v5013 = vrcp.pop %v5012
        %v5014 = vmul.f32 %v5012, %v5013
        %v5015 = vsub.f32 1.0, %v5014
        %v5016 = vmul.f32 %v5013, %v5015
        %v5017 = vadd.f32 %v5013, %v5016
        %vm5018 = vweird.f32 %v5012
        %vm5019 = vweird.f32 %v5013
        %vm5020 = vmor %vm5018, %vm5019
        %v5021 = vsel %vm5020, %v5013, %v5017
        %v5022 = vand.u32 2147483647, %v5012
        %vm5023 = vcmp.eq.f32.partialorder %v5022, 8.507059e+37
        %v5024 = vand.u32 %v5012, 2147483648
        %v5025 = vor.u32 1.1754944e-38, %v5024
        %v5026 = vsel %vm5023, %v5025, %v5021
        %v5027 = vmul.f32 %v5002, %v5026
        %v5028 = vmin.f32 %v5027, 1.0
        %v5029 = vmax.f32 %v5028, -1.0
        %v5030 = vmul.f32 %v3016, %v3016
        %v5031 = vmin.f32 16.0, %v5030
        %v5032 = vmul.f32 %v5031, 2.1237322e-06
        %v5033 = vadd.f32 %v5032, 0.00028619796
        %v5034 = vmul.f32 %v5031, %v5033
        %v5035 = vadd.f32 %v5034, 0.0036580483
        %v5036 = vmul.f32 %v5031, %v5035
        %v5037 = vadd.f32 %v5036, 0.05243302
        %v5038 = vmul.f32 %v5031, %v5037
        %v5039 = vadd.f32 %v5038, 0.18741608
        %v5040 = vmul.f32 %v5031, %v5039
        %v5041 = vadd.f32 %v5040, 1.1283791
        %v5042 = vmul.f32 %v3016, %v5041
        %v5043 = vmul.f32 %v5031, 3.8918573e-05
        %v5044 = vadd.f32 %v5043, 0.001143296
        %v5045 = vmul.f32 %v5031, %v5044
        %v5046 = vadd.f32 %v5045, 0.014752088
        %v5047 = vmul.f32 %v5031, %v5046
        %v5048 = vadd.f32 %v5047, 0.112945676
        %v5049 = vmul.f32 %v5031, %v5048
        %v5050 = vadd.f32 %v5049, 0.4994258
        %v5051 = vmul.f32 %v5031, %v5050
        %v5052 = vadd.f32 %v5051, 1.0
        %v5053 = vrcp.pop %v5052
        %v5054 = vmul.f32 %v5052, %v5053
        %v5055 = vsub.f32 1.0, %v5054
        %v5056 = vmul.f32 %v5053, %v5055
        %v5057 = vadd.f32 %v5053, %v5056
        %vm5058 = vweird.f32 %v5052
        %vm5059 = vweird.f32 %v5053
        %vm5060 = vmor %vm5058, %vm5059
        %v5061 = vsel %vm5060, %v5053, %v5057
        %v5062 = vand.u32 2147483647, %v5052
        %vm5063 = vcmp.eq.f32.partialorder %v5062, 8.507059e+37
        %v5064 = vand.u32 %v5052, 2147483648
        %v5065 = vor.u32 1.1754944e-38, %v5064
        %v5066 = vsel %vm5063, %v5065, %v5061
        %v5067 = vmul.f32 %v5042, %v5066
        %v5068 = vmin.f32 %v5067, 1.0
        %v5069 = vmax.f32 %v5068, -1.0
        %v5070 = vmul.f32 %v3017, %v3017
        %v5071 = vmin.f32 16.0, %v5070
        %v5072 = vmul.f32 %v5071, 2.1237322e-06
        %v5073 = vadd.f32 %v5072, 0.00028619796
        %v5074 = vmul.f32 %v5071, %v5073
        %v5075 = vadd.f32 %v5074, 0.0036580483
        %v5076 = vmul.f32 %v5071, %v5075
        %v5077 = vadd.f32 %v5076, 0.05243302
        %v5078 = vmul.f32 %v5071, %v5077
        %v5079 = vadd.f32 %v5078, 0.18741608
        %v5080 = vmul.f32 %v5071, %v5079
        %v5081 = vadd.f32 %v5080, 1.1283791
        %v5082 = vmul.f32 %v3017, %v5081
        %v5083 = vmul.f32 %v5071, 3.8918573e-05
        %v5084 = vadd.f32 %v5083, 0.001143296
        %v5085 = vmul.f32 %v5071, %v5084
        %v5086 = vadd.f32 %v5085, 0.014752088
        %v5087 = vmul.f32 %v5071, %v5086
        %v5088 = vadd.f32 %v5087, 0.112945676
        %v5089 = vmul.f32 %v5071, %v5088
        %v5090 = vadd.f32 %v5089, 0.4994258
        %v5091 = vmul.f32 %v5071, %v5090
        %v5092 = vadd.f32 %v5091, 1.0
        %v5093 = vrcp.pop %v5092
        %v5094 = vmul.f32 %v5092, %v5093
        %v5095 = vsub.f32 1.0, %v5094
        %v5096 = vmul.f32 %v5093, %v5095
        %v5097 = vadd.f32 %v5093, %v5096
        %vm5098 = vweird.f32 %v5092
        %vm5099 = vweird.f32 %v5093
        %vm5100 = vmor %vm5098, %vm5099
        %v5101 = vsel %vm5100, %v5093, %v5097
        %v5102 = vand.u32 2147483647, %v5092
        %vm5103 = vcmp.eq.f32.partialorder %v5102, 8.507059e+37
        %v5104 = vand.u32 %v5092, 2147483648
        %v5105 = vor.u32 1.1754944e-38, %v5104
        %v5106 = vsel %vm5103, %v5105, %v5101
        %v5107 = vmul.f32 %v5082, %v5106
        %v5108 = vmin.f32 %v5107, 1.0
        %v5109 = vmax.f32 %v5108, -1.0
        %v5110 = vmul.f32 %v3018, %v3018
        %v5111 = vmin.f32 16.0, %v5110
        %v5112 = vmul.f32 %v5111, 2.1237322e-06
        %v5113 = vadd.f32 %v5112, 0.00028619796
        %v5114 = vmul.f32 %v5111, %v5113
        %v5115 = vadd.f32 %v5114, 0.0036580483
        %v5116 = vmul.f32 %v5111, %v5115
        %v5117 = vadd.f32 %v5116, 0.05243302
        %v5118 = vmul.f32 %v5111, %v5117
        %v5119 = vadd.f32 %v5118, 0.18741608
        %v5120 = vmul.f32 %v5111, %v5119
        %v5121 = vadd.f32 %v5120, 1.1283791
        %v5122 = vmul.f32 %v3018, %v5121
        %v5123 = vmul.f32 %v5111, 3.8918573e-05
        %v5124 = vadd.f32 %v5123, 0.001143296
        %v5125 = vmul.f32 %v5111, %v5124
        %v5126 = vadd.f32 %v5125, 0.014752088
        %v5127 = vmul.f32 %v5111, %v5126
        %v5128 = vadd.f32 %v5127, 0.112945676
        %v5129 = vmul.f32 %v5111, %v5128
        %v5130 = vadd.f32 %v5129, 0.4994258
        %v5131 = vmul.f32 %v5111, %v5130
        %v5132 = vadd.f32 %v5131, 1.0
        %v5133 = vrcp.pop %v5132
        %v5134 = vmul.f32 %v5132, %v5133
        %v5135 = vsub.f32 1.0, %v5134
        %v5136 = vmul.f32 %v5133, %v5135
        %v5137 = vadd.f32 %v5133, %v5136
        %vm5138 = vweird.f32 %v5132
        %vm5139 = vweird.f32 %v5133
        %vm5140 = vmor %vm5138, %vm5139
        %v5141 = vsel %vm5140, %v5133, %v5137
        %v5142 = vand.u32 2147483647, %v5132
        %vm5143 = vcmp.eq.f32.partialorder %v5142, 8.507059e+37
        %v5144 = vand.u32 %v5132, 2147483648
        %v5145 = vor.u32 1.1754944e-38, %v5144
        %v5146 = vsel %vm5143, %v5145, %v5141
        %v5147 = vmul.f32 %v5122, %v5146
        %v5148 = vmin.f32 %v5147, 1.0
        %v5149 = vmax.f32 %v5148, -1.0
        %v5150 = vmul.f32 %v3019, %v3019
        %v5151 = vmin.f32 16.0, %v5150
        %v5152 = vmul.f32 %v5151, 2.1237322e-06
        %v5153 = vadd.f32 %v5152, 0.00028619796
        %v5154 = vmul.f32 %v5151, %v5153
        %v5155 = vadd.f32 %v5154, 0.0036580483
        %v5156 = vmul.f32 %v5151, %v5155
        %v5157 = vadd.f32 %v5156, 0.05243302
        %v5158 = vmul.f32 %v5151, %v5157
        %v5159 = vadd.f32 %v5158, 0.18741608
        %v5160 = vmul.f32 %v5151, %v5159
        %v5161 = vadd.f32 %v5160, 1.1283791
        %v5162 = vmul.f32 %v3019, %v5161
        %v5163 = vmul.f32 %v5151, 3.8918573e-05
        %v5164 = vadd.f32 %v5163, 0.001143296
        %v5165 = vmul.f32 %v5151, %v5164
        %v5166 = vadd.f32 %v5165, 0.014752088
        %v5167 = vmul.f32 %v5151, %v5166
        %v5168 = vadd.f32 %v5167, 0.112945676
        %v5169 = vmul.f32 %v5151, %v5168
        %v5170 = vadd.f32 %v5169, 0.4994258
        %v5171 = vmul.f32 %v5151, %v5170
        %v5172 = vadd.f32 %v5171, 1.0
        %v5173 = vrcp.pop %v5172
        %v5174 = vmul.f32 %v5172, %v5173
        %v5175 = vsub.f32 1.0, %v5174
        %v5176 = vmul.f32 %v5173, %v5175
        %v5177 = vadd.f32 %v5173, %v5176
        %vm5178 = vweird.f32 %v5172
        %vm5179 = vweird.f32 %v5173
        %vm5180 = vmor %vm5178, %vm5179
        %v5181 = vsel %vm5180, %v5173, %v5177
        %v5182 = vand.u32 2147483647, %v5172
        %vm5183 = vcmp.eq.f32.partialorder %v5182, 8.507059e+37
        %v5184 = vand.u32 %v5172, 2147483648
        %v5185 = vor.u32 1.1754944e-38, %v5184
        %v5186 = vsel %vm5183, %v5185, %v5181
        %v5187 = vmul.f32 %v5162, %v5186
        %v5188 = vmin.f32 %v5187, 1.0
        %v5189 = vmax.f32 %v5188, -1.0
        %v5190 = vmul.f32 %v3020, %v3020
        %v5191 = vmin.f32 16.0, %v5190
        %v5192 = vmul.f32 %v5191, 2.1237322e-06
        %v5193 = vadd.f32 %v5192, 0.00028619796
        %v5194 = vmul.f32 %v5191, %v5193
        %v5195 = vadd.f32 %v5194, 0.0036580483
        %v5196 = vmul.f32 %v5191, %v5195
        %v5197 = vadd.f32 %v5196, 0.05243302
        %v5198 = vmul.f32 %v5191, %v5197
        %v5199 = vadd.f32 %v5198, 0.18741608
        %v5200 = vmul.f32 %v5191, %v5199
        %v5201 = vadd.f32 %v5200, 1.1283791
        %v5202 = vmul.f32 %v3020, %v5201
        %v5203 = vmul.f32 %v5191, 3.8918573e-05
        %v5204 = vadd.f32 %v5203, 0.001143296
        %v5205 = vmul.f32 %v5191, %v5204
        %v5206 = vadd.f32 %v5205, 0.014752088
        %v5207 = vmul.f32 %v5191, %v5206
        %v5208 = vadd.f32 %v5207, 0.112945676
        %v5209 = vmul.f32 %v5191, %v5208
        %v5210 = vadd.f32 %v5209, 0.4994258
        %v5211 = vmul.f32 %v5191, %v5210
        %v5212 = vadd.f32 %v5211, 1.0
        %v5213 = vrcp.pop %v5212
        %v5214 = vmul.f32 %v5212, %v5213
        %v5215 = vsub.f32 1.0, %v5214
        %v5216 = vmul.f32 %v5213, %v5215
        %v5217 = vadd.f32 %v5213, %v5216
        %vm5218 = vweird.f32 %v5212
        %vm5219 = vweird.f32 %v5213
        %vm5220 = vmor %vm5218, %vm5219
        %v5221 = vsel %vm5220, %v5213, %v5217
        %v5222 = vand.u32 2147483647, %v5212
        %vm5223 = vcmp.eq.f32.partialorder %v5222, 8.507059e+37
        %v5224 = vand.u32 %v5212, 2147483648
        %v5225 = vor.u32 1.1754944e-38, %v5224
        %v5226 = vsel %vm5223, %v5225, %v5221
        %v5227 = vmul.f32 %v5202, %v5226
        %v5228 = vmin.f32 %v5227, 1.0
        %v5229 = vmax.f32 %v5228, -1.0
        %v5230 = vmul.f32 %v3021, %v3021
        %v5231 = vmin.f32 16.0, %v5230
        %v5232 = vmul.f32 %v5231, 2.1237322e-06
        %v5233 = vadd.f32 %v5232, 0.00028619796
        %v5234 = vmul.f32 %v5231, %v5233
        %v5235 = vadd.f32 %v5234, 0.0036580483
        %v5236 = vmul.f32 %v5231, %v5235
        %v5237 = vadd.f32 %v5236, 0.05243302
        %v5238 = vmul.f32 %v5231, %v5237
        %v5239 = vadd.f32 %v5238, 0.18741608
        %v5240 = vmul.f32 %v5231, %v5239
        %v5241 = vadd.f32 %v5240, 1.1283791
        %v5242 = vmul.f32 %v3021, %v5241
        %v5243 = vmul.f32 %v5231, 3.8918573e-05
        %v5244 = vadd.f32 %v5243, 0.001143296
        %v5245 = vmul.f32 %v5231, %v5244
        %v5246 = vadd.f32 %v5245, 0.014752088
        %v5247 = vmul.f32 %v5231, %v5246
        %v5248 = vadd.f32 %v5247, 0.112945676
        %v5249 = vmul.f32 %v5231, %v5248
        %v5250 = vadd.f32 %v5249, 0.4994258
        %v5251 = vmul.f32 %v5231, %v5250
        %v5252 = vadd.f32 %v5251, 1.0
        %v5253 = vrcp.pop %v5252
        %v5254 = vmul.f32 %v5252, %v5253
        %v5255 = vsub.f32 1.0, %v5254
        %v5256 = vmul.f32 %v5253, %v5255
        %v5257 = vadd.f32 %v5253, %v5256
        %vm5258 = vweird.f32 %v5252
        %vm5259 = vweird.f32 %v5253
        %vm5260 = vmor %vm5258, %vm5259
        %v5261 = vsel %vm5260, %v5253, %v5257
        %v5262 = vand.u32 2147483647, %v5252
        %vm5263 = vcmp.eq.f32.partialorder %v5262, 8.507059e+37
        %v5264 = vand.u32 %v5252, 2147483648
        %v5265 = vor.u32 1.1754944e-38, %v5264
        %v5266 = vsel %vm5263, %v5265, %v5261
        %v5267 = vmul.f32 %v5242, %v5266
        %v5268 = vmin.f32 %v5267, 1.0
        %v5269 = vmax.f32 %v5268, -1.0
        %v5270 = vmul.f32 %v3022, %v3022
        %v5271 = vmin.f32 16.0, %v5270
        %v5272 = vmul.f32 %v5271, 2.1237322e-06
        %v5273 = vadd.f32 %v5272, 0.00028619796
        %v5274 = vmul.f32 %v5271, %v5273
        %v5275 = vadd.f32 %v5274, 0.0036580483
        %v5276 = vmul.f32 %v5271, %v5275
        %v5277 = vadd.f32 %v5276, 0.05243302
        %v5278 = vmul.f32 %v5271, %v5277
        %v5279 = vadd.f32 %v5278, 0.18741608
        %v5280 = vmul.f32 %v5271, %v5279
        %v5281 = vadd.f32 %v5280, 1.1283791
        %v5282 = vmul.f32 %v3022, %v5281
        %v5283 = vmul.f32 %v5271, 3.8918573e-05
        %v5284 = vadd.f32 %v5283, 0.001143296
        %v5285 = vmul.f32 %v5271, %v5284
        %v5286 = vadd.f32 %v5285, 0.014752088
        %v5287 = vmul.f32 %v5271, %v5286
        %v5288 = vadd.f32 %v5287, 0.112945676
        %v5289 = vmul.f32 %v5271, %v5288
        %v5290 = vadd.f32 %v5289, 0.4994258
        %v5291 = vmul.f32 %v5271, %v5290
        %v5292 = vadd.f32 %v5291, 1.0
        %v5293 = vrcp.pop %v5292
        %v5294 = vmul.f32 %v5292, %v5293
        %v5295 = vsub.f32 1.0, %v5294
        %v5296 = vmul.f32 %v5293, %v5295
        %v5297 = vadd.f32 %v5293, %v5296
        %vm5298 = vweird.f32 %v5292
        %vm5299 = vweird.f32 %v5293
        %vm5300 = vmor %vm5298, %vm5299
        %v5301 = vsel %vm5300, %v5293, %v5297
        %v5302 = vand.u32 2147483647, %v5292
        %vm5303 = vcmp.eq.f32.partialorder %v5302, 8.507059e+37
        %v5304 = vand.u32 %v5292, 2147483648
        %v5305 = vor.u32 1.1754944e-38, %v5304
        %v5306 = vsel %vm5303, %v5305, %v5301
        %v5307 = vmul.f32 %v5282, %v5306
        %v5308 = vmin.f32 %v5307, 1.0
        %v5309 = vmax.f32 %v5308, -1.0
        %v5310 = vmul.f32 %v3023, %v3023
        %v5311 = vmin.f32 16.0, %v5310
        %v5312 = vmul.f32 %v5311, 2.1237322e-06
        %v5313 = vadd.f32 %v5312, 0.00028619796
        %v5314 = vmul.f32 %v5311, %v5313
        %v5315 = vadd.f32 %v5314, 0.0036580483
        %v5316 = vmul.f32 %v5311, %v5315
        %v5317 = vadd.f32 %v5316, 0.05243302
        %v5318 = vmul.f32 %v5311, %v5317
        %v5319 = vadd.f32 %v5318, 0.18741608
        %v5320 = vmul.f32 %v5311, %v5319
        %v5321 = vadd.f32 %v5320, 1.1283791
        %v5322 = vmul.f32 %v3023, %v5321
        %v5323 = vmul.f32 %v5311, 3.8918573e-05
        %v5324 = vadd.f32 %v5323, 0.001143296
        %v5325 = vmul.f32 %v5311, %v5324
        %v5326 = vadd.f32 %v5325, 0.014752088
        %v5327 = vmul.f32 %v5311, %v5326
        %v5328 = vadd.f32 %v5327, 0.112945676
        %v5329 = vmul.f32 %v5311, %v5328
        %v5330 = vadd.f32 %v5329, 0.4994258
        %v5331 = vmul.f32 %v5311, %v5330
        %v5332 = vadd.f32 %v5331, 1.0
        %v5333 = vrcp.pop %v5332
        %v5334 = vmul.f32 %v5332, %v5333
        %v5335 = vsub.f32 1.0, %v5334
        %v5336 = vmul.f32 %v5333, %v5335
        %v5337 = vadd.f32 %v5333, %v5336
        %vm5338 = vweird.f32 %v5332
        %vm5339 = vweird.f32 %v5333
        %vm5340 = vmor %vm5338, %vm5339
        %v5341 = vsel %vm5340, %v5333, %v5337
        %v5342 = vand.u32 2147483647, %v5332
        %vm5343 = vcmp.eq.f32.partialorder %v5342, 8.507059e+37
        %v5344 = vand.u32 %v5332, 2147483648
        %v5345 = vor.u32 1.1754944e-38, %v5344
        %v5346 = vsel %vm5343, %v5345, %v5341
        %v5347 = vmul.f32 %v5322, %v5346
        %v5348 = vmin.f32 %v5347, 1.0
        %v5349 = vmax.f32 %v5348, -1.0
        %v5350 = vmul.f32 %v3024, %v3024
        %v5351 = vmin.f32 16.0, %v5350
        %v5352 = vmul.f32 %v5351, 2.1237322e-06
        %v5353 = vadd.f32 %v5352, 0.00028619796
        %v5354 = vmul.f32 %v5351, %v5353
        %v5355 = vadd.f32 %v5354, 0.0036580483
        %v5356 = vmul.f32 %v5351, %v5355
        %v5357 = vadd.f32 %v5356, 0.05243302
        %v5358 = vmul.f32 %v5351, %v5357
        %v5359 = vadd.f32 %v5358, 0.18741608
        %v5360 = vmul.f32 %v5351, %v5359
        %v5361 = vadd.f32 %v5360, 1.1283791
        %v5362 = vmul.f32 %v3024, %v5361
        %v5363 = vmul.f32 %v5351, 3.8918573e-05
        %v5364 = vadd.f32 %v5363, 0.001143296
        %v5365 = vmul.f32 %v5351, %v5364
        %v5366 = vadd.f32 %v5365, 0.014752088
        %v5367 = vmul.f32 %v5351, %v5366
        %v5368 = vadd.f32 %v5367, 0.112945676
        %v5369 = vmul.f32 %v5351, %v5368
        %v5370 = vadd.f32 %v5369, 0.4994258
        %v5371 = vmul.f32 %v5351, %v5370
        %v5372 = vadd.f32 %v5371, 1.0
        %v5373 = vrcp.pop %v5372
        %v5374 = vmul.f32 %v5372, %v5373
        %v5375 = vsub.f32 1.0, %v5374
        %v5376 = vmul.f32 %v5373, %v5375
        %v5377 = vadd.f32 %v5373, %v5376
        %vm5378 = vweird.f32 %v5372
        %vm5379 = vweird.f32 %v5373
        %vm5380 = vmor %vm5378, %vm5379
        %v5381 = vsel %vm5380, %v5373, %v5377
        %v5382 = vand.u32 2147483647, %v5372
        %vm5383 = vcmp.eq.f32.partialorder %v5382, 8.507059e+37
        %v5384 = vand.u32 %v5372, 2147483648
        %v5385 = vor.u32 1.1754944e-38, %v5384
        %v5386 = vsel %vm5383, %v5385, %v5381
        %v5387 = vmul.f32 %v5362, %v5386
        %v5388 = vmin.f32 %v5387, 1.0
        %v5389 = vmax.f32 %v5388, -1.0
        %v5390 = vmul.f32 %v3025, %v3025
        %v5391 = vmin.f32 16.0, %v5390
        %v5392 = vmul.f32 %v5391, 2.1237322e-06
        %v5393 = vadd.f32 %v5392, 0.00028619796
        %v5394 = vmul.f32 %v5391, %v5393
        %v5395 = vadd.f32 %v5394, 0.0036580483
        %v5396 = vmul.f32 %v5391, %v5395
        %v5397 = vadd.f32 %v5396, 0.05243302
        %v5398 = vmul.f32 %v5391, %v5397
        %v5399 = vadd.f32 %v5398, 0.18741608
        %v5400 = vmul.f32 %v5391, %v5399
        %v5401 = vadd.f32 %v5400, 1.1283791
        %v5402 = vmul.f32 %v3025, %v5401
        %v5403 = vmul.f32 %v5391, 3.8918573e-05
        %v5404 = vadd.f32 %v5403, 0.001143296
        %v5405 = vmul.f32 %v5391, %v5404
        %v5406 = vadd.f32 %v5405, 0.014752088
        %v5407 = vmul.f32 %v5391, %v5406
        %v5408 = vadd.f32 %v5407, 0.112945676
        %v5409 = vmul.f32 %v5391, %v5408
        %v5410 = vadd.f32 %v5409, 0.4994258
        %v5411 = vmul.f32 %v5391, %v5410
        %v5412 = vadd.f32 %v5411, 1.0
        %v5413 = vrcp.pop %v5412
        %v5414 = vmul.f32 %v5412, %v5413
        %v5415 = vsub.f32 1.0, %v5414
        %v5416 = vmul.f32 %v5413, %v5415
        %v5417 = vadd.f32 %v5413, %v5416
        %vm5418 = vweird.f32 %v5412
        %vm5419 = vweird.f32 %v5413
        %vm5420 = vmor %vm5418, %vm5419
        %v5421 = vsel %vm5420, %v5413, %v5417
        %v5422 = vand.u32 2147483647, %v5412
        %vm5423 = vcmp.eq.f32.partialorder %v5422, 8.507059e+37
        %v5424 = vand.u32 %v5412, 2147483648
        %v5425 = vor.u32 1.1754944e-38, %v5424
        %v5426 = vsel %vm5423, %v5425, %v5421
        %v5427 = vmul.f32 %v5402, %v5426
        %v5428 = vmin.f32 %v5427, 1.0
        %v5429 = vmax.f32 %v5428, -1.0
        %v5430 = vmul.f32 %v3026, %v3026
        %v5431 = vmin.f32 16.0, %v5430
        %v5432 = vmul.f32 %v5431, 2.1237322e-06
        %v5433 = vadd.f32 %v5432, 0.00028619796
        %v5434 = vmul.f32 %v5431, %v5433
        %v5435 = vadd.f32 %v5434, 0.0036580483
        %v5436 = vmul.f32 %v5431, %v5435
        %v5437 = vadd.f32 %v5436, 0.05243302
        %v5438 = vmul.f32 %v5431, %v5437
        %v5439 = vadd.f32 %v5438, 0.18741608
        %v5440 = vmul.f32 %v5431, %v5439
        %v5441 = vadd.f32 %v5440, 1.1283791
        %v5442 = vmul.f32 %v3026, %v5441
        %v5443 = vmul.f32 %v5431, 3.8918573e-05
        %v5444 = vadd.f32 %v5443, 0.001143296
        %v5445 = vmul.f32 %v5431, %v5444
        %v5446 = vadd.f32 %v5445, 0.014752088
        %v5447 = vmul.f32 %v5431, %v5446
        %v5448 = vadd.f32 %v5447, 0.112945676
        %v5449 = vmul.f32 %v5431, %v5448
        %v5450 = vadd.f32 %v5449, 0.4994258
        %v5451 = vmul.f32 %v5431, %v5450
        %v5452 = vadd.f32 %v5451, 1.0
        %v5453 = vrcp.pop %v5452
        %v5454 = vmul.f32 %v5452, %v5453
        %v5455 = vsub.f32 1.0, %v5454
        %v5456 = vmul.f32 %v5453, %v5455
        %v5457 = vadd.f32 %v5453, %v5456
        %vm5458 = vweird.f32 %v5452
        %vm5459 = vweird.f32 %v5453
        %vm5460 = vmor %vm5458, %vm5459
        %v5461 = vsel %vm5460, %v5453, %v5457
        %v5462 = vand.u32 2147483647, %v5452
        %vm5463 = vcmp.eq.f32.partialorder %v5462, 8.507059e+37
        %v5464 = vand.u32 %v5452, 2147483648
        %v5465 = vor.u32 1.1754944e-38, %v5464
        %v5466 = vsel %vm5463, %v5465, %v5461
        %v5467 = vmul.f32 %v5442, %v5466
        %v5468 = vmin.f32 %v5467, 1.0
        %v5469 = vmax.f32 %v5468, -1.0
        %v5470 = vmul.f32 %v3027, %v3027
        %v5471 = vmin.f32 16.0, %v5470
        %v5472 = vmul.f32 %v5471, 2.1237322e-06
        %v5473 = vadd.f32 %v5472, 0.00028619796
        %v5474 = vmul.f32 %v5471, %v5473
        %v5475 = vadd.f32 %v5474, 0.0036580483
        %v5476 = vmul.f32 %v5471, %v5475
        %v5477 = vadd.f32 %v5476, 0.05243302
        %v5478 = vmul.f32 %v5471, %v5477
        %v5479 = vadd.f32 %v5478, 0.18741608
        %v5480 = vmul.f32 %v5471, %v5479
        %v5481 = vadd.f32 %v5480, 1.1283791
        %v5482 = vmul.f32 %v3027, %v5481
        %v5483 = vmul.f32 %v5471, 3.8918573e-05
        %v5484 = vadd.f32 %v5483, 0.001143296
        %v5485 = vmul.f32 %v5471, %v5484
        %v5486 = vadd.f32 %v5485, 0.014752088
        %v5487 = vmul.f32 %v5471, %v5486
        %v5488 = vadd.f32 %v5487, 0.112945676
        %v5489 = vmul.f32 %v5471, %v5488
        %v5490 = vadd.f32 %v5489, 0.4994258
        %v5491 = vmul.f32 %v5471, %v5490
        %v5492 = vadd.f32 %v5491, 1.0
        %v5493 = vrcp.pop %v5492
        %v5494 = vmul.f32 %v5492, %v5493
        %v5495 = vsub.f32 1.0, %v5494
        %v5496 = vmul.f32 %v5493, %v5495
        %v5497 = vadd.f32 %v5493, %v5496
        %vm5498 = vweird.f32 %v5492
        %vm5499 = vweird.f32 %v5493
        %vm5500 = vmor %vm5498, %vm5499
        %v5501 = vsel %vm5500, %v5493, %v5497
        %v5502 = vand.u32 2147483647, %v5492
        %vm5503 = vcmp.eq.f32.partialorder %v5502, 8.507059e+37
        %v5504 = vand.u32 %v5492, 2147483648
        %v5505 = vor.u32 1.1754944e-38, %v5504
        %v5506 = vsel %vm5503, %v5505, %v5501
        %v5507 = vmul.f32 %v5482, %v5506
        %v5508 = vmin.f32 %v5507, 1.0
        %v5509 = vmax.f32 %v5508, -1.0
        %v5510 = vmul.f32 %v3028, %v3028
        %v5511 = vmin.f32 16.0, %v5510
        %v5512 = vmul.f32 %v5511, 2.1237322e-06
        %v5513 = vadd.f32 %v5512, 0.00028619796
        %v5514 = vmul.f32 %v5511, %v5513
        %v5515 = vadd.f32 %v5514, 0.0036580483
        %v5516 = vmul.f32 %v5511, %v5515
        %v5517 = vadd.f32 %v5516, 0.05243302
        %v5518 = vmul.f32 %v5511, %v5517
        %v5519 = vadd.f32 %v5518, 0.18741608
        %v5520 = vmul.f32 %v5511, %v5519
        %v5521 = vadd.f32 %v5520, 1.1283791
        %v5522 = vmul.f32 %v3028, %v5521
        %v5523 = vmul.f32 %v5511, 3.8918573e-05
        %v5524 = vadd.f32 %v5523, 0.001143296
        %v5525 = vmul.f32 %v5511, %v5524
        %v5526 = vadd.f32 %v5525, 0.014752088
        %v5527 = vmul.f32 %v5511, %v5526
        %v5528 = vadd.f32 %v5527, 0.112945676
        %v5529 = vmul.f32 %v5511, %v5528
        %v5530 = vadd.f32 %v5529, 0.4994258
        %v5531 = vmul.f32 %v5511, %v5530
        %v5532 = vadd.f32 %v5531, 1.0
        %v5533 = vrcp.pop %v5532
        %v5534 = vmul.f32 %v5532, %v5533
        %v5535 = vsub.f32 1.0, %v5534
        %v5536 = vmul.f32 %v5533, %v5535
        %v5537 = vadd.f32 %v5533, %v5536
        %vm5538 = vweird.f32 %v5532
        %vm5539 = vweird.f32 %v5533
        %vm5540 = vmor %vm5538, %vm5539
        %v5541 = vsel %vm5540, %v5533, %v5537
        %v5542 = vand.u32 2147483647, %v5532
        %vm5543 = vcmp.eq.f32.partialorder %v5542, 8.507059e+37
        %v5544 = vand.u32 %v5532, 2147483648
        %v5545 = vor.u32 1.1754944e-38, %v5544
        %v5546 = vsel %vm5543, %v5545, %v5541
        %v5547 = vmul.f32 %v5522, %v5546
        %v5548 = vmin.f32 %v5547, 1.0
        %v5549 = vmax.f32 %v5548, -1.0
        %v5550 = vmul.f32 %v3029, %v3029
        %v5551 = vmin.f32 16.0, %v5550
        %v5552 = vmul.f32 %v5551, 2.1237322e-06
        %v5553 = vadd.f32 %v5552, 0.00028619796
        %v5554 = vmul.f32 %v5551, %v5553
        %v5555 = vadd.f32 %v5554, 0.0036580483
        %v5556 = vmul.f32 %v5551, %v5555
        %v5557 = vadd.f32 %v5556, 0.05243302
        %v5558 = vmul.f32 %v5551, %v5557
        %v5559 = vadd.f32 %v5558, 0.18741608
        %v5560 = vmul.f32 %v5551, %v5559
        %v5561 = vadd.f32 %v5560, 1.1283791
        %v5562 = vmul.f32 %v3029, %v5561
        %v5563 = vmul.f32 %v5551, 3.8918573e-05
        %v5564 = vadd.f32 %v5563, 0.001143296
        %v5565 = vmul.f32 %v5551, %v5564
        %v5566 = vadd.f32 %v5565, 0.014752088
        %v5567 = vmul.f32 %v5551, %v5566
        %v5568 = vadd.f32 %v5567, 0.112945676
        %v5569 = vmul.f32 %v5551, %v5568
        %v5570 = vadd.f32 %v5569, 0.4994258
        %v5571 = vmul.f32 %v5551, %v5570
        %v5572 = vadd.f32 %v5571, 1.0
        %v5573 = vrcp.pop %v5572
        %v5574 = vmul.f32 %v5572, %v5573
        %v5575 = vsub.f32 1.0, %v5574
        %v5576 = vmul.f32 %v5573, %v5575
        %v5577 = vadd.f32 %v5573, %v5576
        %vm5578 = vweird.f32 %v5572
        %vm5579 = vweird.f32 %v5573
        %vm5580 = vmor %vm5578, %vm5579
        %v5581 = vsel %vm5580, %v5573, %v5577
        %v5582 = vand.u32 2147483647, %v5572
        %vm5583 = vcmp.eq.f32.partialorder %v5582, 8.507059e+37
        %v5584 = vand.u32 %v5572, 2147483648
        %v5585 = vor.u32 1.1754944e-38, %v5584
        %v5586 = vsel %vm5583, %v5585, %v5581
        %v5587 = vmul.f32 %v5562, %v5586
        %v5588 = vmin.f32 %v5587, 1.0
        %v5589 = vmax.f32 %v5588, -1.0
        %v5590 = vadd.f32 %v3069, 1.0
        %v5591 = vadd.f32 %v3109, 1.0
        %v5592 = vadd.f32 %v3149, 1.0
        %v5593 = vadd.f32 %v3189, 1.0
        %v5594 = vadd.f32 %v3229, 1.0
        %v5595 = vadd.f32 %v3269, 1.0
        %v5596 = vadd.f32 %v3309, 1.0
        %v5597 = vadd.f32 %v3349, 1.0
        %v5598 = vadd.f32 %v3389, 1.0
        %v5599 = vadd.f32 %v3429, 1.0
        %v5600 = vadd.f32 %v3469, 1.0
        %v5601 = vadd.f32 %v3509, 1.0
        %v5602 = vadd.f32 %v3549, 1.0
        %v5603 = vadd.f32 %v3589, 1.0
        %v5604 = vadd.f32 %v3629, 1.0
        %v5605 = vadd.f32 %v3669, 1.0
        %v5606 = vadd.f32 %v3709, 1.0
        %v5607 = vadd.f32 %v3749, 1.0
        %v5608 = vadd.f32 %v3789, 1.0
        %v5609 = vadd.f32 %v3829, 1.0
        %v5610 = vadd.f32 %v3869, 1.0
        %v5611 = vadd.f32 %v3909, 1.0
        %v5612 = vadd.f32 %v3949, 1.0
        %v5613 = vadd.f32 %v3989, 1.0
        %v5614 = vadd.f32 %v4029, 1.0
        %v5615 = vadd.f32 %v4069, 1.0
        %v5616 = vadd.f32 %v4109, 1.0
        %v5617 = vadd.f32 %v4149, 1.0
        %v5618 = vadd.f32 %v4189, 1.0
        %v5619 = vadd.f32 %v4229, 1.0
        %v5620 = vadd.f32 %v4269, 1.0
        %v5621 = vadd.f32 %v4309, 1.0
        %v5622 = vadd.f32 %v4349, 1.0
        %v5623 = vadd.f32 %v4389, 1.0
        %v5624 = vadd.f32 %v4429, 1.0
        %v5625 = vadd.f32 %v4469, 1.0
        %v5626 = vadd.f32 %v4509, 1.0
        %v5627 = vadd.f32 %v4549, 1.0
        %v5628 = vadd.f32 %v4589, 1.0
        %v5629 = vadd.f32 %v4629, 1.0
        %v5630 = vadd.f32 %v4669, 1.0
        %v5631 = vadd.f32 %v4709, 1.0
        %v5632 = vadd.f32 %v4749, 1.0
        %v5633 = vadd.f32 %v4789, 1.0
        %v5634 = vadd.f32 %v4829, 1.0
        %v5635 = vadd.f32 %v4869, 1.0
        %v5636 = vadd.f32 %v4909, 1.0
        %v5637 = vadd.f32 %v4949, 1.0
        %v5638 = vadd.f32 %v4989, 1.0
        %v5639 = vadd.f32 %v5029, 1.0
        %v5640 = vadd.f32 %v5069, 1.0
        %v5641 = vadd.f32 %v5109, 1.0
        %v5642 = vadd.f32 %v5149, 1.0
        %v5643 = vadd.f32 %v5189, 1.0
        %v5644 = vadd.f32 %v5229, 1.0
        %v5645 = vadd.f32 %v5269, 1.0
        %v5646 = vadd.f32 %v5309, 1.0
        %v5647 = vadd.f32 %v5349, 1.0
        %v5648 = vadd.f32 %v5389, 1.0
        %v5649 = vadd.f32 %v5429, 1.0
        %v5650 = vadd.f32 %v5469, 1.0
        %v5651 = vadd.f32 %v5509, 1.0
        %v5652 = vadd.f32 %v5549, 1.0
        %v5653 = vadd.f32 %v5589, 1.0
        %v5654 = vmul.f32 %v2902, %v5590
        %v5655 = vmul.f32 %v2903, %v5591
        %v5656 = vmul.f32 %v2904, %v5592
        %v5657 = vmul.f32 %v2905, %v5593
        %v5658 = vmul.f32 %v2906, %v5594
        %v5659 = vmul.f32 %v2907, %v5595
        %v5660 = vmul.f32 %v2908, %v5596
        %v5661 = vmul.f32 %v2909, %v5597
        %v5662 = vmul.f32 %v2910, %v5598
        %v5663 = vmul.f32 %v2911, %v5599
        %v5664 = vmul.f32 %v2912, %v5600
        %v5665 = vmul.f32 %v2913, %v5601
        %v5666 = vmul.f32 %v2914, %v5602
        %v5667 = vmul.f32 %v2915, %v5603
        %v5668 = vmul.f32 %v2916, %v5604
        %v5669 = vmul.f32 %v2917, %v5605
        %v5670 = vmul.f32 %v2918, %v5606
        %v5671 = vmul.f32 %v2919, %v5607
        %v5672 = vmul.f32 %v2920, %v5608
        %v5673 = vmul.f32 %v2921, %v5609
        %v5674 = vmul.f32 %v2922, %v5610
        %v5675 = vmul.f32 %v2923, %v5611
        %v5676 = vmul.f32 %v2924, %v5612
        %v5677 = vmul.f32 %v2925, %v5613
        %v5678 = vmul.f32 %v2926, %v5614
        %v5679 = vmul.f32 %v2927, %v5615
        %v5680 = vmul.f32 %v2928, %v5616
        %v5681 = vmul.f32 %v2929, %v5617
        %v5682 = vmul.f32 %v2930, %v5618
        %v5683 = vmul.f32 %v2931, %v5619
        %v5684 = vmul.f32 %v2932, %v5620
        %v5685 = vmul.f32 %v2933, %v5621
        %v5686 = vmul.f32 %v2934, %v5622
        %v5687 = vmul.f32 %v2935, %v5623
        %v5688 = vmul.f32 %v2936, %v5624
        %v5689 = vmul.f32 %v2937, %v5625
        %v5690 = vmul.f32 %v2938, %v5626
        %v5691 = vmul.f32 %v2939, %v5627
        %v5692 = vmul.f32 %v2940, %v5628
        %v5693 = vmul.f32 %v2941, %v5629
        %v5694 = vmul.f32 %v2942, %v5630
        %v5695 = vmul.f32 %v2943, %v5631
        %v5696 = vmul.f32 %v2944, %v5632
        %v5697 = vmul.f32 %v2945, %v5633
        %v5698 = vmul.f32 %v2946, %v5634
        %v5699 = vmul.f32 %v2947, %v5635
        %v5700 = vmul.f32 %v2948, %v5636
        %v5701 = vmul.f32 %v2949, %v5637
        %v5702 = vmul.f32 %v2950, %v5638
        %v5703 = vmul.f32 %v2951, %v5639
        %v5704 = vmul.f32 %v2952, %v5640
        %v5705 = vmul.f32 %v2953, %v5641
        %v5706 = vmul.f32 %v2954, %v5642
        %v5707 = vmul.f32 %v2955, %v5643
        %v5708 = vmul.f32 %v2956, %v5644
        %v5709 = vmul.f32 %v2957, %v5645
        %v5710 = vmul.f32 %v2958, %v5646
        %v5711 = vmul.f32 %v2959, %v5647
        %v5712 = vmul.f32 %v2960, %v5648
        %v5713 = vmul.f32 %v2961, %v5649
        %v5714 = vmul.f32 %v2962, %v5650
        %v5715 = vmul.f32 %v2963, %v5651
        %v5716 = vmul.f32 %v2964, %v5652
        %v5717 = vmul.f32 %v2965, %v5653
        %v5718 = vld [vmem:[%s6] sm:$0xff]
        %v5719 = vld [vmem:[%s6 + $0x8] sm:$0xff]
        %v5720 = vld [vmem:[%s6 + $0x10] sm:$0xff]
        %v5721 = vld [vmem:[%s6 + $0x18] sm:$0xff]
        %v5722 = vld [vmem:[%s6 + $0x20] sm:$0xff]
        %v5723 = vld [vmem:[%s6 + $0x28] sm:$0xff]
        %v5724 = vld [vmem:[%s6 + $0x30] sm:$0xff]
        %v5725 = vld [vmem:[%s6 + $0x38] sm:$0xff]
        %v5726 = vld [vmem:[%s6 + $0x40] sm:$0xff]
        %v5727 = vld [vmem:[%s6 + $0x48] sm:$0xff]
        %v5728 = vld [vmem:[%s6 + $0x50] sm:$0xff]
        %v5729 = vld [vmem:[%s6 + $0x58] sm:$0xff]
        %v5730 = vld [vmem:[%s6 + $0x60] sm:$0xff]
        %v5731 = vld [vmem:[%s6 + $0x68] sm:$0xff]
        %v5732 = vld [vmem:[%s6 + $0x70] sm:$0xff]
        %v5733 = vld [vmem:[%s6 + $0x78] sm:$0xff]
        %v5734 = vld [vmem:[%s6 + $0x80] sm:$0xff]
        %v5735 = vld [vmem:[%s6 + $0x88] sm:$0xff]
        %v5736 = vld [vmem:[%s6 + $0x90] sm:$0xff]
        %v5737 = vld [vmem:[%s6 + $0x98] sm:$0xff]
        %v5738 = vld [vmem:[%s6 + $0xa0] sm:$0xff]
        %v5739 = vld [vmem:[%s6 + $0xa8] sm:$0xff]
        %v5740 = vld [vmem:[%s6 + $0xb0] sm:$0xff]
        %v5741 = vld [vmem:[%s6 + $0xb8] sm:$0xff]
        %v5742 = vld [vmem:[%s6 + $0xc0] sm:$0xff]
        %v5743 = vld [vmem:[%s6 + $0xc8] sm:$0xff]
        %v5744 = vld [vmem:[%s6 + $0xd0] sm:$0xff]
        %v5745 = vld [vmem:[%s6 + $0xd8] sm:$0xff]
        %v5746 = vld [vmem:[%s6 + $0xe0] sm:$0xff]
        %v5747 = vld [vmem:[%s6 + $0xe8] sm:$0xff]
        %v5748 = vld [vmem:[%s6 + $0xf0] sm:$0xff]
        %v5749 = vld [vmem:[%s6 + $0xf8] sm:$0xff]
        %v5750 = vpack.c.bf16 %v5655, %v5654
        %v5751 = vpack.c.bf16 %v5657, %v5656
        %v5752 = vpack.c.bf16 %v5659, %v5658
        %v5753 = vpack.c.bf16 %v5661, %v5660
        %v5754 = vpack.c.bf16 %v5663, %v5662
        %v5755 = vpack.c.bf16 %v5665, %v5664
        %v5756 = vpack.c.bf16 %v5667, %v5666
        %v5757 = vpack.c.bf16 %v5669, %v5668
        %v5758 = vpack.c.bf16 %v5671, %v5670
        %v5759 = vpack.c.bf16 %v5673, %v5672
        %v5760 = vpack.c.bf16 %v5675, %v5674
        %v5761 = vpack.c.bf16 %v5677, %v5676
        %v5762 = vpack.c.bf16 %v5679, %v5678
        %v5763 = vpack.c.bf16 %v5681, %v5680
        %v5764 = vpack.c.bf16 %v5683, %v5682
        %v5765 = vpack.c.bf16 %v5685, %v5684
        %v5766 = vpack.c.bf16 %v5687, %v5686
        %v5767 = vpack.c.bf16 %v5689, %v5688
        %v5768 = vpack.c.bf16 %v5691, %v5690
        %v5769 = vpack.c.bf16 %v5693, %v5692
        %v5770 = vpack.c.bf16 %v5695, %v5694
        %v5771 = vpack.c.bf16 %v5697, %v5696
        %v5772 = vpack.c.bf16 %v5699, %v5698
        %v5773 = vpack.c.bf16 %v5701, %v5700
        %v5774 = vpack.c.bf16 %v5703, %v5702
        %v5775 = vpack.c.bf16 %v5705, %v5704
        %v5776 = vpack.c.bf16 %v5707, %v5706
        %v5777 = vpack.c.bf16 %v5709, %v5708
        %v5778 = vpack.c.bf16 %v5711, %v5710
        %v5779 = vpack.c.bf16 %v5713, %v5712
        %v5780 = vpack.c.bf16 %v5715, %v5714
        %v5781 = vpack.c.bf16 %v5717, %v5716
        %5782 = vset.pattern.permute.xlu0 5
        %5783 = vperm.xlu0 %5782, %v440
        %v5784 = vpop.permute.xlu0 %5783
        %5786 = vset.pattern.permute.xlu0 5
        %5787 = vperm.xlu0 %5786, %v441
        %v5788 = vpop.permute.xlu0 %5787
        %5790 = vset.pattern.permute.xlu0 5
        %5791 = vperm.xlu0 %5790, %v442
        %v5792 = vpop.permute.xlu0 %5791
        %5794 = vset.pattern.permute.xlu0 5
        %5795 = vperm.xlu0 %5794, %v443
        %v5796 = vpop.permute.xlu0 %5795
        %5798 = vset.pattern.permute.xlu0 5
        %5799 = vperm.xlu0 %5798, %v444
        %v5800 = vpop.permute.xlu0 %5799
        %5802 = vset.pattern.permute.xlu0 5
        %5803 = vperm.xlu0 %5802, %v445
        %v5804 = vpop.permute.xlu0 %5803
        %5806 = vset.pattern.permute.xlu0 5
        %5807 = vperm.xlu0 %5806, %v446
        %v5808 = vpop.permute.xlu0 %5807
        %5810 = vset.pattern.permute.xlu0 5
        %5811 = vperm.xlu0 %5810, %v447
        %v5812 = vpop.permute.xlu0 %5811
        %5814 = vset.pattern.permute.xlu0 5
        %5815 = vperm.xlu0 %5814, %v448
        %v5816 = vpop.permute.xlu0 %5815
        %5818 = vset.pattern.permute.xlu0 5
        %5819 = vperm.xlu0 %5818, %v449
        %v5820 = vpop.permute.xlu0 %5819
        %5822 = vset.pattern.permute.xlu0 5
        %5823 = vperm.xlu0 %5822, %v450
        %v5824 = vpop.permute.xlu0 %5823
        %5826 = vset.pattern.permute.xlu0 5
        %5827 = vperm.xlu0 %5826, %v451
        %v5828 = vpop.permute.xlu0 %5827
        %5830 = vset.pattern.permute.xlu0 5
        %5831 = vperm.xlu0 %5830, %v452
        %v5832 = vpop.permute.xlu0 %5831
        %5834 = vset.pattern.permute.xlu0 5
        %5835 = vperm.xlu0 %5834, %v453
        %v5836 = vpop.permute.xlu0 %5835
        %5838 = vset.pattern.permute.xlu0 5
        %5839 = vperm.xlu0 %5838, %v454
        %v5840 = vpop.permute.xlu0 %5839
        %5842 = vset.pattern.permute.xlu0 5
        %5843 = vperm.xlu0 %5842, %v455
        %v5844 = vpop.permute.xlu0 %5843
        %v5878 = vunpack.c.l.b16 %v5718
        %v5879 = vunpack.c.h.b16 %v5718
        %v5880 = vunpack.c.l.b16 %v5719
        %v5881 = vunpack.c.h.b16 %v5719
        %v5882 = vunpack.c.l.b16 %v5720
        %v5883 = vunpack.c.h.b16 %v5720
        %v5884 = vunpack.c.l.b16 %v5721
        %v5885 = vunpack.c.h.b16 %v5721
        %v5886 = vunpack.c.l.b16 %v5722
        %v5887 = vunpack.c.h.b16 %v5722
        %v5888 = vunpack.c.l.b16 %v5723
        %v5889 = vunpack.c.h.b16 %v5723
        %v5890 = vunpack.c.l.b16 %v5724
        %v5891 = vunpack.c.h.b16 %v5724
        %v5892 = vunpack.c.l.b16 %v5725
        %v5893 = vunpack.c.h.b16 %v5725
        %v5894 = vunpack.c.l.b16 %v5726
        %v5895 = vunpack.c.h.b16 %v5726
        %v5896 = vunpack.c.l.b16 %v5727
        %v5897 = vunpack.c.h.b16 %v5727
        %v5898 = vunpack.c.l.b16 %v5728
        %v5899 = vunpack.c.h.b16 %v5728
        %v5900 = vunpack.c.l.b16 %v5729
        %v5901 = vunpack.c.h.b16 %v5729
        %v5902 = vunpack.c.l.b16 %v5730
        %v5903 = vunpack.c.h.b16 %v5730
        %v5904 = vunpack.c.l.b16 %v5731
        %v5905 = vunpack.c.h.b16 %v5731
        %v5906 = vunpack.c.l.b16 %v5732
        %v5907 = vunpack.c.h.b16 %v5732
        %v5908 = vunpack.c.l.b16 %v5733
        %v5909 = vunpack.c.h.b16 %v5733
        %v5910 = vunpack.c.l.b16 %v5734
        %v5911 = vunpack.c.h.b16 %v5734
        %v5912 = vunpack.c.l.b16 %v5735
        %v5913 = vunpack.c.h.b16 %v5735
        %v5914 = vunpack.c.l.b16 %v5736
        %v5915 = vunpack.c.h.b16 %v5736
        %v5916 = vunpack.c.l.b16 %v5737
        %v5917 = vunpack.c.h.b16 %v5737
        %v5918 = vunpack.c.l.b16 %v5738
        %v5919 = vunpack.c.h.b16 %v5738
        %v5920 = vunpack.c.l.b16 %v5739
        %v5921 = vunpack.c.h.b16 %v5739
        %v5922 = vunpack.c.l.b16 %v5740
        %v5923 = vunpack.c.h.b16 %v5740
        %v5924 = vunpack.c.l.b16 %v5741
        %v5925 = vunpack.c.h.b16 %v5741
        %v5926 = vunpack.c.l.b16 %v5742
        %v5927 = vunpack.c.h.b16 %v5742
        %v5928 = vunpack.c.l.b16 %v5743
        %v5929 = vunpack.c.h.b16 %v5743
        %v5930 = vunpack.c.l.b16 %v5744
        %v5931 = vunpack.c.h.b16 %v5744
        %v5932 = vunpack.c.l.b16 %v5745
        %v5933 = vunpack.c.h.b16 %v5745
        %v5934 = vunpack.c.l.b16 %v5746
        %v5935 = vunpack.c.h.b16 %v5746
        %v5936 = vunpack.c.l.b16 %v5747
        %v5937 = vunpack.c.h.b16 %v5747
        %v5938 = vunpack.c.l.b16 %v5748
        %v5939 = vunpack.c.h.b16 %v5748
        %v5940 = vunpack.c.l.b16 %v5749
        %v5941 = vunpack.c.h.b16 %v5749
        %v5942 = vpack.c.b16 %v5882, %v5878
        %v5943 = vpack.c.b16 %v5883, %v5879
        %v5944 = vpack.c.b16 %v5884, %v5880
        %v5945 = vpack.c.b16 %v5885, %v5881
        %v5946 = vpack.c.b16 %v5890, %v5886
        %v5947 = vpack.c.b16 %v5891, %v5887
        %v5948 = vpack.c.b16 %v5892, %v5888
        %v5949 = vpack.c.b16 %v5893, %v5889
        %v5950 = vpack.c.b16 %v5898, %v5894
        %v5951 = vpack.c.b16 %v5899, %v5895
        %v5952 = vpack.c.b16 %v5900, %v5896
        %v5953 = vpack.c.b16 %v5901, %v5897
        %v5954 = vpack.c.b16 %v5906, %v5902
        %v5955 = vpack.c.b16 %v5907, %v5903
        %v5956 = vpack.c.b16 %v5908, %v5904
        %v5957 = vpack.c.b16 %v5909, %v5905
        %v5958 = vpack.c.b16 %v5914, %v5910
        %v5959 = vpack.c.b16 %v5915, %v5911
        %v5960 = vpack.c.b16 %v5916, %v5912
        %v5961 = vpack.c.b16 %v5917, %v5913
        %v5962 = vpack.c.b16 %v5922, %v5918
        %v5963 = vpack.c.b16 %v5923, %v5919
        %v5964 = vpack.c.b16 %v5924, %v5920
        %v5965 = vpack.c.b16 %v5925, %v5921
        %v5966 = vpack.c.b16 %v5930, %v5926
        %v5967 = vpack.c.b16 %v5931, %v5927
        %v5968 = vpack.c.b16 %v5932, %v5928
        %v5969 = vpack.c.b16 %v5933, %v5929
        %v5970 = vpack.c.b16 %v5938, %v5934
        %v5971 = vpack.c.b16 %v5939, %v5935
        %v5972 = vpack.c.b16 %v5940, %v5936
        %v5973 = vpack.c.b16 %v5941, %v5937
        %6006 = vmatpush.bf16.msra.mxu0 %v5757
        %6007 = vmatpush.bf16.msra.mxu0 %v5756
        %6008 = vmatpush.bf16.msra.mxu0 %v5755
        %6009 = vmatpush.bf16.msra.mxu0 %v5754
        %6010 = vmatpush.bf16.msra.mxu0 %v5753
        %6011 = vmatpush.bf16.msra.mxu0 %v5752
        %6012 = vmatpush.bf16.msra.mxu0 %v5751
        %6013 = vmatpush.bf16.msra.mxu0 %v5750
        %6014 = vmatmul.bf16.gmra.mxu0 %v5942
        %v6015 = vpop.f32.mrf.mxu0
        %v6016 = vadd.f32 %v5784, %v6015
        %v6017 = vpop.f32.mrf.mxu0
        %v6018 = vadd.f32 %v5788, %v6017
        %6019 = vmatmul.bf16.gmra.mxu0 %v5946
        %v6020 = vpop.f32.mrf.mxu0
        %v6021 = vadd.f32 %v5792, %v6020
        %v6022 = vpop.f32.mrf.mxu0
        %v6023 = vadd.f32 %v5796, %v6022
        %6024 = vmatmul.bf16.gmra.mxu0 %v5950
        %v6025 = vpop.f32.mrf.mxu0
        %v6026 = vadd.f32 %v5800, %v6025
        %v6027 = vpop.f32.mrf.mxu0
        %v6028 = vadd.f32 %v5804, %v6027
        %6029 = vmatmul.bf16.gmra.mxu0 %v5954
        %v6030 = vpop.f32.mrf.mxu0
        %v6031 = vadd.f32 %v5808, %v6030
        %v6032 = vpop.f32.mrf.mxu0
        %v6033 = vadd.f32 %v5812, %v6032
        %6034 = vmatmul.bf16.gmra.mxu0 %v5958
        %v6035 = vpop.f32.mrf.mxu0
        %v6036 = vadd.f32 %v5816, %v6035
        %v6037 = vpop.f32.mrf.mxu0
        %v6038 = vadd.f32 %v5820, %v6037
        %6039 = vmatmul.bf16.gmra.mxu0 %v5962
        %v6040 = vpop.f32.mrf.mxu0
        %v6041 = vadd.f32 %v5824, %v6040
        %v6042 = vpop.f32.mrf.mxu0
        %v6043 = vadd.f32 %v5828, %v6042
        %6044 = vmatmul.bf16.gmra.mxu0 %v5966
        %v6045 = vpop.f32.mrf.mxu0
        %v6046 = vadd.f32 %v5832, %v6045
        %v6047 = vpop.f32.mrf.mxu0
        %v6048 = vadd.f32 %v5836, %v6047
        %6049 = vmatmul.bf16.gmra.mxu0 %v5970
        %v6050 = vpop.f32.mrf.mxu0
        %v6051 = vadd.f32 %v5840, %v6050
        %v6052 = vpop.f32.mrf.mxu0
        %v6053 = vadd.f32 %v5844, %v6052
        %6054 = vdwg.mxu0
        %6055 = vmatpush.bf16.msra.mxu0 %v5765
        %6056 = vmatpush.bf16.msra.mxu0 %v5764
        %6057 = vmatpush.bf16.msra.mxu0 %v5763
        %6058 = vmatpush.bf16.msra.mxu0 %v5762
        %6059 = vmatpush.bf16.msra.mxu0 %v5761
        %6060 = vmatpush.bf16.msra.mxu0 %v5760
        %6061 = vmatpush.bf16.msra.mxu0 %v5759
        %6062 = vmatpush.bf16.msra.mxu0 %v5758
        %6063 = vmatmul.bf16.gmra.mxu0 %v5943
        %v6064 = vpop.f32.mrf.mxu0
        %v6065 = vadd.f32 %v6016, %v6064
        %v6066 = vpop.f32.mrf.mxu0
        %v6067 = vadd.f32 %v6018, %v6066
        %6068 = vmatmul.bf16.gmra.mxu0 %v5947
        %v6069 = vpop.f32.mrf.mxu0
        %v6070 = vadd.f32 %v6021, %v6069
        %v6071 = vpop.f32.mrf.mxu0
        %v6072 = vadd.f32 %v6023, %v6071
        %6073 = vmatmul.bf16.gmra.mxu0 %v5951
        %v6074 = vpop.f32.mrf.mxu0
        %v6075 = vadd.f32 %v6026, %v6074
        %v6076 = vpop.f32.mrf.mxu0
        %v6077 = vadd.f32 %v6028, %v6076
        %6078 = vmatmul.bf16.gmra.mxu0 %v5955
        %v6079 = vpop.f32.mrf.mxu0
        %v6080 = vadd.f32 %v6031, %v6079
        %v6081 = vpop.f32.mrf.mxu0
        %v6082 = vadd.f32 %v6033, %v6081
        %6083 = vmatmul.bf16.gmra.mxu0 %v5959
        %v6084 = vpop.f32.mrf.mxu0
        %v6085 = vadd.f32 %v6036, %v6084
        %v6086 = vpop.f32.mrf.mxu0
        %v6087 = vadd.f32 %v6038, %v6086
        %6088 = vmatmul.bf16.gmra.mxu0 %v5963
        %v6089 = vpop.f32.mrf.mxu0
        %v6090 = vadd.f32 %v6041, %v6089
        %v6091 = vpop.f32.mrf.mxu0
        %v6092 = vadd.f32 %v6043, %v6091
        %6093 = vmatmul.bf16.gmra.mxu0 %v5967
        %v6094 = vpop.f32.mrf.mxu0
        %v6095 = vadd.f32 %v6046, %v6094
        %v6096 = vpop.f32.mrf.mxu0
        %v6097 = vadd.f32 %v6048, %v6096
        %6098 = vmatmul.bf16.gmra.mxu0 %v5971
        %v6099 = vpop.f32.mrf.mxu0
        %v6100 = vadd.f32 %v6051, %v6099
        %v6101 = vpop.f32.mrf.mxu0
        %v6102 = vadd.f32 %v6053, %v6101
        %6103 = vdwg.mxu0
        %6104 = vmatpush.bf16.msra.mxu0 %v5773
        %6105 = vmatpush.bf16.msra.mxu0 %v5772
        %6106 = vmatpush.bf16.msra.mxu0 %v5771
        %6107 = vmatpush.bf16.msra.mxu0 %v5770
        %6108 = vmatpush.bf16.msra.mxu0 %v5769
        %6109 = vmatpush.bf16.msra.mxu0 %v5768
        %6110 = vmatpush.bf16.msra.mxu0 %v5767
        %6111 = vmatpush.bf16.msra.mxu0 %v5766
        %6112 = vmatmul.bf16.gmra.mxu0 %v5944
        %v6113 = vpop.f32.mrf.mxu0
        %v6114 = vadd.f32 %v6065, %v6113
        %v6115 = vpop.f32.mrf.mxu0
        %v6116 = vadd.f32 %v6067, %v6115
        %6117 = vmatmul.bf16.gmra.mxu0 %v5948
        %v6118 = vpop.f32.mrf.mxu0
        %v6119 = vadd.f32 %v6070, %v6118
        %v6120 = vpop.f32.mrf.mxu0
        %v6121 = vadd.f32 %v6072, %v6120
        %6122 = vmatmul.bf16.gmra.mxu0 %v5952
        %v6123 = vpop.f32.mrf.mxu0
        %v6124 = vadd.f32 %v6075, %v6123
        %v6125 = vpop.f32.mrf.mxu0
        %v6126 = vadd.f32 %v6077, %v6125
        %6127 = vmatmul.bf16.gmra.mxu0 %v5956
        %v6128 = vpop.f32.mrf.mxu0
        %v6129 = vadd.f32 %v6080, %v6128
        %v6130 = vpop.f32.mrf.mxu0
        %v6131 = vadd.f32 %v6082, %v6130
        %6132 = vmatmul.bf16.gmra.mxu0 %v5960
        %v6133 = vpop.f32.mrf.mxu0
        %v6134 = vadd.f32 %v6085, %v6133
        %v6135 = vpop.f32.mrf.mxu0
        %v6136 = vadd.f32 %v6087, %v6135
        %6137 = vmatmul.bf16.gmra.mxu0 %v5964
        %v6138 = vpop.f32.mrf.mxu0
        %v6139 = vadd.f32 %v6090, %v6138
        %v6140 = vpop.f32.mrf.mxu0
        %v6141 = vadd.f32 %v6092, %v6140
        %6142 = vmatmul.bf16.gmra.mxu0 %v5968
        %v6143 = vpop.f32.mrf.mxu0
        %v6144 = vadd.f32 %v6095, %v6143
        %v6145 = vpop.f32.mrf.mxu0
        %v6146 = vadd.f32 %v6097, %v6145
        %6147 = vmatmul.bf16.gmra.mxu0 %v5972
        %v6148 = vpop.f32.mrf.mxu0
        %v6149 = vadd.f32 %v6100, %v6148
        %v6150 = vpop.f32.mrf.mxu0
        %v6151 = vadd.f32 %v6102, %v6150
        %6152 = vdwg.mxu0
        %6153 = vmatpush.bf16.msra.mxu0 %v5781
        %6154 = vmatpush.bf16.msra.mxu0 %v5780
        %6155 = vmatpush.bf16.msra.mxu0 %v5779
        %6156 = vmatpush.bf16.msra.mxu0 %v5778
        %6157 = vmatpush.bf16.msra.mxu0 %v5777
        %6158 = vmatpush.bf16.msra.mxu0 %v5776
        %6159 = vmatpush.bf16.msra.mxu0 %v5775
        %6160 = vmatpush.bf16.msra.mxu0 %v5774
        %6161 = vmatmul.bf16.gmra.mxu0 %v5945
        %v6162 = vpop.f32.mrf.mxu0
        %v6163 = vadd.f32 %v6114, %v6162
        %v6164 = vpop.f32.mrf.mxu0
        %v6165 = vadd.f32 %v6116, %v6164
        %6166 = vmatmul.bf16.gmra.mxu0 %v5949
        %v6167 = vpop.f32.mrf.mxu0
        %v6168 = vadd.f32 %v6119, %v6167
        %v6169 = vpop.f32.mrf.mxu0
        %v6170 = vadd.f32 %v6121, %v6169
        %6171 = vmatmul.bf16.gmra.mxu0 %v5953
        %v6172 = vpop.f32.mrf.mxu0
        %v6173 = vadd.f32 %v6124, %v6172
        %v6174 = vpop.f32.mrf.mxu0
        %v6175 = vadd.f32 %v6126, %v6174
        %6176 = vmatmul.bf16.gmra.mxu0 %v5957
        %v6177 = vpop.f32.mrf.mxu0
        %v6178 = vadd.f32 %v6129, %v6177
        %v6179 = vpop.f32.mrf.mxu0
        %v6180 = vadd.f32 %v6131, %v6179
        %6181 = vmatmul.bf16.gmra.mxu0 %v5961
        %v6182 = vpop.f32.mrf.mxu0
        %v6183 = vadd.f32 %v6134, %v6182
        %v6184 = vpop.f32.mrf.mxu0
        %v6185 = vadd.f32 %v6136, %v6184
        %6186 = vmatmul.bf16.gmra.mxu0 %v5965
        %v6187 = vpop.f32.mrf.mxu0
        %v6188 = vadd.f32 %v6139, %v6187
        %v6189 = vpop.f32.mrf.mxu0
        %v6190 = vadd.f32 %v6141, %v6189
        %6191 = vmatmul.bf16.gmra.mxu0 %v5969
        %v6192 = vpop.f32.mrf.mxu0
        %v6193 = vadd.f32 %v6144, %v6192
        %v6194 = vpop.f32.mrf.mxu0
        %v6195 = vadd.f32 %v6146, %v6194
        %6196 = vmatmul.bf16.gmra.mxu0 %v5973
        %v6197 = vpop.f32.mrf.mxu0
        %v6198 = vadd.f32 %v6149, %v6197
        %v6199 = vpop.f32.mrf.mxu0
        %v6200 = vadd.f32 %v6151, %v6199
        %6201 = vdwg.mxu0
        %v6202 = vadd.f32 %v1803, %v6163
        %v6203 = vadd.f32 %v1804, %v6165
        %v6204 = vadd.f32 %v1805, %v6168
        %v6205 = vadd.f32 %v1806, %v6170
        %v6206 = vadd.f32 %v1807, %v6173
        %v6207 = vadd.f32 %v1808, %v6175
        %v6208 = vadd.f32 %v1809, %v6178
        %v6209 = vadd.f32 %v1810, %v6180
        %v6210 = vadd.f32 %v1811, %v6183
        %v6211 = vadd.f32 %v1812, %v6185
        %v6212 = vadd.f32 %v1813, %v6188
        %v6213 = vadd.f32 %v1814, %v6190
        %v6214 = vadd.f32 %v1815, %v6193
        %v6215 = vadd.f32 %v1816, %v6195
        %v6216 = vadd.f32 %v1817, %v6198
        %v6217 = vadd.f32 %v1818, %v6200
        %6218 = vst [vmem:[%s414] sm:$0xff] %v6202
        %6219 = vst [vmem:[%s414 + $0x8] sm:$0xff] %v6203
        %6220 = vst [vmem:[%s414 + $0x10] sm:$0xff] %v6204
        %6221 = vst [vmem:[%s414 + $0x18] sm:$0xff] %v6205
        %6222 = vst [vmem:[%s414 + $0x20] sm:$0xff] %v6206
        %6223 = vst [vmem:[%s414 + $0x28] sm:$0xff] %v6207
        %6224 = vst [vmem:[%s414 + $0x30] sm:$0xff] %v6208
        %6225 = vst [vmem:[%s414 + $0x38] sm:$0xff] %v6209
        %6226 = vst [vmem:[%s414 + $0x40] sm:$0xff] %v6210
        %6227 = vst [vmem:[%s414 + $0x48] sm:$0xff] %v6211
        %6228 = vst [vmem:[%s414 + $0x50] sm:$0xff] %v6212
        %6229 = vst [vmem:[%s414 + $0x58] sm:$0xff] %v6213
        %6230 = vst [vmem:[%s414 + $0x60] sm:$0xff] %v6214
        %6231 = vst [vmem:[%s414 + $0x68] sm:$0xff] %v6215
        %6232 = vst [vmem:[%s414 + $0x70] sm:$0xff] %v6216
        %6233 = vst [vmem:[%s414 + $0x78] sm:$0xff] %v6217
        %s6234 = sand.u32 %s204, 1
        %s6235 = scalar_lea.sflag [#allocation5], %s6234
        %s6236 = sand.u32 %s204, 1
        %s6237 = smul.addr %s6236, 128
        %s6238 = scalar_lea.vmem [#allocation4], %s6237
        // Predicated region
        $region87: #{convformer_block.1} parent=81 // pred_check
          %p6239 = pneg %p214
        $region88: #{convformer_block.1} parent=81 // pred_check_branch
          %6241 = sbr.rel (%p6239) target = $region90
        $region89: #{convformer_block.1} parent=81 // pred_region
          %6243 = vsyncadd %s6235, 0
          %s6244 = smul.addr %s25, 32
          %s6245 = sadd.s32 %s26, %s6244
          %s6246 = smul.addr %s6245, 8
          %s6247 = scalar_lea.hbm %s7, %s6246
          %s6248 = sshll.u32 %s6238, 4
          %s6249 = int_to_ptr.vmem [resolvable:$true] %s6248
          %s6250 = sshll.u32 %s6247, 4
          %s6251 = int_to_ptr.hbm [resolvable:$true] %s6250
          %6256 = dma.vmem_to_hbm [thread:$0]  %s6249, 2048, %s6251, %s6235, 128, 256, 8
        $region90: #{convformer_block.1} parent=81 // pred_fallthru
          _
      $region82: #{convformer_block.1} parent=5 // pred_fallthru
        _
      %p6257 = scmp.le.s32.totalorder 2, %s16
      // Predicated region
      $region91: #{convformer_block.1} parent=5 // pred_check
        %p6258 = pneg %p6257
      $region92: #{convformer_block.1} parent=5 // pred_check_branch
        %6260 = sbr.rel (%p6258) target = $region94
      $region93: #{convformer_block.1} parent=5 // pred_region
        %s6261 = ssub.s32 %s16, 2
        // Predicated region
        $region95: #{convformer_block.1} parent=93 // pred_check
          %p6262 = pneg %p220
        $region96: #{convformer_block.1} parent=93 // pred_check_branch
          %6264 = sbr.rel (%p6262) target = $region98
        $region97: #{convformer_block.1} parent=93 // pred_region
          %s6265 = sand.u32 %s205, 1
          %s6266 = scalar_lea.sflag [#allocation5], %s6265
          %s6267 = sand.u32 %s205, 1
          %s6268 = smul.addr %s6267, 128
          %s6269 = scalar_lea.vmem [#allocation4], %s6268
          %6271 = dma.done %s6266, 2048
        $region98: #{convformer_block.1} parent=93 // pred_fallthru
          _
      $region94: #{convformer_block.1} parent=5 // pred_fallthru
        _
    $region6: #{convformer_block.1} parent=1 // loop_footer
      %s20 = sadd.s32 1, %s16
    $region7: #{convformer_block.1} parent=1 // loop_footer_branch
      %15 = sbr.rel target = $region3
    $region8: #{convformer_block.1} parent=1 // loop_exit
      _
    %6272 = vsyncpa [#allocation5], 1
    %s6273 = scalar_lea.sflag [#allocation5], 1
    %6274 = vsyncpa %s6273, 1

</llo_original>
